<compile_context>
chip_gen: v7x
topology: tpu7x:2x2x1
jax: 0.10.0
libtpu: 0.0.40
codegen_flags: <defaults>
</compile_context>

<pallas_src>
import functools

import jax
import jax.numpy as jnp
import numpy as np
from jax.experimental import pallas as pl
from jax.experimental.pallas import tpu as pltpu


def rev_env_kernel(ns_ref, act_ref, val_ref,
                   ws_ref, wa_ref, wv_ref, be_ref,
                   wih_ref, whh_ref, bx_ref, bh_ref,
                   wf_ref, bf_ref,
                   out_ref,
                   seq_ref,
                   *, batch):
    """Fused RevEnv forward.

    ns_ref  : [S*B, state_size]   time-major rows (original time order)
    act_ref : [S*B, action_size]
    val_ref : [S*B, value_size]
    ws/wa/wv: [F_i, D] slices of the embedding weight, be: [1, D]
    wih/whh : [L, D, 3D]  fused gate weights (columns: r | z | n), used as x @ W
    bx      : [L, 1, 3D]  fused input biases  (b_ir+b_hr | b_iz+b_hz | b_in)
    bh      : [L, 1, 3D]  fused hidden biases (0 | 0 | b_hn)
    wf      : [D, state_size], bf: [1, state_size]
    out_ref : [S*B, state_size]   original time order
    seq_ref : VMEM scratch [S*B, D] holding the layer-to-layer activations
    """
    SB = ns_ref.shape[0]
    D = ws_ref.shape[1]
    L = wih_ref.shape[0]
    B = batch
    S = SB // B

    # ---- 1) Continuous-feature embedding, batched over all S*B rows --------
    #    Split-weight form avoids an in-kernel concat:
    #    cat(xs, tanh(xa), xv) @ W == xs@Ws + tanh(xa)@Wa + xv@Wv.
    x_s = ns_ref[...]
    x_a = jnp.tanh(act_ref[...])            # tanh of continuous action
    x_v = val_ref[...]
    seq_ref[...] = (jnp.dot(x_s, ws_ref[...], preferred_element_type=jnp.float32)
                    + jnp.dot(x_a, wa_ref[...], preferred_element_type=jnp.float32)
                    + jnp.dot(x_v, wv_ref[...], preferred_element_type=jnp.float32)
                    + be_ref[...])

    # ---- 2) L-layer GRU, run backwards in original time ---------------------
    # Running s = S-1 .. 0 and storing h at index s implements both sequence
    # flips of the PyTorch module exactly (output at time s == hidden state
    # right after the reverse pass has consumed input s).
    for l in range(L):
        w_ih = wih_ref[l]                   # [D, 3D]
        w_hh = whh_ref[l]                   # [D, 3D]
        b_x = bx_ref[l]                     # [1, 3D]
        b_h = bh_ref[l]                     # [1, 3D]

        # Hoisted input-to-hidden matmul: all S timesteps at once, off the
        # serial critical path.
        gx_all = (jnp.dot(seq_ref[...], w_ih, preferred_element_type=jnp.float32)
                  + b_x)                    # [S*B, 3D]

        h = jnp.zeros((B, D), jnp.float32)
        for s in range(S - 1, -1, -1):      # static unroll; recurrence is serial
            gx = gx_all[s * B:(s + 1) * B, :]                       # [B, 3D]
            gh = (jnp.dot(h, w_hh, preferred_element_type=jnp.float32)
                  + b_h)                                            # [B, 3D]
            r = jax.nn.sigmoid(gx[:, 0:D] + gh[:, 0:D])
            zg = jax.nn.sigmoid(gx[:, D:2 * D] + gh[:, D:2 * D])
            n = jnp.tanh(gx[:, 2 * D:3 * D] + r * gh[:, 2 * D:3 * D])
            h = (1.0 - zg) * n + zg * h
            seq_ref[s * B:(s + 1) * B, :] = h   # output seq for next layer / head

    # ---- 3) ReLU + final Linear(d_model -> state_size), batched -------------
    p = jax.nn.relu(seq_ref[...])
    out_ref[...] = (jnp.dot(p, wf_ref[...], preferred_element_type=jnp.float32)
                    + bf_ref[...])


def rev_env_forward(next_state, action, value, params):
    """Wrapper: weight fusion + pure layout glue (no sequence flips needed)."""
    B, S, state_size = next_state.shape
    D = params["w_s"].shape[1]
    L = params["w_ih"].shape[0]

    # Fuse the 3 gate matrices per layer/direction into [D, 3D] (r | z | n),
    # and pre-fold the r/z biases.  Layout-only transforms on tiny weights.
    w_ih_f = jnp.transpose(params["w_ih"], (0, 2, 1, 3)).reshape(L, D, 3 * D)
    w_hh_f = jnp.transpose(params["w_hh"], (0, 2, 1, 3)).reshape(L, D, 3 * D)
    b_ih, b_hh = params["b_ih"], params["b_hh"]            # [L, 3, 1, D]
    b_x_f = jnp.concatenate([b_ih[:, 0] + b_hh[:, 0],
                             b_ih[:, 1] + b_hh[:, 1],
                             b_ih[:, 2]], axis=-1)          # [L, 1, 3D]
    zeros_d = jnp.zeros_like(b_hh[:, 2])
    b_h_f = jnp.concatenate([zeros_d, zeros_d, b_hh[:, 2]], axis=-1)  # [L, 1, 3D]

    def to_rows(x):
        # [B, S, F] -> time-major rows [S*B, F].  NOTE: no flip — the kernel
        # iterates time in reverse instead.
        return jnp.transpose(x.astype(jnp.float32), (1, 0, 2)).reshape(S * B, x.shape[-1])

    ns, act, val = map(to_rows, (next_state, action, value))

    vmem = pl.BlockSpec(memory_space=pltpu.MemorySpace.VMEM)
    out = pl.pallas_call(
        functools.partial(rev_env_kernel, batch=B),
        out_shape=jax.ShapeDtypeStruct((S * B, state_size), jnp.float32),
        in_specs=[vmem] * 13,
        out_specs=vmem,
        scratch_shapes=[pltpu.VMEM((S * B, D), jnp.float32)],
    )(ns, act, val,
      params["w_s"], params["w_a"], params["w_v"], params["b_e"],
      w_ih_f, w_hh_f, b_x_f, b_h_f,
      params["w_f"], params["b_f"])

    # Kernel output is already in original time order; just restore [B, S, F].
    return jnp.transpose(out.reshape(S, B, state_size), (1, 0, 2))


def rev_env_reference(next_state, action, value, params):
    """Pure-JAX reference mirroring the PyTorch forward (unfused weights).

    Uses Precision.HIGHEST so the comparison tolerance can be tight (the
    kernel's f32 MXU matmuls are full precision; XLA's *default* f32 matmul
    precision on TPU is not).
    """
    hi = jax.lax.Precision.HIGHEST
    act = jnp.tanh(action)
    x = jnp.concatenate([next_state, act, value], axis=-1)
    W = jnp.concatenate([params["w_s"], params["w_a"], params["w_v"]], axis=0)
    z = jnp.einsum("bsf,fd->bsd", x, W, precision=hi) + params["b_e"][0]
    z = jnp.flip(z, axis=1)

    B, S, D = z.shape
    L = params["w_ih"].shape[0]
    seq = z
    for l in range(L):
        h = jnp.zeros((B, D), jnp.float32)
        outs = []
        for t in range(S):
            xt = seq[:, t, :]
            r = jax.nn.sigmoid(
                jnp.dot(xt, params["w_ih"][l, 0], precision=hi) + params["b_ih"][l, 0]
                + jnp.dot(h, params["w_hh"][l, 0], precision=hi) + params["b_hh"][l, 0])
            zg = jax.nn.sigmoid(
                jnp.dot(xt, params["w_ih"][l, 1], precision=hi) + params["b_ih"][l, 1]
                + jnp.dot(h, params["w_hh"][l, 1], precision=hi) + params["b_hh"][l, 1])
            n = jnp.tanh(
                jnp.dot(xt, params["w_ih"][l, 2], precision=hi) + params["b_ih"][l, 2]
                + r * (jnp.dot(h, params["w_hh"][l, 2], precision=hi) + params["b_hh"][l, 2]))
            h = (1.0 - zg) * n + zg * h
            outs.append(h)
        seq = jnp.stack(outs, axis=1)

    out = jax.nn.relu(jnp.flip(seq, axis=1))
    return jnp.einsum("bsd,de->bse", out, params["w_f"], precision=hi) + params["b_f"][0]


def make_params(key, state_size, action_size, value_size, d_model, num_layers):
    ks = jax.random.split(key, 10)
    s = 0.1  # deterministic synthetic init (stand-in for init_weights)
    return {
        "w_s": s * jax.random.normal(ks[0], (state_size, d_model), jnp.float32),
        "w_a": s * jax.random.normal(ks[1], (action_size, d_model), jnp.float32),
        "w_v": s * jax.random.normal(ks[2], (value_size, d_model), jnp.float32),
        "b_e": s * jax.random.normal(ks[3], (1, d_model), jnp.float32),
        "w_ih": s * jax.random.normal(ks[4], (num_layers, 3, d_model, d_model), jnp.float32),
        "w_hh": s * jax.random.normal(ks[5], (num_layers, 3, d_model, d_model), jnp.float32),
        "b_ih": s * jax.random.normal(ks[6], (num_layers, 3, 1, d_model), jnp.float32),
        "b_hh": s * jax.random.normal(ks[7], (num_layers, 3, 1, d_model), jnp.float32),
        "w_f": s * jax.random.normal(ks[8], (d_model, state_size), jnp.float32),
        "b_f": s * jax.random.normal(ks[9], (1, state_size), jnp.float32),
    }


if __name__ == "__main__":
    # env_config: state_size=6, action_size=3, value_size=1, use_discrete=False
    # rev_env_params: d_model=32, num_layers=2, dropout=0.0
    B, S = 2, 8
    state_size, action_size, value_size = 6, 3, 1
    d_model, num_layers = 32, 2

    key = jax.random.PRNGKey(0)
    k_ns, k_ac, k_va, k_p = jax.random.split(key, 4)
    next_state = jax.random.normal(k_ns, (B, S, state_size), jnp.float32)
    action = jax.random.normal(k_ac, (B, S, action_size), jnp.float32)
    value = jax.random.normal(k_va, (B, S, value_size), jnp.float32)
    params = make_params(k_p, state_size, action_size, value_size, d_model, num_layers)

    out = rev_env_forward(next_state, action, value, params)
    out = jax.block_until_ready(out)

    ref = jax.block_until_ready(rev_env_reference(next_state, action, value, params))
    assert out.shape == (B, S, state_size), out.shape
    # Tight tolerance (reference runs at HIGHEST precision): catches any
    # gate-fusion / weight-reshape transposition mistake by orders of magnitude.
    np.testing.assert_allclose(np.asarray(out), np.asarray(ref), rtol=1e-4, atol=1e-4)

    print("KERNEL_OK")
</pallas_src>

<mosaic_0001>
module attributes {stable_mosaic.version = 11 : i64} {
  func.func @rev_env_kernel(%arg0: memref<16x6xf32, #tpu.memory_space<vmem>>, %arg1: memref<16x3xf32, #tpu.memory_space<vmem>>, %arg2: memref<16x1xf32, #tpu.memory_space<vmem>>, %arg3: memref<6x32xf32, #tpu.memory_space<vmem>>, %arg4: memref<3x32xf32, #tpu.memory_space<vmem>>, %arg5: memref<1x32xf32, #tpu.memory_space<vmem>>, %arg6: memref<1x32xf32, #tpu.memory_space<vmem>>, %arg7: memref<2x32x96xf32, #tpu.memory_space<vmem>>, %arg8: memref<2x32x96xf32, #tpu.memory_space<vmem>>, %arg9: memref<2x1x96xf32, #tpu.memory_space<vmem>>, %arg10: memref<2x1x96xf32, #tpu.memory_space<vmem>>, %arg11: memref<32x6xf32, #tpu.memory_space<vmem>>, %arg12: memref<1x6xf32, #tpu.memory_space<vmem>>, %arg13: memref<16x6xf32, #tpu.memory_space<vmem>>, %arg14: memref<16x32xf32, #tpu.memory_space<vmem>>) attributes {dimension_semantics = [], scalar_prefetch = 0 : i64, scratch_operands = 1 : i64, tpu.core_type = #tpu.core_type<tc>} {
    %c0 = arith.constant 0 : index
    %c0_0 = arith.constant 0 : index
    %0 = vector.load %arg0[%c0, %c0_0] : memref<16x6xf32, #tpu.memory_space<vmem>>, vector<16x6xf32>
    %c0_1 = arith.constant 0 : index
    %c0_2 = arith.constant 0 : index
    %1 = vector.load %arg1[%c0_1, %c0_2] : memref<16x3xf32, #tpu.memory_space<vmem>>, vector<16x3xf32>
    %2 = math.tanh %1 : vector<16x3xf32>
    %c0_3 = arith.constant 0 : index
    %c0_4 = arith.constant 0 : index
    %3 = vector.load %arg2[%c0_3, %c0_4] : memref<16x1xf32, #tpu.memory_space<vmem>>, vector<16x1xf32>
    %c0_5 = arith.constant 0 : index
    %c0_6 = arith.constant 0 : index
    %4 = vector.load %arg3[%c0_5, %c0_6] : memref<6x32xf32, #tpu.memory_space<vmem>>, vector<6x32xf32>
    %cst = arith.constant dense<0.000000e+00> : vector<16x32xf32>
    %5 = tpu.matmul %0, %4, %cst {dimension_numbers = #tpu.dot_dimension_numbers<[1], [0], [0], [1], [0, 0, 1, 1], [], []>} : vector<16x6xf32>, vector<6x32xf32>, vector<16x32xf32> -> vector<16x32xf32>
    %c0_7 = arith.constant 0 : index
    %c0_8 = arith.constant 0 : index
    %6 = vector.load %arg4[%c0_7, %c0_8] : memref<3x32xf32, #tpu.memory_space<vmem>>, vector<3x32xf32>
    %cst_9 = arith.constant dense<0.000000e+00> : vector<16x32xf32>
    %7 = tpu.matmul %2, %6, %cst_9 {dimension_numbers = #tpu.dot_dimension_numbers<[1], [0], [0], [1], [0, 0, 1, 1], [], []>} : vector<16x3xf32>, vector<3x32xf32>, vector<16x32xf32> -> vector<16x32xf32>
    %8 = arith.addf %5, %7 : vector<16x32xf32>
    %c0_10 = arith.constant 0 : index
    %c0_11 = arith.constant 0 : index
    %9 = vector.load %arg5[%c0_10, %c0_11] : memref<1x32xf32, #tpu.memory_space<vmem>>, vector<1x32xf32>
    %cst_12 = arith.constant dense<0.000000e+00> : vector<16x32xf32>
    %10 = tpu.matmul %3, %9, %cst_12 {dimension_numbers = #tpu.dot_dimension_numbers<[1], [0], [0], [1], [0, 0, 1, 1], [], []>} : vector<16x1xf32>, vector<1x32xf32>, vector<16x32xf32> -> vector<16x32xf32>
    %11 = arith.addf %8, %10 : vector<16x32xf32>
    %c0_13 = arith.constant 0 : index
    %c0_14 = arith.constant 0 : index
    %12 = vector.load %arg6[%c0_13, %c0_14] : memref<1x32xf32, #tpu.memory_space<vmem>>, vector<1x32xf32>
    %13 = vector.broadcast %12 : vector<1x32xf32> to vector<16x32xf32>
    %14 = arith.addf %11, %13 : vector<16x32xf32>
    %c0_15 = arith.constant 0 : index
    %c0_16 = arith.constant 0 : index
    %15 = vector.load %arg14[%c0_15, %c0_16] : memref<16x32xf32, #tpu.memory_space<vmem>>, vector<16x32xf32>
    tpu.vector_store %arg14[%c0_15, %c0_16], %14 {strides = array<i32>} : memref<16x32xf32, #tpu.memory_space<vmem>>, vector<16x32xf32>,
    %c0_17 = arith.constant 0 : index
    %c0_18 = arith.constant 0 : index
    %c0_19 = arith.constant 0 : index
    %16 = vector.load %arg7[%c0_17, %c0_18, %c0_19] : memref<2x32x96xf32, #tpu.memory_space<vmem>>, vector<1x32x96xf32>
    %17 = vector.shape_cast %16 : vector<1x32x96xf32> to vector<32x96xf32>
    %c0_20 = arith.constant 0 : index
    %c0_21 = arith.constant 0 : index
    %c0_22 = arith.constant 0 : index
    %18 = vector.load %arg8[%c0_20, %c0_21, %c0_22] : memref<2x32x96xf32, #tpu.memory_space<vmem>>, vector<1x32x96xf32>
    %19 = vector.shape_cast %18 : vector<1x32x96xf32> to vector<32x96xf32>
    %c0_23 = arith.constant 0 : index
    %c0_24 = arith.constant 0 : index
    %c0_25 = arith.constant 0 : index
    %20 = vector.load %arg9[%c0_23, %c0_24, %c0_25] : memref<2x1x96xf32, #tpu.memory_space<vmem>>, vector<1x1x96xf32>
    %21 = vector.shape_cast %20 : vector<1x1x96xf32> to vector<1x96xf32>
    %c0_26 = arith.constant 0 : index
    %c0_27 = arith.constant 0 : index
    %c0_28 = arith.constant 0 : index
    %22 = vector.load %arg10[%c0_26, %c0_27, %c0_28] : memref<2x1x96xf32, #tpu.memory_space<vmem>>, vector<1x1x96xf32>
    %23 = vector.shape_cast %22 : vector<1x1x96xf32> to vector<1x96xf32>
    %c0_29 = arith.constant 0 : index
    %c0_30 = arith.constant 0 : index
    %24 = vector.load %arg14[%c0_29, %c0_30] : memref<16x32xf32, #tpu.memory_space<vmem>>, vector<16x32xf32>
    %cst_31 = arith.constant dense<0.000000e+00> : vector<16x96xf32>
    %25 = tpu.matmul %24, %17, %cst_31 {dimension_numbers = #tpu.dot_dimension_numbers<[1], [0], [0], [1], [0, 0, 1, 1], [], []>} : vector<16x32xf32>, vector<32x96xf32>, vector<16x96xf32> -> vector<16x96xf32>
    %26 = vector.broadcast %21 : vector<1x96xf32> to vector<16x96xf32>
    %27 = arith.addf %25, %26 : vector<16x96xf32>
    %cst_32 = arith.constant 0.000000e+00 : f32
    %28 = vector.broadcast %cst_32 : f32 to vector<2x32xf32>
    %29 = vector.extract_strided_slice %27 {offsets = [14, 0], sizes = [2, 96], strides = [1, 1]} : vector<16x96xf32> to vector<2x96xf32>
    %cst_33 = arith.constant dense<0.000000e+00> : vector<2x96xf32>
    %30 = tpu.matmul %28, %19, %cst_33 {dimension_numbers = #tpu.dot_dimension_numbers<[1], [0], [0], [1], [0, 0, 1, 1], [], []>} : vector<2x32xf32>, vector<32x96xf32>, vector<2x96xf32> -> vector<2x96xf32>
    %31 = vector.broadcast %23 : vector<1x96xf32> to vector<2x96xf32>
    %32 = arith.addf %30, %31 : vector<2x96xf32>
    %33 = vector.extract_strided_slice %29 {offsets = [0, 0], sizes = [2, 32], strides = [1, 1]} : vector<2x96xf32> to vector<2x32xf32>
    %34 = vector.extract_strided_slice %32 {offsets = [0, 0], sizes = [2, 32], strides = [1, 1]} : vector<2x96xf32> to vector<2x32xf32>
    %35 = arith.addf %33, %34 : vector<2x32xf32>
    %36 = arith.negf %35 : vector<2x32xf32>
    %37 = math.exp %36 : vector<2x32xf32>
    %cst_34 = arith.constant 1.000000e+00 : f32
    %38 = vector.broadcast %cst_34 : f32 to vector<2x32xf32>
    %39 = arith.addf %38, %37 : vector<2x32xf32>
    %40 = arith.divf %38, %39 : vector<2x32xf32>
    %41 = vector.extract_strided_slice %29 {offsets = [0, 32], sizes = [2, 32], strides = [1, 1]} : vector<2x96xf32> to vector<2x32xf32>
    %42 = vector.extract_strided_slice %32 {offsets = [0, 32], sizes = [2, 32], strides = [1, 1]} : vector<2x96xf32> to vector<2x32xf32>
    %43 = arith.addf %41, %42 : vector<2x32xf32>
    %44 = arith.negf %43 : vector<2x32xf32>
    %45 = math.exp %44 : vector<2x32xf32>
    %cst_35 = arith.constant 1.000000e+00 : f32
    %46 = vector.broadcast %cst_35 : f32 to vector<2x32xf32>
    %47 = arith.addf %46, %45 : vector<2x32xf32>
    %48 = arith.divf %46, %47 : vector<2x32xf32>
    %49 = vector.extract_strided_slice %29 {offsets = [0, 64], sizes = [2, 32], strides = [1, 1]} : vector<2x96xf32> to vector<2x32xf32>
    %50 = vector.extract_strided_slice %32 {offsets = [0, 64], sizes = [2, 32], strides = [1, 1]} : vector<2x96xf32> to vector<2x32xf32>
    %51 = arith.mulf %40, %50 : vector<2x32xf32>
    %52 = arith.addf %49, %51 : vector<2x32xf32>
    %53 = math.tanh %52 : vector<2x32xf32>
    %cst_36 = arith.constant 1.000000e+00 : f32
    %54 = vector.broadcast %cst_36 : f32 to vector<2x32xf32>
    %55 = arith.subf %54, %48 : vector<2x32xf32>
    %56 = arith.mulf %55, %53 : vector<2x32xf32>
    %57 = arith.mulf %48, %28 : vector<2x32xf32>
    %58 = arith.addf %56, %57 : vector<2x32xf32>
    %c14 = arith.constant 14 : index
    %c0_37 = arith.constant 0 : index
    %59 = vector.load %arg14[%c14, %c0_37] : memref<16x32xf32, #tpu.memory_space<vmem>>, vector<2x32xf32>
    tpu.vector_store %arg14[%c14, %c0_37], %58 {strides = array<i32>} : memref<16x32xf32, #tpu.memory_space<vmem>>, vector<2x32xf32>,
    %60 = vector.extract_strided_slice %27 {offsets = [12, 0], sizes = [2, 96], strides = [1, 1]} : vector<16x96xf32> to vector<2x96xf32>
    %cst_38 = arith.constant dense<0.000000e+00> : vector<2x96xf32>
    %61 = tpu.matmul %58, %19, %cst_38 {dimension_numbers = #tpu.dot_dimension_numbers<[1], [0], [0], [1], [0, 0, 1, 1], [], []>} : vector<2x32xf32>, vector<32x96xf32>, vector<2x96xf32> -> vector<2x96xf32>
    %62 = vector.broadcast %23 : vector<1x96xf32> to vector<2x96xf32>
    %63 = arith.addf %61, %62 : vector<2x96xf32>
    %64 = vector.extract_strided_slice %60 {offsets = [0, 0], sizes = [2, 32], strides = [1, 1]} : vector<2x96xf32> to vector<2x32xf32>
    %65 = vector.extract_strided_slice %63 {offsets = [0, 0], sizes = [2, 32], strides = [1, 1]} : vector<2x96xf32> to vector<2x32xf32>
    %66 = arith.addf %64, %65 : vector<2x32xf32>
    %67 = arith.negf %66 : vector<2x32xf32>
    %68 = math.exp %67 : vector<2x32xf32>
    %cst_39 = arith.constant 1.000000e+00 : f32
    %69 = vector.broadcast %cst_39 : f32 to vector<2x32xf32>
    %70 = arith.addf %69, %68 : vector<2x32xf32>
    %71 = arith.divf %69, %70 : vector<2x32xf32>
    %72 = vector.extract_strided_slice %60 {offsets = [0, 32], sizes = [2, 32], strides = [1, 1]} : vector<2x96xf32> to vector<2x32xf32>
    %73 = vector.extract_strided_slice %63 {offsets = [0, 32], sizes = [2, 32], strides = [1, 1]} : vector<2x96xf32> to vector<2x32xf32>
    %74 = arith.addf %72, %73 : vector<2x32xf32>
    %75 = arith.negf %74 : vector<2x32xf32>
    %76 = math.exp %75 : vector<2x32xf32>
    %cst_40 = arith.constant 1.000000e+00 : f32
    %77 = vector.broadcast %cst_40 : f32 to vector<2x32xf32>
    %78 = arith.addf %77, %76 : vector<2x32xf32>
    %79 = arith.divf %77, %78 : vector<2x32xf32>
    %80 = vector.extract_strided_slice %60 {offsets = [0, 64], sizes = [2, 32], strides = [1, 1]} : vector<2x96xf32> to vector<2x32xf32>
    %81 = vector.extract_strided_slice %63 {offsets = [0, 64], sizes = [2, 32], strides = [1, 1]} : vector<2x96xf32> to vector<2x32xf32>
    %82 = arith.mulf %71, %81 : vector<2x32xf32>
    %83 = arith.addf %80, %82 : vector<2x32xf32>
    %84 = math.tanh %83 : vector<2x32xf32>
    %cst_41 = arith.constant 1.000000e+00 : f32
    %85 = vector.broadcast %cst_41 : f32 to vector<2x32xf32>
    %86 = arith.subf %85, %79 : vector<2x32xf32>
    %87 = arith.mulf %86, %84 : vector<2x32xf32>
    %88 = arith.mulf %79, %58 : vector<2x32xf32>
    %89 = arith.addf %87, %88 : vector<2x32xf32>
    %c12 = arith.constant 12 : index
    %c0_42 = arith.constant 0 : index
    %90 = vector.load %arg14[%c12, %c0_42] : memref<16x32xf32, #tpu.memory_space<vmem>>, vector<2x32xf32>
    tpu.vector_store %arg14[%c12, %c0_42], %89 {strides = array<i32>} : memref<16x32xf32, #tpu.memory_space<vmem>>, vector<2x32xf32>,
    %91 = vector.extract_strided_slice %27 {offsets = [10, 0], sizes = [2, 96], strides = [1, 1]} : vector<16x96xf32> to vector<2x96xf32>
    %cst_43 = arith.constant dense<0.000000e+00> : vector<2x96xf32>
    %92 = tpu.matmul %89, %19, %cst_43 {dimension_numbers = #tpu.dot_dimension_numbers<[1], [0], [0], [1], [0, 0, 1, 1], [], []>} : vector<2x32xf32>, vector<32x96xf32>, vector<2x96xf32> -> vector<2x96xf32>
    %93 = vector.broadcast %23 : vector<1x96xf32> to vector<2x96xf32>
    %94 = arith.addf %92, %93 : vector<2x96xf32>
    %95 = vector.extract_strided_slice %91 {offsets = [0, 0], sizes = [2, 32], strides = [1, 1]} : vector<2x96xf32> to vector<2x32xf32>
    %96 = vector.extract_strided_slice %94 {offsets = [0, 0], sizes = [2, 32], strides = [1, 1]} : vector<2x96xf32> to vector<2x32xf32>
    %97 = arith.addf %95, %96 : vector<2x32xf32>
    %98 = arith.negf %97 : vector<2x32xf32>
    %99 = math.exp %98 : vector<2x32xf32>
    %cst_44 = arith.constant 1.000000e+00 : f32
    %100 = vector.broadcast %cst_44 : f32 to vector<2x32xf32>
    %101 = arith.addf %100, %99 : vector<2x32xf32>
    %102 = arith.divf %100, %101 : vector<2x32xf32>
    %103 = vector.extract_strided_slice %91 {offsets = [0, 32], sizes = [2, 32], strides = [1, 1]} : vector<2x96xf32> to vector<2x32xf32>
    %104 = vector.extract_strided_slice %94 {offsets = [0, 32], sizes = [2, 32], strides = [1, 1]} : vector<2x96xf32> to vector<2x32xf32>
    %105 = arith.addf %103, %104 : vector<2x32xf32>
    %106 = arith.negf %105 : vector<2x32xf32>
    %107 = math.exp %106 : vector<2x32xf32>
    %cst_45 = arith.constant 1.000000e+00 : f32
    %108 = vector.broadcast %cst_45 : f32 to vector<2x32xf32>
    %109 = arith.addf %108, %107 : vector<2x32xf32>
    %110 = arith.divf %108, %109 : vector<2x32xf32>
    %111 = vector.extract_strided_slice %91 {offsets = [0, 64], sizes = [2, 32], strides = [1, 1]} : vector<2x96xf32> to vector<2x32xf32>
    %112 = vector.extract_strided_slice %94 {offsets = [0, 64], sizes = [2, 32], strides = [1, 1]} : vector<2x96xf32> to vector<2x32xf32>
    %113 = arith.mulf %102, %112 : vector<2x32xf32>
    %114 = arith.addf %111, %113 : vector<2x32xf32>
    %115 = math.tanh %114 : vector<2x32xf32>
    %cst_46 = arith.constant 1.000000e+00 : f32
    %116 = vector.broadcast %cst_46 : f32 to vector<2x32xf32>
    %117 = arith.subf %116, %110 : vector<2x32xf32>
    %118 = arith.mulf %117, %115 : vector<2x32xf32>
    %119 = arith.mulf %110, %89 : vector<2x32xf32>
    %120 = arith.addf %118, %119 : vector<2x32xf32>
    %c10 = arith.constant 10 : index
    %c0_47 = arith.constant 0 : index
    %121 = vector.load %arg14[%c10, %c0_47] : memref<16x32xf32, #tpu.memory_space<vmem>>, vector<2x32xf32>
    tpu.vector_store %arg14[%c10, %c0_47], %120 {strides = array<i32>} : memref<16x32xf32, #tpu.memory_space<vmem>>, vector<2x32xf32>,
    %122 = vector.extract_strided_slice %27 {offsets = [8, 0], sizes = [2, 96], strides = [1, 1]} : vector<16x96xf32> to vector<2x96xf32>
    %cst_48 = arith.constant dense<0.000000e+00> : vector<2x96xf32>
    %123 = tpu.matmul %120, %19, %cst_48 {dimension_numbers = #tpu.dot_dimension_numbers<[1], [0], [0], [1], [0, 0, 1, 1], [], []>} : vector<2x32xf32>, vector<32x96xf32>, vector<2x96xf32> -> vector<2x96xf32>
    %124 = vector.broadcast %23 : vector<1x96xf32> to vector<2x96xf32>
    %125 = arith.addf %123, %124 : vector<2x96xf32>
    %126 = vector.extract_strided_slice %122 {offsets = [0, 0], sizes = [2, 32], strides = [1, 1]} : vector<2x96xf32> to vector<2x32xf32>
    %127 = vector.extract_strided_slice %125 {offsets = [0, 0], sizes = [2, 32], strides = [1, 1]} : vector<2x96xf32> to vector<2x32xf32>
    %128 = arith.addf %126, %127 : vector<2x32xf32>
    %129 = arith.negf %128 : vector<2x32xf32>
    %130 = math.exp %129 : vector<2x32xf32>
    %cst_49 = arith.constant 1.000000e+00 : f32
    %131 = vector.broadcast %cst_49 : f32 to vector<2x32xf32>
    %132 = arith.addf %131, %130 : vector<2x32xf32>
    %133 = arith.divf %131, %132 : vector<2x32xf32>
    %134 = vector.extract_strided_slice %122 {offsets = [0, 32], sizes = [2, 32], strides = [1, 1]} : vector<2x96xf32> to vector<2x32xf32>
    %135 = vector.extract_strided_slice %125 {offsets = [0, 32], sizes = [2, 32], strides = [1, 1]} : vector<2x96xf32> to vector<2x32xf32>
    %136 = arith.addf %134, %135 : vector<2x32xf32>
    %137 = arith.negf %136 : vector<2x32xf32>
    %138 = math.exp %137 : vector<2x32xf32>
    %cst_50 = arith.constant 1.000000e+00 : f32
    %139 = vector.broadcast %cst_50 : f32 to vector<2x32xf32>
    %140 = arith.addf %139, %138 : vector<2x32xf32>
    %141 = arith.divf %139, %140 : vector<2x32xf32>
    %142 = vector.extract_strided_slice %122 {offsets = [0, 64], sizes = [2, 32], strides = [1, 1]} : vector<2x96xf32> to vector<2x32xf32>
    %143 = vector.extract_strided_slice %125 {offsets = [0, 64], sizes = [2, 32], strides = [1, 1]} : vector<2x96xf32> to vector<2x32xf32>
    %144 = arith.mulf %133, %143 : vector<2x32xf32>
    %145 = arith.addf %142, %144 : vector<2x32xf32>
    %146 = math.tanh %145 : vector<2x32xf32>
    %cst_51 = arith.constant 1.000000e+00 : f32
    %147 = vector.broadcast %cst_51 : f32 to vector<2x32xf32>
    %148 = arith.subf %147, %141 : vector<2x32xf32>
    %149 = arith.mulf %148, %146 : vector<2x32xf32>
    %150 = arith.mulf %141, %120 : vector<2x32xf32>
    %151 = arith.addf %149, %150 : vector<2x32xf32>
    %c8 = arith.constant 8 : index
    %c0_52 = arith.constant 0 : index
    %152 = vector.load %arg14[%c8, %c0_52] : memref<16x32xf32, #tpu.memory_space<vmem>>, vector<2x32xf32>
    tpu.vector_store %arg14[%c8, %c0_52], %151 {strides = array<i32>} : memref<16x32xf32, #tpu.memory_space<vmem>>, vector<2x32xf32>,
    %153 = vector.extract_strided_slice %27 {offsets = [6, 0], sizes = [2, 96], strides = [1, 1]} : vector<16x96xf32> to vector<2x96xf32>
    %cst_53 = arith.constant dense<0.000000e+00> : vector<2x96xf32>
    %154 = tpu.matmul %151, %19, %cst_53 {dimension_numbers = #tpu.dot_dimension_numbers<[1], [0], [0], [1], [0, 0, 1, 1], [], []>} : vector<2x32xf32>, vector<32x96xf32>, vector<2x96xf32> -> vector<2x96xf32>
    %155 = vector.broadcast %23 : vector<1x96xf32> to vector<2x96xf32>
    %156 = arith.addf %154, %155 : vector<2x96xf32>
    %157 = vector.extract_strided_slice %153 {offsets = [0, 0], sizes = [2, 32], strides = [1, 1]} : vector<2x96xf32> to vector<2x32xf32>
    %158 = vector.extract_strided_slice %156 {offsets = [0, 0], sizes = [2, 32], strides = [1, 1]} : vector<2x96xf32> to vector<2x32xf32>
    %159 = arith.addf %157, %158 : vector<2x32xf32>
    %160 = arith.negf %159 : vector<2x32xf32>
    %161 = math.exp %160 : vector<2x32xf32>
    %cst_54 = arith.constant 1.000000e+00 : f32
    %162 = vector.broadcast %cst_54 : f32 to vector<2x32xf32>
    %163 = arith.addf %162, %161 : vector<2x32xf32>
    %164 = arith.divf %162, %163 : vector<2x32xf32>
    %165 = vector.extract_strided_slice %153 {offsets = [0, 32], sizes = [2, 32], strides = [1, 1]} : vector<2x96xf32> to vector<2x32xf32>
    %166 = vector.extract_strided_slice %156 {offsets = [0, 32], sizes = [2, 32], strides = [1, 1]} : vector<2x96xf32> to vector<2x32xf32>
    %167 = arith.addf %165, %166 : vector<2x32xf32>
    %168 = arith.negf %167 : vector<2x32xf32>
    %169 = math.exp %168 : vector<2x32xf32>
    %cst_55 = arith.constant 1.000000e+00 : f32
    %170 = vector.broadcast %cst_55 : f32 to vector<2x32xf32>
    %171 = arith.addf %170, %169 : vector<2x32xf32>
    %172 = arith.divf %170, %171 : vector<2x32xf32>
    %173 = vector.extract_strided_slice %153 {offsets = [0, 64], sizes = [2, 32], strides = [1, 1]} : vector<2x96xf32> to vector<2x32xf32>
    %174 = vector.extract_strided_slice %156 {offsets = [0, 64], sizes = [2, 32], strides = [1, 1]} : vector<2x96xf32> to vector<2x32xf32>
    %175 = arith.mulf %164, %174 : vector<2x32xf32>
    %176 = arith.addf %173, %175 : vector<2x32xf32>
    %177 = math.tanh %176 : vector<2x32xf32>
    %cst_56 = arith.constant 1.000000e+00 : f32
    %178 = vector.broadcast %cst_56 : f32 to vector<2x32xf32>
    %179 = arith.subf %178, %172 : vector<2x32xf32>
    %180 = arith.mulf %179, %177 : vector<2x32xf32>
    %181 = arith.mulf %172, %151 : vector<2x32xf32>
    %182 = arith.addf %180, %181 : vector<2x32xf32>
    %c6 = arith.constant 6 : index
    %c0_57 = arith.constant 0 : index
    %183 = vector.load %arg14[%c6, %c0_57] : memref<16x32xf32, #tpu.memory_space<vmem>>, vector<2x32xf32>
    tpu.vector_store %arg14[%c6, %c0_57], %182 {strides = array<i32>} : memref<16x32xf32, #tpu.memory_space<vmem>>, vector<2x32xf32>,
    %184 = vector.extract_strided_slice %27 {offsets = [4, 0], sizes = [2, 96], strides = [1, 1]} : vector<16x96xf32> to vector<2x96xf32>
    %cst_58 = arith.constant dense<0.000000e+00> : vector<2x96xf32>
    %185 = tpu.matmul %182, %19, %cst_58 {dimension_numbers = #tpu.dot_dimension_numbers<[1], [0], [0], [1], [0, 0, 1, 1], [], []>} : vector<2x32xf32>, vector<32x96xf32>, vector<2x96xf32> -> vector<2x96xf32>
    %186 = vector.broadcast %23 : vector<1x96xf32> to vector<2x96xf32>
    %187 = arith.addf %185, %186 : vector<2x96xf32>
    %188 = vector.extract_strided_slice %184 {offsets = [0, 0], sizes = [2, 32], strides = [1, 1]} : vector<2x96xf32> to vector<2x32xf32>
    %189 = vector.extract_strided_slice %187 {offsets = [0, 0], sizes = [2, 32], strides = [1, 1]} : vector<2x96xf32> to vector<2x32xf32>
    %190 = arith.addf %188, %189 : vector<2x32xf32>
    %191 = arith.negf %190 : vector<2x32xf32>
    %192 = math.exp %191 : vector<2x32xf32>
    %cst_59 = arith.constant 1.000000e+00 : f32
    %193 = vector.broadcast %cst_59 : f32 to vector<2x32xf32>
    %194 = arith.addf %193, %192 : vector<2x32xf32>
    %195 = arith.divf %193, %194 : vector<2x32xf32>
    %196 = vector.extract_strided_slice %184 {offsets = [0, 32], sizes = [2, 32], strides = [1, 1]} : vector<2x96xf32> to vector<2x32xf32>
    %197 = vector.extract_strided_slice %187 {offsets = [0, 32], sizes = [2, 32], strides = [1, 1]} : vector<2x96xf32> to vector<2x32xf32>
    %198 = arith.addf %196, %197 : vector<2x32xf32>
    %199 = arith.negf %198 : vector<2x32xf32>
    %200 = math.exp %199 : vector<2x32xf32>
    %cst_60 = arith.constant 1.000000e+00 : f32
    %201 = vector.broadcast %cst_60 : f32 to vector<2x32xf32>
    %202 = arith.addf %201, %200 : vector<2x32xf32>
    %203 = arith.divf %201, %202 : vector<2x32xf32>
    %204 = vector.extract_strided_slice %184 {offsets = [0, 64], sizes = [2, 32], strides = [1, 1]} : vector<2x96xf32> to vector<2x32xf32>
    %205 = vector.extract_strided_slice %187 {offsets = [0, 64], sizes = [2, 32], strides = [1, 1]} : vector<2x96xf32> to vector<2x32xf32>
    %206 = arith.mulf %195, %205 : vector<2x32xf32>
    %207 = arith.addf %204, %206 : vector<2x32xf32>
    %208 = math.tanh %207 : vector<2x32xf32>
    %cst_61 = arith.constant 1.000000e+00 : f32
    %209 = vector.broadcast %cst_61 : f32 to vector<2x32xf32>
    %210 = arith.subf %209, %203 : vector<2x32xf32>
    %211 = arith.mulf %210, %208 : vector<2x32xf32>
    %212 = arith.mulf %203, %182 : vector<2x32xf32>
    %213 = arith.addf %211, %212 : vector<2x32xf32>
    %c4 = arith.constant 4 : index
    %c0_62 = arith.constant 0 : index
    %214 = vector.load %arg14[%c4, %c0_62] : memref<16x32xf32, #tpu.memory_space<vmem>>, vector<2x32xf32>
    tpu.vector_store %arg14[%c4, %c0_62], %213 {strides = array<i32>} : memref<16x32xf32, #tpu.memory_space<vmem>>, vector<2x32xf32>,
    %215 = vector.extract_strided_slice %27 {offsets = [2, 0], sizes = [2, 96], strides = [1, 1]} : vector<16x96xf32> to vector<2x96xf32>
    %cst_63 = arith.constant dense<0.000000e+00> : vector<2x96xf32>
    %216 = tpu.matmul %213, %19, %cst_63 {dimension_numbers = #tpu.dot_dimension_numbers<[1], [0], [0], [1], [0, 0, 1, 1], [], []>} : vector<2x32xf32>, vector<32x96xf32>, vector<2x96xf32> -> vector<2x96xf32>
    %217 = vector.broadcast %23 : vector<1x96xf32> to vector<2x96xf32>
    %218 = arith.addf %216, %217 : vector<2x96xf32>
    %219 = vector.extract_strided_slice %215 {offsets = [0, 0], sizes = [2, 32], strides = [1, 1]} : vector<2x96xf32> to vector<2x32xf32>
    %220 = vector.extract_strided_slice %218 {offsets = [0, 0], sizes = [2, 32], strides = [1, 1]} : vector<2x96xf32> to vector<2x32xf32>
    %221 = arith.addf %219, %220 : vector<2x32xf32>
    %222 = arith.negf %221 : vector<2x32xf32>
    %223 = math.exp %222 : vector<2x32xf32>
    %cst_64 = arith.constant 1.000000e+00 : f32
    %224 = vector.broadcast %cst_64 : f32 to vector<2x32xf32>
    %225 = arith.addf %224, %223 : vector<2x32xf32>
    %226 = arith.divf %224, %225 : vector<2x32xf32>
    %227 = vector.extract_strided_slice %215 {offsets = [0, 32], sizes = [2, 32], strides = [1, 1]} : vector<2x96xf32> to vector<2x32xf32>
    %228 = vector.extract_strided_slice %218 {offsets = [0, 32], sizes = [2, 32], strides = [1, 1]} : vector<2x96xf32> to vector<2x32xf32>
    %229 = arith.addf %227, %228 : vector<2x32xf32>
    %230 = arith.negf %229 : vector<2x32xf32>
    %231 = math.exp %230 : vector<2x32xf32>
    %cst_65 = arith.constant 1.000000e+00 : f32
    %232 = vector.broadcast %cst_65 : f32 to vector<2x32xf32>
    %233 = arith.addf %232, %231 : vector<2x32xf32>
    %234 = arith.divf %232, %233 : vector<2x32xf32>
    %235 = vector.extract_strided_slice %215 {offsets = [0, 64], sizes = [2, 32], strides = [1, 1]} : vector<2x96xf32> to vector<2x32xf32>
    %236 = vector.extract_strided_slice %218 {offsets = [0, 64], sizes = [2, 32], strides = [1, 1]} : vector<2x96xf32> to vector<2x32xf32>
    %237 = arith.mulf %226, %236 : vector<2x32xf32>
    %238 = arith.addf %235, %237 : vector<2x32xf32>
    %239 = math.tanh %238 : vector<2x32xf32>
    %cst_66 = arith.constant 1.000000e+00 : f32
    %240 = vector.broadcast %cst_66 : f32 to vector<2x32xf32>
    %241 = arith.subf %240, %234 : vector<2x32xf32>
    %242 = arith.mulf %241, %239 : vector<2x32xf32>
    %243 = arith.mulf %234, %213 : vector<2x32xf32>
    %244 = arith.addf %242, %243 : vector<2x32xf32>
    %c2 = arith.constant 2 : index
    %c0_67 = arith.constant 0 : index
    %245 = vector.load %arg14[%c2, %c0_67] : memref<16x32xf32, #tpu.memory_space<vmem>>, vector<2x32xf32>
    tpu.vector_store %arg14[%c2, %c0_67], %244 {strides = array<i32>} : memref<16x32xf32, #tpu.memory_space<vmem>>, vector<2x32xf32>,
    %246 = vector.extract_strided_slice %27 {offsets = [0, 0], sizes = [2, 96], strides = [1, 1]} : vector<16x96xf32> to vector<2x96xf32>
    %cst_68 = arith.constant dense<0.000000e+00> : vector<2x96xf32>
    %247 = tpu.matmul %244, %19, %cst_68 {dimension_numbers = #tpu.dot_dimension_numbers<[1], [0], [0], [1], [0, 0, 1, 1], [], []>} : vector<2x32xf32>, vector<32x96xf32>, vector<2x96xf32> -> vector<2x96xf32>
    %248 = vector.broadcast %23 : vector<1x96xf32> to vector<2x96xf32>
    %249 = arith.addf %247, %248 : vector<2x96xf32>
    %250 = vector.extract_strided_slice %246 {offsets = [0, 0], sizes = [2, 32], strides = [1, 1]} : vector<2x96xf32> to vector<2x32xf32>
    %251 = vector.extract_strided_slice %249 {offsets = [0, 0], sizes = [2, 32], strides = [1, 1]} : vector<2x96xf32> to vector<2x32xf32>
    %252 = arith.addf %250, %251 : vector<2x32xf32>
    %253 = arith.negf %252 : vector<2x32xf32>
    %254 = math.exp %253 : vector<2x32xf32>
    %cst_69 = arith.constant 1.000000e+00 : f32
    %255 = vector.broadcast %cst_69 : f32 to vector<2x32xf32>
    %256 = arith.addf %255, %254 : vector<2x32xf32>
    %257 = arith.divf %255, %256 : vector<2x32xf32>
    %258 = vector.extract_strided_slice %246 {offsets = [0, 32], sizes = [2, 32], strides = [1, 1]} : vector<2x96xf32> to vector<2x32xf32>
    %259 = vector.extract_strided_slice %249 {offsets = [0, 32], sizes = [2, 32], strides = [1, 1]} : vector<2x96xf32> to vector<2x32xf32>
    %260 = arith.addf %258, %259 : vector<2x32xf32>
    %261 = arith.negf %260 : vector<2x32xf32>
    %262 = math.exp %261 : vector<2x32xf32>
    %cst_70 = arith.constant 1.000000e+00 : f32
    %263 = vector.broadcast %cst_70 : f32 to vector<2x32xf32>
    %264 = arith.addf %263, %262 : vector<2x32xf32>
    %265 = arith.divf %263, %264 : vector<2x32xf32>
    %266 = vector.extract_strided_slice %246 {offsets = [0, 64], sizes = [2, 32], strides = [1, 1]} : vector<2x96xf32> to vector<2x32xf32>
    %267 = vector.extract_strided_slice %249 {offsets = [0, 64], sizes = [2, 32], strides = [1, 1]} : vector<2x96xf32> to vector<2x32xf32>
    %268 = arith.mulf %257, %267 : vector<2x32xf32>
    %269 = arith.addf %266, %268 : vector<2x32xf32>
    %270 = math.tanh %269 : vector<2x32xf32>
    %cst_71 = arith.constant 1.000000e+00 : f32
    %271 = vector.broadcast %cst_71 : f32 to vector<2x32xf32>
    %272 = arith.subf %271, %265 : vector<2x32xf32>
    %273 = arith.mulf %272, %270 : vector<2x32xf32>
    %274 = arith.mulf %265, %244 : vector<2x32xf32>
    %275 = arith.addf %273, %274 : vector<2x32xf32>
    %c0_72 = arith.constant 0 : index
    %c0_73 = arith.constant 0 : index
    %276 = vector.load %arg14[%c0_72, %c0_73] : memref<16x32xf32, #tpu.memory_space<vmem>>, vector<2x32xf32>
    tpu.vector_store %arg14[%c0_72, %c0_73], %275 {strides = array<i32>} : memref<16x32xf32, #tpu.memory_space<vmem>>, vector<2x32xf32>,
    %c1 = arith.constant 1 : index
    %c0_74 = arith.constant 0 : index
    %c0_75 = arith.constant 0 : index
    %277 = vector.load %arg7[%c1, %c0_74, %c0_75] : memref<2x32x96xf32, #tpu.memory_space<vmem>>, vector<1x32x96xf32>
    %278 = vector.shape_cast %277 : vector<1x32x96xf32> to vector<32x96xf32>
    %c1_76 = arith.constant 1 : index
    %c0_77 = arith.constant 0 : index
    %c0_78 = arith.constant 0 : index
    %279 = vector.load %arg8[%c1_76, %c0_77, %c0_78] : memref<2x32x96xf32, #tpu.memory_space<vmem>>, vector<1x32x96xf32>
    %280 = vector.shape_cast %279 : vector<1x32x96xf32> to vector<32x96xf32>
    %c1_79 = arith.constant 1 : index
    %c0_80 = arith.constant 0 : index
    %c0_81 = arith.constant 0 : index
    %281 = vector.load %arg9[%c1_79, %c0_80, %c0_81] : memref<2x1x96xf32, #tpu.memory_space<vmem>>, vector<1x1x96xf32>
    %282 = vector.shape_cast %281 : vector<1x1x96xf32> to vector<1x96xf32>
    %c1_82 = arith.constant 1 : index
    %c0_83 = arith.constant 0 : index
    %c0_84 = arith.constant 0 : index
    %283 = vector.load %arg10[%c1_82, %c0_83, %c0_84] : memref<2x1x96xf32, #tpu.memory_space<vmem>>, vector<1x1x96xf32>
    %284 = vector.shape_cast %283 : vector<1x1x96xf32> to vector<1x96xf32>
    %c0_85 = arith.constant 0 : index
    %c0_86 = arith.constant 0 : index
    %285 = vector.load %arg14[%c0_85, %c0_86] : memref<16x32xf32, #tpu.memory_space<vmem>>, vector<16x32xf32>
    %cst_87 = arith.constant dense<0.000000e+00> : vector<16x96xf32>
    %286 = tpu.matmul %285, %278, %cst_87 {dimension_numbers = #tpu.dot_dimension_numbers<[1], [0], [0], [1], [0, 0, 1, 1], [], []>} : vector<16x32xf32>, vector<32x96xf32>, vector<16x96xf32> -> vector<16x96xf32>
    %287 = vector.broadcast %282 : vector<1x96xf32> to vector<16x96xf32>
    %288 = arith.addf %286, %287 : vector<16x96xf32>
    %cst_88 = arith.constant 0.000000e+00 : f32
    %289 = vector.broadcast %cst_88 : f32 to vector<2x32xf32>
    %290 = vector.extract_strided_slice %288 {offsets = [14, 0], sizes = [2, 96], strides = [1, 1]} : vector<16x96xf32> to vector<2x96xf32>
    %cst_89 = arith.constant dense<0.000000e+00> : vector<2x96xf32>
    %291 = tpu.matmul %289, %280, %cst_89 {dimension_numbers = #tpu.dot_dimension_numbers<[1], [0], [0], [1], [0, 0, 1, 1], [], []>} : vector<2x32xf32>, vector<32x96xf32>, vector<2x96xf32> -> vector<2x96xf32>
    %292 = vector.broadcast %284 : vector<1x96xf32> to vector<2x96xf32>
    %293 = arith.addf %291, %292 : vector<2x96xf32>
    %294 = vector.extract_strided_slice %290 {offsets = [0, 0], sizes = [2, 32], strides = [1, 1]} : vector<2x96xf32> to vector<2x32xf32>
    %295 = vector.extract_strided_slice %293 {offsets = [0, 0], sizes = [2, 32], strides = [1, 1]} : vector<2x96xf32> to vector<2x32xf32>
    %296 = arith.addf %294, %295 : vector<2x32xf32>
    %297 = arith.negf %296 : vector<2x32xf32>
    %298 = math.exp %297 : vector<2x32xf32>
    %cst_90 = arith.constant 1.000000e+00 : f32
    %299 = vector.broadcast %cst_90 : f32 to vector<2x32xf32>
    %300 = arith.addf %299, %298 : vector<2x32xf32>
    %301 = arith.divf %299, %300 : vector<2x32xf32>
    %302 = vector.extract_strided_slice %290 {offsets = [0, 32], sizes = [2, 32], strides = [1, 1]} : vector<2x96xf32> to vector<2x32xf32>
    %303 = vector.extract_strided_slice %293 {offsets = [0, 32], sizes = [2, 32], strides = [1, 1]} : vector<2x96xf32> to vector<2x32xf32>
    %304 = arith.addf %302, %303 : vector<2x32xf32>
    %305 = arith.negf %304 : vector<2x32xf32>
    %306 = math.exp %305 : vector<2x32xf32>
    %cst_91 = arith.constant 1.000000e+00 : f32
    %307 = vector.broadcast %cst_91 : f32 to vector<2x32xf32>
    %308 = arith.addf %307, %306 : vector<2x32xf32>
    %309 = arith.divf %307, %308 : vector<2x32xf32>
    %310 = vector.extract_strided_slice %290 {offsets = [0, 64], sizes = [2, 32], strides = [1, 1]} : vector<2x96xf32> to vector<2x32xf32>
    %311 = vector.extract_strided_slice %293 {offsets = [0, 64], sizes = [2, 32], strides = [1, 1]} : vector<2x96xf32> to vector<2x32xf32>
    %312 = arith.mulf %301, %311 : vector<2x32xf32>
    %313 = arith.addf %310, %312 : vector<2x32xf32>
    %314 = math.tanh %313 : vector<2x32xf32>
    %cst_92 = arith.constant 1.000000e+00 : f32
    %315 = vector.broadcast %cst_92 : f32 to vector<2x32xf32>
    %316 = arith.subf %315, %309 : vector<2x32xf32>
    %317 = arith.mulf %316, %314 : vector<2x32xf32>
    %318 = arith.mulf %309, %289 : vector<2x32xf32>
    %319 = arith.addf %317, %318 : vector<2x32xf32>
    %c14_93 = arith.constant 14 : index
    %c0_94 = arith.constant 0 : index
    %320 = vector.load %arg14[%c14_93, %c0_94] : memref<16x32xf32, #tpu.memory_space<vmem>>, vector<2x32xf32>
    tpu.vector_store %arg14[%c14_93, %c0_94], %319 {strides = array<i32>} : memref<16x32xf32, #tpu.memory_space<vmem>>, vector<2x32xf32>,
    %321 = vector.extract_strided_slice %288 {offsets = [12, 0], sizes = [2, 96], strides = [1, 1]} : vector<16x96xf32> to vector<2x96xf32>
    %cst_95 = arith.constant dense<0.000000e+00> : vector<2x96xf32>
    %322 = tpu.matmul %319, %280, %cst_95 {dimension_numbers = #tpu.dot_dimension_numbers<[1], [0], [0], [1], [0, 0, 1, 1], [], []>} : vector<2x32xf32>, vector<32x96xf32>, vector<2x96xf32> -> vector<2x96xf32>
    %323 = vector.broadcast %284 : vector<1x96xf32> to vector<2x96xf32>
    %324 = arith.addf %322, %323 : vector<2x96xf32>
    %325 = vector.extract_strided_slice %321 {offsets = [0, 0], sizes = [2, 32], strides = [1, 1]} : vector<2x96xf32> to vector<2x32xf32>
    %326 = vector.extract_strided_slice %324 {offsets = [0, 0], sizes = [2, 32], strides = [1, 1]} : vector<2x96xf32> to vector<2x32xf32>
    %327 = arith.addf %325, %326 : vector<2x32xf32>
    %328 = arith.negf %327 : vector<2x32xf32>
    %329 = math.exp %328 : vector<2x32xf32>
    %cst_96 = arith.constant 1.000000e+00 : f32
    %330 = vector.broadcast %cst_96 : f32 to vector<2x32xf32>
    %331 = arith.addf %330, %329 : vector<2x32xf32>
    %332 = arith.divf %330, %331 : vector<2x32xf32>
    %333 = vector.extract_strided_slice %321 {offsets = [0, 32], sizes = [2, 32], strides = [1, 1]} : vector<2x96xf32> to vector<2x32xf32>
    %334 = vector.extract_strided_slice %324 {offsets = [0, 32], sizes = [2, 32], strides = [1, 1]} : vector<2x96xf32> to vector<2x32xf32>
    %335 = arith.addf %333, %334 : vector<2x32xf32>
    %336 = arith.negf %335 : vector<2x32xf32>
    %337 = math.exp %336 : vector<2x32xf32>
    %cst_97 = arith.constant 1.000000e+00 : f32
    %338 = vector.broadcast %cst_97 : f32 to vector<2x32xf32>
    %339 = arith.addf %338, %337 : vector<2x32xf32>
    %340 = arith.divf %338, %339 : vector<2x32xf32>
    %341 = vector.extract_strided_slice %321 {offsets = [0, 64], sizes = [2, 32], strides = [1, 1]} : vector<2x96xf32> to vector<2x32xf32>
    %342 = vector.extract_strided_slice %324 {offsets = [0, 64], sizes = [2, 32], strides = [1, 1]} : vector<2x96xf32> to vector<2x32xf32>
    %343 = arith.mulf %332, %342 : vector<2x32xf32>
    %344 = arith.addf %341, %343 : vector<2x32xf32>
    %345 = math.tanh %344 : vector<2x32xf32>
    %cst_98 = arith.constant 1.000000e+00 : f32
    %346 = vector.broadcast %cst_98 : f32 to vector<2x32xf32>
    %347 = arith.subf %346, %340 : vector<2x32xf32>
    %348 = arith.mulf %347, %345 : vector<2x32xf32>
    %349 = arith.mulf %340, %319 : vector<2x32xf32>
    %350 = arith.addf %348, %349 : vector<2x32xf32>
    %c12_99 = arith.constant 12 : index
    %c0_100 = arith.constant 0 : index
    %351 = vector.load %arg14[%c12_99, %c0_100] : memref<16x32xf32, #tpu.memory_space<vmem>>, vector<2x32xf32>
    tpu.vector_store %arg14[%c12_99, %c0_100], %350 {strides = array<i32>} : memref<16x32xf32, #tpu.memory_space<vmem>>, vector<2x32xf32>,
    %352 = vector.extract_strided_slice %288 {offsets = [10, 0], sizes = [2, 96], strides = [1, 1]} : vector<16x96xf32> to vector<2x96xf32>
    %cst_101 = arith.constant dense<0.000000e+00> : vector<2x96xf32>
    %353 = tpu.matmul %350, %280, %cst_101 {dimension_numbers = #tpu.dot_dimension_numbers<[1], [0], [0], [1], [0, 0, 1, 1], [], []>} : vector<2x32xf32>, vector<32x96xf32>, vector<2x96xf32> -> vector<2x96xf32>
    %354 = vector.broadcast %284 : vector<1x96xf32> to vector<2x96xf32>
    %355 = arith.addf %353, %354 : vector<2x96xf32>
    %356 = vector.extract_strided_slice %352 {offsets = [0, 0], sizes = [2, 32], strides = [1, 1]} : vector<2x96xf32> to vector<2x32xf32>
    %357 = vector.extract_strided_slice %355 {offsets = [0, 0], sizes = [2, 32], strides = [1, 1]} : vector<2x96xf32> to vector<2x32xf32>
    %358 = arith.addf %356, %357 : vector<2x32xf32>
    %359 = arith.negf %358 : vector<2x32xf32>
    %360 = math.exp %359 : vector<2x32xf32>
    %cst_102 = arith.constant 1.000000e+00 : f32
    %361 = vector.broadcast %cst_102 : f32 to vector<2x32xf32>
    %362 = arith.addf %361, %360 : vector<2x32xf32>
    %363 = arith.divf %361, %362 : vector<2x32xf32>
    %364 = vector.extract_strided_slice %352 {offsets = [0, 32], sizes = [2, 32], strides = [1, 1]} : vector<2x96xf32> to vector<2x32xf32>
    %365 = vector.extract_strided_slice %355 {offsets = [0, 32], sizes = [2, 32], strides = [1, 1]} : vector<2x96xf32> to vector<2x32xf32>
    %366 = arith.addf %364, %365 : vector<2x32xf32>
    %367 = arith.negf %366 : vector<2x32xf32>
    %368 = math.exp %367 : vector<2x32xf32>
    %cst_103 = arith.constant 1.000000e+00 : f32
    %369 = vector.broadcast %cst_103 : f32 to vector<2x32xf32>
    %370 = arith.addf %369, %368 : vector<2x32xf32>
    %371 = arith.divf %369, %370 : vector<2x32xf32>
    %372 = vector.extract_strided_slice %352 {offsets = [0, 64], sizes = [2, 32], strides = [1, 1]} : vector<2x96xf32> to vector<2x32xf32>
    %373 = vector.extract_strided_slice %355 {offsets = [0, 64], sizes = [2, 32], strides = [1, 1]} : vector<2x96xf32> to vector<2x32xf32>
    %374 = arith.mulf %363, %373 : vector<2x32xf32>
    %375 = arith.addf %372, %374 : vector<2x32xf32>
    %376 = math.tanh %375 : vector<2x32xf32>
    %cst_104 = arith.constant 1.000000e+00 : f32
    %377 = vector.broadcast %cst_104 : f32 to vector<2x32xf32>
    %378 = arith.subf %377, %371 : vector<2x32xf32>
    %379 = arith.mulf %378, %376 : vector<2x32xf32>
    %380 = arith.mulf %371, %350 : vector<2x32xf32>
    %381 = arith.addf %379, %380 : vector<2x32xf32>
    %c10_105 = arith.constant 10 : index
    %c0_106 = arith.constant 0 : index
    %382 = vector.load %arg14[%c10_105, %c0_106] : memref<16x32xf32, #tpu.memory_space<vmem>>, vector<2x32xf32>
    tpu.vector_store %arg14[%c10_105, %c0_106], %381 {strides = array<i32>} : memref<16x32xf32, #tpu.memory_space<vmem>>, vector<2x32xf32>,
    %383 = vector.extract_strided_slice %288 {offsets = [8, 0], sizes = [2, 96], strides = [1, 1]} : vector<16x96xf32> to vector<2x96xf32>
    %cst_107 = arith.constant dense<0.000000e+00> : vector<2x96xf32>
    %384 = tpu.matmul %381, %280, %cst_107 {dimension_numbers = #tpu.dot_dimension_numbers<[1], [0], [0], [1], [0, 0, 1, 1], [], []>} : vector<2x32xf32>, vector<32x96xf32>, vector<2x96xf32> -> vector<2x96xf32>
    %385 = vector.broadcast %284 : vector<1x96xf32> to vector<2x96xf32>
    %386 = arith.addf %384, %385 : vector<2x96xf32>
    %387 = vector.extract_strided_slice %383 {offsets = [0, 0], sizes = [2, 32], strides = [1, 1]} : vector<2x96xf32> to vector<2x32xf32>
    %388 = vector.extract_strided_slice %386 {offsets = [0, 0], sizes = [2, 32], strides = [1, 1]} : vector<2x96xf32> to vector<2x32xf32>
    %389 = arith.addf %387, %388 : vector<2x32xf32>
    %390 = arith.negf %389 : vector<2x32xf32>
    %391 = math.exp %390 : vector<2x32xf32>
    %cst_108 = arith.constant 1.000000e+00 : f32
    %392 = vector.broadcast %cst_108 : f32 to vector<2x32xf32>
    %393 = arith.addf %392, %391 : vector<2x32xf32>
    %394 = arith.divf %392, %393 : vector<2x32xf32>
    %395 = vector.extract_strided_slice %383 {offsets = [0, 32], sizes = [2, 32], strides = [1, 1]} : vector<2x96xf32> to vector<2x32xf32>
    %396 = vector.extract_strided_slice %386 {offsets = [0, 32], sizes = [2, 32], strides = [1, 1]} : vector<2x96xf32> to vector<2x32xf32>
    %397 = arith.addf %395, %396 : vector<2x32xf32>
    %398 = arith.negf %397 : vector<2x32xf32>
    %399 = math.exp %398 : vector<2x32xf32>
    %cst_109 = arith.constant 1.000000e+00 : f32
    %400 = vector.broadcast %cst_109 : f32 to vector<2x32xf32>
    %401 = arith.addf %400, %399 : vector<2x32xf32>
    %402 = arith.divf %400, %401 : vector<2x32xf32>
    %403 = vector.extract_strided_slice %383 {offsets = [0, 64], sizes = [2, 32], strides = [1, 1]} : vector<2x96xf32> to vector<2x32xf32>
    %404 = vector.extract_strided_slice %386 {offsets = [0, 64], sizes = [2, 32], strides = [1, 1]} : vector<2x96xf32> to vector<2x32xf32>
    %405 = arith.mulf %394, %404 : vector<2x32xf32>
    %406 = arith.addf %403, %405 : vector<2x32xf32>
    %407 = math.tanh %406 : vector<2x32xf32>
    %cst_110 = arith.constant 1.000000e+00 : f32
    %408 = vector.broadcast %cst_110 : f32 to vector<2x32xf32>
    %409 = arith.subf %408, %402 : vector<2x32xf32>
    %410 = arith.mulf %409, %407 : vector<2x32xf32>
    %411 = arith.mulf %402, %381 : vector<2x32xf32>
    %412 = arith.addf %410, %411 : vector<2x32xf32>
    %c8_111 = arith.constant 8 : index
    %c0_112 = arith.constant 0 : index
    %413 = vector.load %arg14[%c8_111, %c0_112] : memref<16x32xf32, #tpu.memory_space<vmem>>, vector<2x32xf32>
    tpu.vector_store %arg14[%c8_111, %c0_112], %412 {strides = array<i32>} : memref<16x32xf32, #tpu.memory_space<vmem>>, vector<2x32xf32>,
    %414 = vector.extract_strided_slice %288 {offsets = [6, 0], sizes = [2, 96], strides = [1, 1]} : vector<16x96xf32> to vector<2x96xf32>
    %cst_113 = arith.constant dense<0.000000e+00> : vector<2x96xf32>
    %415 = tpu.matmul %412, %280, %cst_113 {dimension_numbers = #tpu.dot_dimension_numbers<[1], [0], [0], [1], [0, 0, 1, 1], [], []>} : vector<2x32xf32>, vector<32x96xf32>, vector<2x96xf32> -> vector<2x96xf32>
    %416 = vector.broadcast %284 : vector<1x96xf32> to vector<2x96xf32>
    %417 = arith.addf %415, %416 : vector<2x96xf32>
    %418 = vector.extract_strided_slice %414 {offsets = [0, 0], sizes = [2, 32], strides = [1, 1]} : vector<2x96xf32> to vector<2x32xf32>
    %419 = vector.extract_strided_slice %417 {offsets = [0, 0], sizes = [2, 32], strides = [1, 1]} : vector<2x96xf32> to vector<2x32xf32>
    %420 = arith.addf %418, %419 : vector<2x32xf32>
    %421 = arith.negf %420 : vector<2x32xf32>
    %422 = math.exp %421 : vector<2x32xf32>
    %cst_114 = arith.constant 1.000000e+00 : f32
    %423 = vector.broadcast %cst_114 : f32 to vector<2x32xf32>
    %424 = arith.addf %423, %422 : vector<2x32xf32>
    %425 = arith.divf %423, %424 : vector<2x32xf32>
    %426 = vector.extract_strided_slice %414 {offsets = [0, 32], sizes = [2, 32], strides = [1, 1]} : vector<2x96xf32> to vector<2x32xf32>
    %427 = vector.extract_strided_slice %417 {offsets = [0, 32], sizes = [2, 32], strides = [1, 1]} : vector<2x96xf32> to vector<2x32xf32>
    %428 = arith.addf %426, %427 : vector<2x32xf32>
    %429 = arith.negf %428 : vector<2x32xf32>
    %430 = math.exp %429 : vector<2x32xf32>
    %cst_115 = arith.constant 1.000000e+00 : f32
    %431 = vector.broadcast %cst_115 : f32 to vector<2x32xf32>
    %432 = arith.addf %431, %430 : vector<2x32xf32>
    %433 = arith.divf %431, %432 : vector<2x32xf32>
    %434 = vector.extract_strided_slice %414 {offsets = [0, 64], sizes = [2, 32], strides = [1, 1]} : vector<2x96xf32> to vector<2x32xf32>
    %435 = vector.extract_strided_slice %417 {offsets = [0, 64], sizes = [2, 32], strides = [1, 1]} : vector<2x96xf32> to vector<2x32xf32>
    %436 = arith.mulf %425, %435 : vector<2x32xf32>
    %437 = arith.addf %434, %436 : vector<2x32xf32>
    %438 = math.tanh %437 : vector<2x32xf32>
    %cst_116 = arith.constant 1.000000e+00 : f32
    %439 = vector.broadcast %cst_116 : f32 to vector<2x32xf32>
    %440 = arith.subf %439, %433 : vector<2x32xf32>
    %441 = arith.mulf %440, %438 : vector<2x32xf32>
    %442 = arith.mulf %433, %412 : vector<2x32xf32>
    %443 = arith.addf %441, %442 : vector<2x32xf32>
    %c6_117 = arith.constant 6 : index
    %c0_118 = arith.constant 0 : index
    %444 = vector.load %arg14[%c6_117, %c0_118] : memref<16x32xf32, #tpu.memory_space<vmem>>, vector<2x32xf32>
    tpu.vector_store %arg14[%c6_117, %c0_118], %443 {strides = array<i32>} : memref<16x32xf32, #tpu.memory_space<vmem>>, vector<2x32xf32>,
    %445 = vector.extract_strided_slice %288 {offsets = [4, 0], sizes = [2, 96], strides = [1, 1]} : vector<16x96xf32> to vector<2x96xf32>
    %cst_119 = arith.constant dense<0.000000e+00> : vector<2x96xf32>
    %446 = tpu.matmul %443, %280, %cst_119 {dimension_numbers = #tpu.dot_dimension_numbers<[1], [0], [0], [1], [0, 0, 1, 1], [], []>} : vector<2x32xf32>, vector<32x96xf32>, vector<2x96xf32> -> vector<2x96xf32>
    %447 = vector.broadcast %284 : vector<1x96xf32> to vector<2x96xf32>
    %448 = arith.addf %446, %447 : vector<2x96xf32>
    %449 = vector.extract_strided_slice %445 {offsets = [0, 0], sizes = [2, 32], strides = [1, 1]} : vector<2x96xf32> to vector<2x32xf32>
    %450 = vector.extract_strided_slice %448 {offsets = [0, 0], sizes = [2, 32], strides = [1, 1]} : vector<2x96xf32> to vector<2x32xf32>
    %451 = arith.addf %449, %450 : vector<2x32xf32>
    %452 = arith.negf %451 : vector<2x32xf32>
    %453 = math.exp %452 : vector<2x32xf32>
    %cst_120 = arith.constant 1.000000e+00 : f32
    %454 = vector.broadcast %cst_120 : f32 to vector<2x32xf32>
    %455 = arith.addf %454, %453 : vector<2x32xf32>
    %456 = arith.divf %454, %455 : vector<2x32xf32>
    %457 = vector.extract_strided_slice %445 {offsets = [0, 32], sizes = [2, 32], strides = [1, 1]} : vector<2x96xf32> to vector<2x32xf32>
    %458 = vector.extract_strided_slice %448 {offsets = [0, 32], sizes = [2, 32], strides = [1, 1]} : vector<2x96xf32> to vector<2x32xf32>
    %459 = arith.addf %457, %458 : vector<2x32xf32>
    %460 = arith.negf %459 : vector<2x32xf32>
    %461 = math.exp %460 : vector<2x32xf32>
    %cst_121 = arith.constant 1.000000e+00 : f32
    %462 = vector.broadcast %cst_121 : f32 to vector<2x32xf32>
    %463 = arith.addf %462, %461 : vector<2x32xf32>
    %464 = arith.divf %462, %463 : vector<2x32xf32>
    %465 = vector.extract_strided_slice %445 {offsets = [0, 64], sizes = [2, 32], strides = [1, 1]} : vector<2x96xf32> to vector<2x32xf32>
    %466 = vector.extract_strided_slice %448 {offsets = [0, 64], sizes = [2, 32], strides = [1, 1]} : vector<2x96xf32> to vector<2x32xf32>
    %467 = arith.mulf %456, %466 : vector<2x32xf32>
    %468 = arith.addf %465, %467 : vector<2x32xf32>
    %469 = math.tanh %468 : vector<2x32xf32>
    %cst_122 = arith.constant 1.000000e+00 : f32
    %470 = vector.broadcast %cst_122 : f32 to vector<2x32xf32>
    %471 = arith.subf %470, %464 : vector<2x32xf32>
    %472 = arith.mulf %471, %469 : vector<2x32xf32>
    %473 = arith.mulf %464, %443 : vector<2x32xf32>
    %474 = arith.addf %472, %473 : vector<2x32xf32>
    %c4_123 = arith.constant 4 : index
    %c0_124 = arith.constant 0 : index
    %475 = vector.load %arg14[%c4_123, %c0_124] : memref<16x32xf32, #tpu.memory_space<vmem>>, vector<2x32xf32>
    tpu.vector_store %arg14[%c4_123, %c0_124], %474 {strides = array<i32>} : memref<16x32xf32, #tpu.memory_space<vmem>>, vector<2x32xf32>,
    %476 = vector.extract_strided_slice %288 {offsets = [2, 0], sizes = [2, 96], strides = [1, 1]} : vector<16x96xf32> to vector<2x96xf32>
    %cst_125 = arith.constant dense<0.000000e+00> : vector<2x96xf32>
    %477 = tpu.matmul %474, %280, %cst_125 {dimension_numbers = #tpu.dot_dimension_numbers<[1], [0], [0], [1], [0, 0, 1, 1], [], []>} : vector<2x32xf32>, vector<32x96xf32>, vector<2x96xf32> -> vector<2x96xf32>
    %478 = vector.broadcast %284 : vector<1x96xf32> to vector<2x96xf32>
    %479 = arith.addf %477, %478 : vector<2x96xf32>
    %480 = vector.extract_strided_slice %476 {offsets = [0, 0], sizes = [2, 32], strides = [1, 1]} : vector<2x96xf32> to vector<2x32xf32>
    %481 = vector.extract_strided_slice %479 {offsets = [0, 0], sizes = [2, 32], strides = [1, 1]} : vector<2x96xf32> to vector<2x32xf32>
    %482 = arith.addf %480, %481 : vector<2x32xf32>
    %483 = arith.negf %482 : vector<2x32xf32>
    %484 = math.exp %483 : vector<2x32xf32>
    %cst_126 = arith.constant 1.000000e+00 : f32
    %485 = vector.broadcast %cst_126 : f32 to vector<2x32xf32>
    %486 = arith.addf %485, %484 : vector<2x32xf32>
    %487 = arith.divf %485, %486 : vector<2x32xf32>
    %488 = vector.extract_strided_slice %476 {offsets = [0, 32], sizes = [2, 32], strides = [1, 1]} : vector<2x96xf32> to vector<2x32xf32>
    %489 = vector.extract_strided_slice %479 {offsets = [0, 32], sizes = [2, 32], strides = [1, 1]} : vector<2x96xf32> to vector<2x32xf32>
    %490 = arith.addf %488, %489 : vector<2x32xf32>
    %491 = arith.negf %490 : vector<2x32xf32>
    %492 = math.exp %491 : vector<2x32xf32>
    %cst_127 = arith.constant 1.000000e+00 : f32
    %493 = vector.broadcast %cst_127 : f32 to vector<2x32xf32>
    %494 = arith.addf %493, %492 : vector<2x32xf32>
    %495 = arith.divf %493, %494 : vector<2x32xf32>
    %496 = vector.extract_strided_slice %476 {offsets = [0, 64], sizes = [2, 32], strides = [1, 1]} : vector<2x96xf32> to vector<2x32xf32>
    %497 = vector.extract_strided_slice %479 {offsets = [0, 64], sizes = [2, 32], strides = [1, 1]} : vector<2x96xf32> to vector<2x32xf32>
    %498 = arith.mulf %487, %497 : vector<2x32xf32>
    %499 = arith.addf %496, %498 : vector<2x32xf32>
    %500 = math.tanh %499 : vector<2x32xf32>
    %cst_128 = arith.constant 1.000000e+00 : f32
    %501 = vector.broadcast %cst_128 : f32 to vector<2x32xf32>
    %502 = arith.subf %501, %495 : vector<2x32xf32>
    %503 = arith.mulf %502, %500 : vector<2x32xf32>
    %504 = arith.mulf %495, %474 : vector<2x32xf32>
    %505 = arith.addf %503, %504 : vector<2x32xf32>
    %c2_129 = arith.constant 2 : index
    %c0_130 = arith.constant 0 : index
    %506 = vector.load %arg14[%c2_129, %c0_130] : memref<16x32xf32, #tpu.memory_space<vmem>>, vector<2x32xf32>
    tpu.vector_store %arg14[%c2_129, %c0_130], %505 {strides = array<i32>} : memref<16x32xf32, #tpu.memory_space<vmem>>, vector<2x32xf32>,
    %507 = vector.extract_strided_slice %288 {offsets = [0, 0], sizes = [2, 96], strides = [1, 1]} : vector<16x96xf32> to vector<2x96xf32>
    %cst_131 = arith.constant dense<0.000000e+00> : vector<2x96xf32>
    %508 = tpu.matmul %505, %280, %cst_131 {dimension_numbers = #tpu.dot_dimension_numbers<[1], [0], [0], [1], [0, 0, 1, 1], [], []>} : vector<2x32xf32>, vector<32x96xf32>, vector<2x96xf32> -> vector<2x96xf32>
    %509 = vector.broadcast %284 : vector<1x96xf32> to vector<2x96xf32>
    %510 = arith.addf %508, %509 : vector<2x96xf32>
    %511 = vector.extract_strided_slice %507 {offsets = [0, 0], sizes = [2, 32], strides = [1, 1]} : vector<2x96xf32> to vector<2x32xf32>
    %512 = vector.extract_strided_slice %510 {offsets = [0, 0], sizes = [2, 32], strides = [1, 1]} : vector<2x96xf32> to vector<2x32xf32>
    %513 = arith.addf %511, %512 : vector<2x32xf32>
    %514 = arith.negf %513 : vector<2x32xf32>
    %515 = math.exp %514 : vector<2x32xf32>
    %cst_132 = arith.constant 1.000000e+00 : f32
    %516 = vector.broadcast %cst_132 : f32 to vector<2x32xf32>
    %517 = arith.addf %516, %515 : vector<2x32xf32>
    %518 = arith.divf %516, %517 : vector<2x32xf32>
    %519 = vector.extract_strided_slice %507 {offsets = [0, 32], sizes = [2, 32], strides = [1, 1]} : vector<2x96xf32> to vector<2x32xf32>
    %520 = vector.extract_strided_slice %510 {offsets = [0, 32], sizes = [2, 32], strides = [1, 1]} : vector<2x96xf32> to vector<2x32xf32>
    %521 = arith.addf %519, %520 : vector<2x32xf32>
    %522 = arith.negf %521 : vector<2x32xf32>
    %523 = math.exp %522 : vector<2x32xf32>
    %cst_133 = arith.constant 1.000000e+00 : f32
    %524 = vector.broadcast %cst_133 : f32 to vector<2x32xf32>
    %525 = arith.addf %524, %523 : vector<2x32xf32>
    %526 = arith.divf %524, %525 : vector<2x32xf32>
    %527 = vector.extract_strided_slice %507 {offsets = [0, 64], sizes = [2, 32], strides = [1, 1]} : vector<2x96xf32> to vector<2x32xf32>
    %528 = vector.extract_strided_slice %510 {offsets = [0, 64], sizes = [2, 32], strides = [1, 1]} : vector<2x96xf32> to vector<2x32xf32>
    %529 = arith.mulf %518, %528 : vector<2x32xf32>
    %530 = arith.addf %527, %529 : vector<2x32xf32>
    %531 = math.tanh %530 : vector<2x32xf32>
    %cst_134 = arith.constant 1.000000e+00 : f32
    %532 = vector.broadcast %cst_134 : f32 to vector<2x32xf32>
    %533 = arith.subf %532, %526 : vector<2x32xf32>
    %534 = arith.mulf %533, %531 : vector<2x32xf32>
    %535 = arith.mulf %526, %505 : vector<2x32xf32>
    %536 = arith.addf %534, %535 : vector<2x32xf32>
    %c0_135 = arith.constant 0 : index
    %c0_136 = arith.constant 0 : index
    %537 = vector.load %arg14[%c0_135, %c0_136] : memref<16x32xf32, #tpu.memory_space<vmem>>, vector<2x32xf32>
    tpu.vector_store %arg14[%c0_135, %c0_136], %536 {strides = array<i32>} : memref<16x32xf32, #tpu.memory_space<vmem>>, vector<2x32xf32>,
    %c0_137 = arith.constant 0 : index
    %c0_138 = arith.constant 0 : index
    %538 = vector.load %arg14[%c0_137, %c0_138] : memref<16x32xf32, #tpu.memory_space<vmem>>, vector<16x32xf32>
    %cst_139 = arith.constant 0.000000e+00 : f32
    %539 = vector.broadcast %cst_139 : f32 to vector<16x32xf32>
    %540 = arith.maximumf %538, %539 : vector<16x32xf32>
    %c0_140 = arith.constant 0 : index
    %c0_141 = arith.constant 0 : index
    %541 = vector.load %arg11[%c0_140, %c0_141] : memref<32x6xf32, #tpu.memory_space<vmem>>, vector<32x6xf32>
    %cst_142 = arith.constant dense<0.000000e+00> : vector<16x6xf32>
    %542 = tpu.matmul %540, %541, %cst_142 {dimension_numbers = #tpu.dot_dimension_numbers<[1], [0], [0], [1], [0, 0, 1, 1], [], []>} : vector<16x32xf32>, vector<32x6xf32>, vector<16x6xf32> -> vector<16x6xf32>
    %c0_143 = arith.constant 0 : index
    %c0_144 = arith.constant 0 : index
    %543 = vector.load %arg12[%c0_143, %c0_144] : memref<1x6xf32, #tpu.memory_space<vmem>>, vector<1x6xf32>
    %544 = vector.broadcast %543 : vector<1x6xf32> to vector<16x6xf32>
    %545 = arith.addf %542, %544 : vector<16x6xf32>
    %c0_145 = arith.constant 0 : index
    %c0_146 = arith.constant 0 : index
    %546 = vector.load %arg13[%c0_145, %c0_146] : memref<16x6xf32, #tpu.memory_space<vmem>>, vector<16x6xf32>
    tpu.vector_store %arg13[%c0_145, %c0_146], %545 {strides = array<i32>} : memref<16x6xf32, #tpu.memory_space<vmem>>, vector<16x6xf32>,
    return
  }
}

</mosaic_0001>

<llo_original>
// kernel: tpu_custom_call.1
$region0: #{tpu_custom_call.1}
  #allocation0 [shape = 'u32[]', space=smem, size = 0x4, offset = 0x4, fixed_abs, tag = 'smem constant byte address 0x4 - core index']
  #allocation1 [shape = 'u32[144,128]{1,0:T(1,128)}', space=vmem, size = 0x12000, scoped, tag = 'internal scratch']
  #allocation2 [shape = 'f32[16,32]{1,0:T(8,128)}', space=vmem, size = 0x2000, scoped, tag = 'scratch operand']
  %s0 = inlined_call_operand.vmem [shape: f32[16,6], index: 0, kind: input, shape index: {}]
  %s1 = inlined_call_operand.vmem [shape: f32[16,3], index: 1, kind: input, shape index: {}]
  %s2 = inlined_call_operand.vmem [shape: f32[16,1], index: 2, kind: input, shape index: {}]
  %s3 = inlined_call_operand.hbm [shape: f32[6,32], index: 3, kind: input, shape index: {}]
  %s4 = inlined_call_operand.hbm [shape: f32[3,32], index: 4, kind: input, shape index: {}]
  %s5 = inlined_call_operand.hbm [shape: f32[1,32], index: 5, kind: input, shape index: {}]
  %s6 = inlined_call_operand.hbm [shape: f32[1,32], index: 6, kind: input, shape index: {}]
  %s7 = inlined_call_operand.vmem [shape: f32[2,32,96], index: 7, kind: input, shape index: {}]
  %s8 = inlined_call_operand.vmem [shape: f32[2,32,96], index: 8, kind: input, shape index: {}]
  %s9 = inlined_call_operand.vmem [shape: f32[2,1,96], index: 9, kind: input, shape index: {}]
  %s10 = inlined_call_operand.hbm [shape: f32[2,1,96], index: 10, kind: input, shape index: {}]
  %s11 = inlined_call_operand.vmem [shape: f32[32,6], index: 11, kind: input, shape index: {}]
  %s12 = inlined_call_operand.vmem [shape: f32[1,6], index: 12, kind: input, shape index: {}]
  %s13 = inlined_call_operand.vmem [shape: f32[16,6], index: 13, kind: output, shape index: {}]
  %s14 = sld [smem:[#allocation0]]
  $region82: #{tpu_custom_call.1} parent=0
    _
  %s16 = ssub.s32 1, %s14
  %s17 = scalar_select 0, %s16, %s14
  $region1: #{tpu_custom_call.1} parent=0
    #allocation3 [shape = 'u8[4096]{0}', space=vmem, size = 0x1000, scoped, tag = 'input window, operand 3, single buffered']
    #allocation4 [shape = 's32[1]{0}', space=sflag, size = 0x4, scoped, tag = 'scoped memory for tpu_custom_call.1']
    #allocation5 [shape = 'u8[2048]{0}', space=vmem, size = 0x800, scoped, tag = 'input window, operand 4, single buffered']
    #allocation6 [shape = 's32[1]{0}', space=sflag, size = 0x4, scoped, tag = 'scoped memory for tpu_custom_call.1']
    #allocation7 [shape = 'u8[512]{0}', space=vmem, size = 0x400, scoped, tag = 'input window, operand 5, single buffered']
    #allocation8 [shape = 'u8[512]{0}', space=vmem, size = 0x400, scoped, tag = 'input window, operand 6, single buffered']
    #allocation9 [shape = 's32[1]{0}', space=sflag, size = 0x4, scoped, tag = 'scoped memory for tpu_custom_call.1']
    #allocation10 [shape = 'u8[1024]{0}', space=vmem, size = 0x400, scoped, tag = 'input window, operand 10, single buffered']
    %18 = vsyncpa [#allocation4], 0
    %19 = vsyncpa [#allocation6], 0
    %20 = vsyncpa [#allocation9], 0
    // Predicated region
    $region2: #{tpu_custom_call.1} parent=1 // pred_check
      _
    $region3: #{tpu_custom_call.1} parent=1 // pred_check_branch
      %22 = sbr.rel (0) target = $region5
    $region4: #{tpu_custom_call.1} parent=1 // pred_region
      _
    $region5: #{tpu_custom_call.1} parent=1 // pred_fallthru
      _
    // Predicated region
    $region6: #{tpu_custom_call.1} parent=1 // pred_check
      _
    $region7: #{tpu_custom_call.1} parent=1 // pred_check_branch
      %24 = sbr.rel (0) target = $region9
    $region8: #{tpu_custom_call.1} parent=1 // pred_region
      _
    $region9: #{tpu_custom_call.1} parent=1 // pred_fallthru
      _
    // Predicated region
    $region10: #{tpu_custom_call.1} parent=1 // pred_check
      _
    $region11: #{tpu_custom_call.1} parent=1 // pred_check_branch
      %26 = sbr.rel (0) target = $region13
    $region12: #{tpu_custom_call.1} parent=1 // pred_region
      _
    $region13: #{tpu_custom_call.1} parent=1 // pred_fallthru
      _
    // Predicated region
    $region14: #{tpu_custom_call.1} parent=1 // pred_check
      _
    $region15: #{tpu_custom_call.1} parent=1 // pred_check_branch
      %28 = sbr.rel (0) target = $region17
    $region16: #{tpu_custom_call.1} parent=1 // pred_region
      %s30 = ssub.s32 128, 128
      %31 = vsyncadd [#allocation4], %s30
      %s33 = sshll.u32 [#allocation3], 4
      %s34 = int_to_ptr.vmem [resolvable:$true] %s33
      %36 = dma.hbm_to_vmem [thread:$0]  %s3, 128, %s34, [#allocation4]
    $region17: #{tpu_custom_call.1} parent=1 // pred_fallthru
      _
    // Predicated region
    $region18: #{tpu_custom_call.1} parent=1 // pred_check
      _
    $region19: #{tpu_custom_call.1} parent=1 // pred_check_branch
      %38 = sbr.rel (0) target = $region21
    $region20: #{tpu_custom_call.1} parent=1 // pred_region
      %s40 = ssub.s32 64, 64
      %41 = vsyncadd [#allocation6], %s40
      %s43 = sshll.u32 [#allocation5], 4
      %s44 = int_to_ptr.vmem [resolvable:$true] %s43
      %46 = dma.hbm_to_vmem [thread:$0]  %s4, 64, %s44, [#allocation6]
    $region21: #{tpu_custom_call.1} parent=1 // pred_fallthru
      _
    // Predicated region
    $region22: #{tpu_custom_call.1} parent=1 // pred_check
      _
    $region23: #{tpu_custom_call.1} parent=1 // pred_check_branch
      %48 = sbr.rel (0) target = $region25
    $region24: #{tpu_custom_call.1} parent=1 // pred_region
      %s50 = ssub.s32 16, 16
      %51 = vsyncadd [#allocation6], %s50
      %s53 = sshll.u32 [#allocation7], 4
      %s54 = int_to_ptr.vmem [resolvable:$true] %s53
      %56 = dma.hbm_to_vmem [thread:$0]  %s5, 16, %s54, [#allocation6]
    $region25: #{tpu_custom_call.1} parent=1 // pred_fallthru
      _
    // Predicated region
    $region26: #{tpu_custom_call.1} parent=1 // pred_check
      _
    $region27: #{tpu_custom_call.1} parent=1 // pred_check_branch
      %58 = sbr.rel (0) target = $region29
    $region28: #{tpu_custom_call.1} parent=1 // pred_region
      %s60 = ssub.s32 16, 16
      %61 = vsyncadd [#allocation9], %s60
      %s63 = sshll.u32 [#allocation8], 4
      %s64 = int_to_ptr.vmem [resolvable:$true] %s63
      %66 = dma.hbm_to_vmem [thread:$0]  %s6, 16, %s64, [#allocation9]
    $region29: #{tpu_custom_call.1} parent=1 // pred_fallthru
      _
    // Predicated region
    $region30: #{tpu_custom_call.1} parent=1 // pred_check
      _
    $region31: #{tpu_custom_call.1} parent=1 // pred_check_branch
      %68 = sbr.rel (0) target = $region33
    $region32: #{tpu_custom_call.1} parent=1 // pred_region
      _
    $region33: #{tpu_custom_call.1} parent=1 // pred_fallthru
      _
    // Predicated region
    $region34: #{tpu_custom_call.1} parent=1 // pred_check
      _
    $region35: #{tpu_custom_call.1} parent=1 // pred_check_branch
      %70 = sbr.rel (0) target = $region37
    $region36: #{tpu_custom_call.1} parent=1 // pred_region
      _
    $region37: #{tpu_custom_call.1} parent=1 // pred_fallthru
      _
    // Predicated region
    $region38: #{tpu_custom_call.1} parent=1 // pred_check
      _
    $region39: #{tpu_custom_call.1} parent=1 // pred_check_branch
      %72 = sbr.rel (0) target = $region41
    $region40: #{tpu_custom_call.1} parent=1 // pred_region
      _
    $region41: #{tpu_custom_call.1} parent=1 // pred_fallthru
      _
    // Predicated region
    $region42: #{tpu_custom_call.1} parent=1 // pred_check
      _
    $region43: #{tpu_custom_call.1} parent=1 // pred_check_branch
      %74 = sbr.rel (0) target = $region45
    $region44: #{tpu_custom_call.1} parent=1 // pred_region
      %s76 = ssub.s32 32, 32
      %77 = vsyncadd [#allocation9], %s76
      %s78 = sshll.u32 [#allocation10], 4
      %s79 = int_to_ptr.vmem [resolvable:$true] %s78
      %84 = dma.hbm_to_vmem [thread:$0]  %s10, 32, %s79, [#allocation9], 16, 16, 1
    $region45: #{tpu_custom_call.1} parent=1 // pred_fallthru
      _
    // Predicated region
    $region46: #{tpu_custom_call.1} parent=1 // pred_check
      _
    $region47: #{tpu_custom_call.1} parent=1 // pred_check_branch
      %86 = sbr.rel (0) target = $region49
    $region48: #{tpu_custom_call.1} parent=1 // pred_region
      _
    $region49: #{tpu_custom_call.1} parent=1 // pred_fallthru
      _
    // Predicated region
    $region50: #{tpu_custom_call.1} parent=1 // pred_check
      _
    $region51: #{tpu_custom_call.1} parent=1 // pred_check_branch
      %88 = sbr.rel (0) target = $region53
    $region52: #{tpu_custom_call.1} parent=1 // pred_region
      _
    $region53: #{tpu_custom_call.1} parent=1 // pred_fallthru
      _
    // Predicated region
    $region54: #{tpu_custom_call.1} parent=1 // pred_check
      _
    $region55: #{tpu_custom_call.1} parent=1 // pred_check_branch
      %90 = sbr.rel (0) target = $region57
    $region56: #{tpu_custom_call.1} parent=1 // pred_region
      %91 = dma.done [#allocation4], 128
    $region57: #{tpu_custom_call.1} parent=1 // pred_fallthru
      _
    // Predicated region
    $region58: #{tpu_custom_call.1} parent=1 // pred_check
      _
    $region59: #{tpu_custom_call.1} parent=1 // pred_check_branch
      %93 = sbr.rel (0) target = $region61
    $region60: #{tpu_custom_call.1} parent=1 // pred_region
      %94 = dma.done [#allocation6], 64
    $region61: #{tpu_custom_call.1} parent=1 // pred_fallthru
      _
    // Predicated region
    $region62: #{tpu_custom_call.1} parent=1 // pred_check
      _
    $region63: #{tpu_custom_call.1} parent=1 // pred_check_branch
      %96 = sbr.rel (0) target = $region65
    $region64: #{tpu_custom_call.1} parent=1 // pred_region
      %97 = dma.done [#allocation6], 16
    $region65: #{tpu_custom_call.1} parent=1 // pred_fallthru
      _
    // Predicated region
    $region66: #{tpu_custom_call.1} parent=1 // pred_check
      _
    $region67: #{tpu_custom_call.1} parent=1 // pred_check_branch
      %99 = sbr.rel (0) target = $region69
    $region68: #{tpu_custom_call.1} parent=1 // pred_region
      %100 = dma.done [#allocation9], 16
    $region69: #{tpu_custom_call.1} parent=1 // pred_fallthru
      _
    // Predicated region
    $region70: #{tpu_custom_call.1} parent=1 // pred_check
      _
    $region71: #{tpu_custom_call.1} parent=1 // pred_check_branch
      %102 = sbr.rel (0) target = $region73
    $region72: #{tpu_custom_call.1} parent=1 // pred_region
      %103 = dma.done [#allocation9], 32
    $region73: #{tpu_custom_call.1} parent=1 // pred_fallthru
      _
    %v104 = vld [vmem:[%s0] sm:$0xff]
    %v105 = vld [vmem:[%s0 + $0x8] sm:$0xff]
    %v106 = vld [vmem:[%s1] sm:$0xff]
    %v107 = vld [vmem:[%s1 + $0x8] sm:$0xff]
    %v108 = vtanh.pop %v106
    %v109 = vtanh.pop %v107
    %v110 = vld [vmem:[%s2] sm:$0xff]
    %v111 = vld [vmem:[%s2 + $0x8] sm:$0xff]
    %v112 = vld [vmem:[#allocation3] sm:$0x3f]
    %v113 = vld [vmem:[#allocation5] sm:$0x7]
    %vm114 = vcmask 23552
    %v116 = vsel %vm114, %v108, 0
    %v119 = vsel %vm114, %v109, 0
    %vm121 = vcmask 1042432
    %v123 = vsel %vm121, %v113, 0
    %125 = vmatprep.subr.mxu0 0.0
    %126 = vmatpush1.msra.mxu0 %v123
    %127 = vmatprep.subr.mxu0 0.0
    %128 = vmatpush1.msra.mxu0 0.0
    %129 = vmatprep.subr.mxu0 0.0
    %130 = vmatpush1.msra.mxu0 0.0
    %131 = vmatprep.subr.mxu0 0.0
    %132 = vmatpush1.msra.mxu0 0.0
    %133 = vmatprep.subr.mxu0 0.0
    %134 = vmatpush1.msra.mxu0 0.0
    %135 = vmatprep.subr.mxu0 0.0
    %136 = vmatpush1.msra.mxu0 0.0
    %137 = vmatprep.subr.mxu0 0.0
    %138 = vmatpush1.msra.mxu0 0.0
    %139 = vmatprep.subr.mxu0 0.0
    %140 = vmatpush1.msra.mxu0 0.0
    %141 = vmatprep.subr.mxu0 0.0
    %142 = vmatpush1.msra.mxu0 0.0
    %143 = vmatprep.subr.mxu0 0.0
    %144 = vmatpush1.msra.mxu0 0.0
    %145 = vmatprep.subr.mxu0 0.0
    %146 = vmatpush1.msra.mxu0 0.0
    %147 = vmatprep.subr.mxu0 0.0
    %148 = vmatpush1.msra.mxu0 0.0
    %149 = vmatprep.subr.mxu0 0.0
    %150 = vmatpush1.msra.mxu0 0.0
    %151 = vmatprep.subr.mxu0 0.0
    %152 = vmatpush1.msra.mxu0 0.0
    %153 = vmatprep.subr.mxu0 0.0
    %154 = vmatpush1.msra.mxu0 0.0
    %155 = vmatprep.subr.mxu0 0.0
    %156 = vmatpush1.msra.mxu0 0.0
    %157 = vmatprep.subr.mxu0 0.0
    %158 = vmatpush1.msra.mxu0 0.0
    %159 = vmatprep.subr.mxu0 0.0
    %160 = vmatpush1.msra.mxu0 0.0
    %161 = vmatprep.subr.mxu0 0.0
    %162 = vmatpush1.msra.mxu0 0.0
    %163 = vmatprep.subr.mxu0 0.0
    %164 = vmatpush1.msra.mxu0 0.0
    %165 = vmatprep.subr.mxu0 0.0
    %166 = vmatpush1.msra.mxu0 0.0
    %167 = vmatprep.subr.mxu0 0.0
    %168 = vmatpush1.msra.mxu0 0.0
    %169 = vmatprep.subr.mxu0 0.0
    %170 = vmatpush1.msra.mxu0 0.0
    %171 = vmatprep.subr.mxu0 0.0
    %172 = vmatpush1.msra.mxu0 0.0
    %173 = vmatprep.subr.mxu0 0.0
    %174 = vmatpush1.msra.mxu0 0.0
    %175 = vmatprep.subr.mxu0 0.0
    %176 = vmatpush1.msra.mxu0 0.0
    %177 = vmatprep.subr.mxu0 0.0
    %178 = vmatpush1.msra.mxu0 0.0
    %179 = vmatprep.subr.mxu0 0.0
    %180 = vmatpush1.msra.mxu0 0.0
    %181 = vmatprep.subr.mxu0 0.0
    %182 = vmatpush1.msra.mxu0 0.0
    %183 = vmatprep.subr.mxu0 0.0
    %184 = vmatpush1.msra.mxu0 0.0
    %185 = vmatprep.subr.mxu0 0.0
    %186 = vmatpush1.msra.mxu0 0.0
    %187 = vmatprep.subr.mxu0 0.0
    %188 = vmatpush1.msra.mxu0 0.0
    %189 = vmatprep.mubr.f32.mxu0 0.0
    %190 = vmatmul.mubr.f32.gmra.mrb[0].mxu0 %v116
    %v191 = vpop.f32.mrb[0].mxu0
    %v192 = vadd.f32 0.0, %v191
    %v193 = vpop.f32.mrb[0].mxu0
    %194 = vmatprep.mubr.f32.mxu0 0.0
    %195 = vmatmul.mubr.f32.gmra.mrb[0].mxu0 %v119
    %v196 = vpop.f32.mrb[0].mxu0
    %v197 = vadd.f32 0.0, %v196
    %v198 = vpop.f32.mrb[0].mxu0
    %199 = vdwg.mxu0
    %vm200 = vcmask 48128
    %v202 = vsel %vm200, %v104, 0
    %v205 = vsel %vm200, %v105, 0
    %vm207 = vcmask 1045504
    %v209 = vsel %vm207, %v112, 0
    %211 = vmatprep.subr.mxu0 0.0
    %212 = vmatpush1.msra.mxu0 %v209
    %213 = vmatprep.subr.mxu0 0.0
    %214 = vmatpush1.msra.mxu0 0.0
    %215 = vmatprep.subr.mxu0 0.0
    %216 = vmatpush1.msra.mxu0 0.0
    %217 = vmatprep.subr.mxu0 0.0
    %218 = vmatpush1.msra.mxu0 0.0
    %219 = vmatprep.subr.mxu0 0.0
    %220 = vmatpush1.msra.mxu0 0.0
    %221 = vmatprep.subr.mxu0 0.0
    %222 = vmatpush1.msra.mxu0 0.0
    %223 = vmatprep.subr.mxu0 0.0
    %224 = vmatpush1.msra.mxu0 0.0
    %225 = vmatprep.subr.mxu0 0.0
    %226 = vmatpush1.msra.mxu0 0.0
    %227 = vmatprep.subr.mxu0 0.0
    %228 = vmatpush1.msra.mxu0 0.0
    %229 = vmatprep.subr.mxu0 0.0
    %230 = vmatpush1.msra.mxu0 0.0
    %231 = vmatprep.subr.mxu0 0.0
    %232 = vmatpush1.msra.mxu0 0.0
    %233 = vmatprep.subr.mxu0 0.0
    %234 = vmatpush1.msra.mxu0 0.0
    %235 = vmatprep.subr.mxu0 0.0
    %236 = vmatpush1.msra.mxu0 0.0
    %237 = vmatprep.subr.mxu0 0.0
    %238 = vmatpush1.msra.mxu0 0.0
    %239 = vmatprep.subr.mxu0 0.0
    %240 = vmatpush1.msra.mxu0 0.0
    %241 = vmatprep.subr.mxu0 0.0
    %242 = vmatpush1.msra.mxu0 0.0
    %243 = vmatprep.subr.mxu0 0.0
    %244 = vmatpush1.msra.mxu0 0.0
    %245 = vmatprep.subr.mxu0 0.0
    %246 = vmatpush1.msra.mxu0 0.0
    %247 = vmatprep.subr.mxu0 0.0
    %248 = vmatpush1.msra.mxu0 0.0
    %249 = vmatprep.subr.mxu0 0.0
    %250 = vmatpush1.msra.mxu0 0.0
    %251 = vmatprep.subr.mxu0 0.0
    %252 = vmatpush1.msra.mxu0 0.0
    %253 = vmatprep.subr.mxu0 0.0
    %254 = vmatpush1.msra.mxu0 0.0
    %255 = vmatprep.subr.mxu0 0.0
    %256 = vmatpush1.msra.mxu0 0.0
    %257 = vmatprep.subr.mxu0 0.0
    %258 = vmatpush1.msra.mxu0 0.0
    %259 = vmatprep.subr.mxu0 0.0
    %260 = vmatpush1.msra.mxu0 0.0
    %261 = vmatprep.subr.mxu0 0.0
    %262 = vmatpush1.msra.mxu0 0.0
    %263 = vmatprep.subr.mxu0 0.0
    %264 = vmatpush1.msra.mxu0 0.0
    %265 = vmatprep.subr.mxu0 0.0
    %266 = vmatpush1.msra.mxu0 0.0
    %267 = vmatprep.subr.mxu0 0.0
    %268 = vmatpush1.msra.mxu0 0.0
    %269 = vmatprep.subr.mxu0 0.0
    %270 = vmatpush1.msra.mxu0 0.0
    %271 = vmatprep.subr.mxu0 0.0
    %272 = vmatpush1.msra.mxu0 0.0
    %273 = vmatprep.subr.mxu0 0.0
    %274 = vmatpush1.msra.mxu0 0.0
    %275 = vmatprep.mubr.f32.mxu0 0.0
    %276 = vmatmul.mubr.f32.gmra.mrb[0].mxu0 %v202
    %v277 = vpop.f32.mrb[0].mxu0
    %v278 = vadd.f32 %v192, %v277
    %v279 = vpop.f32.mrb[0].mxu0
    %280 = vmatprep.mubr.f32.mxu0 0.0
    %281 = vmatmul.mubr.f32.gmra.mrb[0].mxu0 %v205
    %v282 = vpop.f32.mrb[0].mxu0
    %v283 = vadd.f32 %v197, %v282
    %v284 = vpop.f32.mrb[0].mxu0
    %285 = vdwg.mxu0
    %v286 = vld [vmem:[#allocation7] sm:$0x1]
    %vm287 = vcmask 7168
    %v289 = vsel %vm287, %v110, 0
    %v292 = vsel %vm287, %v111, 0
    %vm294 = vcmask 1040384
    %v296 = vsel %vm294, %v286, 0
    %298 = vmatprep.subr.mxu0 0.0
    %299 = vmatpush1.msra.mxu0 %v296
    %300 = vmatprep.subr.mxu0 0.0
    %301 = vmatpush1.msra.mxu0 0.0
    %302 = vmatprep.subr.mxu0 0.0
    %303 = vmatpush1.msra.mxu0 0.0
    %304 = vmatprep.subr.mxu0 0.0
    %305 = vmatpush1.msra.mxu0 0.0
    %306 = vmatprep.subr.mxu0 0.0
    %307 = vmatpush1.msra.mxu0 0.0
    %308 = vmatprep.subr.mxu0 0.0
    %309 = vmatpush1.msra.mxu0 0.0
    %310 = vmatprep.subr.mxu0 0.0
    %311 = vmatpush1.msra.mxu0 0.0
    %312 = vmatprep.subr.mxu0 0.0
    %313 = vmatpush1.msra.mxu0 0.0
    %314 = vmatprep.subr.mxu0 0.0
    %315 = vmatpush1.msra.mxu0 0.0
    %316 = vmatprep.subr.mxu0 0.0
    %317 = vmatpush1.msra.mxu0 0.0
    %318 = vmatprep.subr.mxu0 0.0
    %319 = vmatpush1.msra.mxu0 0.0
    %320 = vmatprep.subr.mxu0 0.0
    %321 = vmatpush1.msra.mxu0 0.0
    %322 = vmatprep.subr.mxu0 0.0
    %323 = vmatpush1.msra.mxu0 0.0
    %324 = vmatprep.subr.mxu0 0.0
    %325 = vmatpush1.msra.mxu0 0.0
    %326 = vmatprep.subr.mxu0 0.0
    %327 = vmatpush1.msra.mxu0 0.0
    %328 = vmatprep.subr.mxu0 0.0
    %329 = vmatpush1.msra.mxu0 0.0
    %330 = vmatprep.subr.mxu0 0.0
    %331 = vmatpush1.msra.mxu0 0.0
    %332 = vmatprep.subr.mxu0 0.0
    %333 = vmatpush1.msra.mxu0 0.0
    %334 = vmatprep.subr.mxu0 0.0
    %335 = vmatpush1.msra.mxu0 0.0
    %336 = vmatprep.subr.mxu0 0.0
    %337 = vmatpush1.msra.mxu0 0.0
    %338 = vmatprep.subr.mxu0 0.0
    %339 = vmatpush1.msra.mxu0 0.0
    %340 = vmatprep.subr.mxu0 0.0
    %341 = vmatpush1.msra.mxu0 0.0
    %342 = vmatprep.subr.mxu0 0.0
    %343 = vmatpush1.msra.mxu0 0.0
    %344 = vmatprep.subr.mxu0 0.0
    %345 = vmatpush1.msra.mxu0 0.0
    %346 = vmatprep.subr.mxu0 0.0
    %347 = vmatpush1.msra.mxu0 0.0
    %348 = vmatprep.subr.mxu0 0.0
    %349 = vmatpush1.msra.mxu0 0.0
    %350 = vmatprep.subr.mxu0 0.0
    %351 = vmatpush1.msra.mxu0 0.0
    %352 = vmatprep.subr.mxu0 0.0
    %353 = vmatpush1.msra.mxu0 0.0
    %354 = vmatprep.subr.mxu0 0.0
    %355 = vmatpush1.msra.mxu0 0.0
    %356 = vmatprep.subr.mxu0 0.0
    %357 = vmatpush1.msra.mxu0 0.0
    %358 = vmatprep.subr.mxu0 0.0
    %359 = vmatpush1.msra.mxu0 0.0
    %360 = vmatprep.subr.mxu0 0.0
    %361 = vmatpush1.msra.mxu0 0.0
    %362 = vmatprep.mubr.f32.mxu0 0.0
    %363 = vmatmul.mubr.f32.gmra.mrb[0].mxu0 %v289
    %v364 = vpop.f32.mrb[0].mxu0
    %v365 = vadd.f32 0.0, %v364
    %v366 = vpop.f32.mrb[0].mxu0
    %367 = vmatprep.mubr.f32.mxu0 0.0
    %368 = vmatmul.mubr.f32.gmra.mrb[0].mxu0 %v292
    %v369 = vpop.f32.mrb[0].mxu0
    %v370 = vadd.f32 0.0, %v369
    %v371 = vpop.f32.mrb[0].mxu0
    %372 = vdwg.mxu0
    %v373 = vadd.f32 %v278, %v365
    %v374 = vadd.f32 %v283, %v370
    %v375 = vld [vmem:[#allocation8] sm:$0x1]
    %v377 = vlaneseq
    %v378 = vshrl.u32 %v377, 7
    %v379 = vsub.s32 0, %v378
    %v380 = vrot.slane %v375, %v379
    %v382 = vadd.f32 %v373, %v380
    %v383 = vadd.f32 %v374, %v380
    %vm384 = vcmask 261120
    %385 = vst.msk [vmem:[#allocation2] sm:$0xff] %vm384, %v382
    %386 = vst.msk [vmem:[#allocation2 + $0x8] sm:$0xff] %vm384, %v383
    %v387 = vld [vmem:[%s7] sm:$0xff]
    %v388 = vld [vmem:[%s7 + $0x8] sm:$0xff]
    %v389 = vld [vmem:[%s7 + $0x10] sm:$0xff]
    %v390 = vld [vmem:[%s7 + $0x18] sm:$0xff]
    %v391 = vld [vmem:[%s8] sm:$0xff]
    %v392 = vld [vmem:[%s8 + $0x8] sm:$0xff]
    %v393 = vld [vmem:[%s8 + $0x10] sm:$0xff]
    %v394 = vld [vmem:[%s8 + $0x18] sm:$0xff]
    %v395 = vld [vmem:[%s9] sm:$0x1]
    %v396 = vld [vmem:[#allocation10] sm:$0x1]
    %v397 = vld [vmem:[#allocation2] sm:$0xff]
    %v398 = vld [vmem:[#allocation2 + $0x8] sm:$0xff]
    %v400 = vlaneseq
    %v401 = vshrl.u32 %v400, 7
    %v402 = vsub.s32 0, %v401
    %v403 = vrot.slane %v395, %v402
    %v406 = vsel %vm384, %v397, 0
    %v409 = vsel %vm384, %v398, 0
    %411 = vmatprep.subr.mxu0 0.0
    %412 = vmatpush1.msra.mxu0 %v387
    %413 = vmatprep.subr.mxu0 0.0
    %414 = vmatpush1.msra.mxu0 %v388
    %415 = vmatprep.subr.mxu0 0.0
    %416 = vmatpush1.msra.mxu0 %v389
    %417 = vmatprep.subr.mxu0 0.0
    %418 = vmatpush1.msra.mxu0 %v390
    %419 = vmatprep.subr.mxu0 0.0
    %420 = vmatpush1.msra.mxu0 0.0
    %421 = vmatprep.subr.mxu0 0.0
    %422 = vmatpush1.msra.mxu0 0.0
    %423 = vmatprep.subr.mxu0 0.0
    %424 = vmatpush1.msra.mxu0 0.0
    %425 = vmatprep.subr.mxu0 0.0
    %426 = vmatpush1.msra.mxu0 0.0
    %427 = vmatprep.subr.mxu0 0.0
    %428 = vmatpush1.msra.mxu0 0.0
    %429 = vmatprep.subr.mxu0 0.0
    %430 = vmatpush1.msra.mxu0 0.0
    %431 = vmatprep.subr.mxu0 0.0
    %432 = vmatpush1.msra.mxu0 0.0
    %433 = vmatprep.subr.mxu0 0.0
    %434 = vmatpush1.msra.mxu0 0.0
    %435 = vmatprep.subr.mxu0 0.0
    %436 = vmatpush1.msra.mxu0 0.0
    %437 = vmatprep.subr.mxu0 0.0
    %438 = vmatpush1.msra.mxu0 0.0
    %439 = vmatprep.subr.mxu0 0.0
    %440 = vmatpush1.msra.mxu0 0.0
    %441 = vmatprep.subr.mxu0 0.0
    %442 = vmatpush1.msra.mxu0 0.0
    %443 = vmatprep.subr.mxu0 0.0
    %444 = vmatpush1.msra.mxu0 0.0
    %445 = vmatprep.subr.mxu0 0.0
    %446 = vmatpush1.msra.mxu0 0.0
    %447 = vmatprep.subr.mxu0 0.0
    %448 = vmatpush1.msra.mxu0 0.0
    %449 = vmatprep.subr.mxu0 0.0
    %450 = vmatpush1.msra.mxu0 0.0
    %451 = vmatprep.subr.mxu0 0.0
    %452 = vmatpush1.msra.mxu0 0.0
    %453 = vmatprep.subr.mxu0 0.0
    %454 = vmatpush1.msra.mxu0 0.0
    %455 = vmatprep.subr.mxu0 0.0
    %456 = vmatpush1.msra.mxu0 0.0
    %457 = vmatprep.subr.mxu0 0.0
    %458 = vmatpush1.msra.mxu0 0.0
    %459 = vmatprep.subr.mxu0 0.0
    %460 = vmatpush1.msra.mxu0 0.0
    %461 = vmatprep.subr.mxu0 0.0
    %462 = vmatpush1.msra.mxu0 0.0
    %463 = vmatprep.subr.mxu0 0.0
    %464 = vmatpush1.msra.mxu0 0.0
    %465 = vmatprep.subr.mxu0 0.0
    %466 = vmatpush1.msra.mxu0 0.0
    %467 = vmatprep.subr.mxu0 0.0
    %468 = vmatpush1.msra.mxu0 0.0
    %469 = vmatprep.subr.mxu0 0.0
    %470 = vmatpush1.msra.mxu0 0.0
    %471 = vmatprep.subr.mxu0 0.0
    %472 = vmatpush1.msra.mxu0 0.0
    %473 = vmatprep.subr.mxu0 0.0
    %474 = vmatpush1.msra.mxu0 0.0
    %475 = vmatprep.mubr.f32.mxu0 0.0
    %476 = vmatmul.mubr.f32.gmra.mrb[0].mxu0 %v406
    %v477 = vpop.f32.mrb[0].mxu0
    %v478 = vadd.f32 %v403, %v477
    %v479 = vpop.f32.mrb[0].mxu0
    %480 = vmatprep.mubr.f32.mxu0 0.0
    %481 = vmatmul.mubr.f32.gmra.mrb[0].mxu0 %v409
    %v482 = vpop.f32.mrb[0].mxu0
    %v483 = vadd.f32 %v403, %v482
    %v484 = vpop.f32.mrb[0].mxu0
    %485 = vdwg.mxu0
    %v487 = vlaneseq
    %v488 = vshrl.u32 %v487, 7
    %v489 = vsub.s32 0, %v488
    %v490 = vrot.slane %v396, %v489
    %v493 = vsel %vm384, 0.0, 0
    %495 = vmatprep.subr.mxu0 0.0
    %496 = vmatpush1.msra.mxu0 %v391
    %497 = vmatprep.subr.mxu0 0.0
    %498 = vmatpush1.msra.mxu0 %v392
    %499 = vmatprep.subr.mxu0 0.0
    %500 = vmatpush1.msra.mxu0 %v393
    %501 = vmatprep.subr.mxu0 0.0
    %502 = vmatpush1.msra.mxu0 %v394
    %503 = vmatprep.subr.mxu0 0.0
    %504 = vmatpush1.msra.mxu0 0.0
    %505 = vmatprep.subr.mxu0 0.0
    %506 = vmatpush1.msra.mxu0 0.0
    %507 = vmatprep.subr.mxu0 0.0
    %508 = vmatpush1.msra.mxu0 0.0
    %509 = vmatprep.subr.mxu0 0.0
    %510 = vmatpush1.msra.mxu0 0.0
    %511 = vmatprep.subr.mxu0 0.0
    %512 = vmatpush1.msra.mxu0 0.0
    %513 = vmatprep.subr.mxu0 0.0
    %514 = vmatpush1.msra.mxu0 0.0
    %515 = vmatprep.subr.mxu0 0.0
    %516 = vmatpush1.msra.mxu0 0.0
    %517 = vmatprep.subr.mxu0 0.0
    %518 = vmatpush1.msra.mxu0 0.0
    %519 = vmatprep.subr.mxu0 0.0
    %520 = vmatpush1.msra.mxu0 0.0
    %521 = vmatprep.subr.mxu0 0.0
    %522 = vmatpush1.msra.mxu0 0.0
    %523 = vmatprep.subr.mxu0 0.0
    %524 = vmatpush1.msra.mxu0 0.0
    %525 = vmatprep.subr.mxu0 0.0
    %526 = vmatpush1.msra.mxu0 0.0
    %527 = vmatprep.subr.mxu0 0.0
    %528 = vmatpush1.msra.mxu0 0.0
    %529 = vmatprep.subr.mxu0 0.0
    %530 = vmatpush1.msra.mxu0 0.0
    %531 = vmatprep.subr.mxu0 0.0
    %532 = vmatpush1.msra.mxu0 0.0
    %533 = vmatprep.subr.mxu0 0.0
    %534 = vmatpush1.msra.mxu0 0.0
    %535 = vmatprep.subr.mxu0 0.0
    %536 = vmatpush1.msra.mxu0 0.0
    %537 = vmatprep.subr.mxu0 0.0
    %538 = vmatpush1.msra.mxu0 0.0
    %539 = vmatprep.subr.mxu0 0.0
    %540 = vmatpush1.msra.mxu0 0.0
    %541 = vmatprep.subr.mxu0 0.0
    %542 = vmatpush1.msra.mxu0 0.0
    %543 = vmatprep.subr.mxu0 0.0
    %544 = vmatpush1.msra.mxu0 0.0
    %545 = vmatprep.subr.mxu0 0.0
    %546 = vmatpush1.msra.mxu0 0.0
    %547 = vmatprep.subr.mxu0 0.0
    %548 = vmatpush1.msra.mxu0 0.0
    %549 = vmatprep.subr.mxu0 0.0
    %550 = vmatpush1.msra.mxu0 0.0
    %551 = vmatprep.subr.mxu0 0.0
    %552 = vmatpush1.msra.mxu0 0.0
    %553 = vmatprep.subr.mxu0 0.0
    %554 = vmatpush1.msra.mxu0 0.0
    %555 = vmatprep.subr.mxu0 0.0
    %556 = vmatpush1.msra.mxu0 0.0
    %557 = vmatprep.subr.mxu0 0.0
    %558 = vmatpush1.msra.mxu0 0.0
    %559 = vmatprep.mubr.f32.mxu0 0.0
    %560 = vmatmul.mubr.f32.gmra.mrb[0].mxu0 %v493
    %v561 = vpop.f32.mrb[0].mxu0
    %v562 = vadd.f32 %v490, %v561
    %v563 = vpop.f32.mrb[0].mxu0
    %564 = vdwg.mxu0
    %v566 = vrot.slane %v562, 2
    %v568 = vadd.f32 %v483, %v566
    %v569 = vxor.u32 %v568, 2147483648
    %v570 = vmul.f32 %v569, 1.442695
    %v571 = vpow.pop %v570
    %v572 = vadd.f32 %v571, 1.0
    %v573 = vrcp.pop %v572
    %v574 = vmul.f32 1.0, %v573
    %575 = vrot.lane.b32.xlu0 %v566, 64
    %v576 = vpop.permute.xlu0 %575
    %v578 = vmul.f32 %v574, %v576
    %580 = vrot.lane.b32.xlu0 %v578, 64
    %v581 = vpop.permute.xlu0 %580
    %v583 = vadd.f32 %v483, %v581
    %v584 = vtanh.pop %v583
    %v585 = vsub.f32 1.0, %v574
    %587 = vrot.lane.b32.xlu0 %v584, 96
    %v588 = vpop.permute.xlu0 %587
    %v590 = vmul.f32 %v585, %v588
    %v591 = vmul.f32 %v574, 0.0
    %v592 = vadd.f32 %v590, %v591
    %594 = vrot.lane.b32.xlu0 %v592, 96
    %v595 = vpop.permute.xlu0 %594
    %vm597 = vcmask 261126
    %598 = vst.msk [vmem:[#allocation2 + $0x8] sm:$0xc0] %vm597, %v595
    %v599 = vrot.slane %v592, 6
    %600 = vrot.lane.b32.xlu0 %v599, 96
    %v601 = vpop.permute.xlu0 %600
    %v602 = vsel %vm384, %v601, 0
    %604 = vmatprep.subr.mxu0 0.0
    %605 = vmatpush1.msra.mxu0 %v391
    %606 = vmatprep.subr.mxu0 0.0
    %607 = vmatpush1.msra.mxu0 %v392
    %608 = vmatprep.subr.mxu0 0.0
    %609 = vmatpush1.msra.mxu0 %v393
    %610 = vmatprep.subr.mxu0 0.0
    %611 = vmatpush1.msra.mxu0 %v394
    %612 = vmatprep.subr.mxu0 0.0
    %613 = vmatpush1.msra.mxu0 0.0
    %614 = vmatprep.subr.mxu0 0.0
    %615 = vmatpush1.msra.mxu0 0.0
    %616 = vmatprep.subr.mxu0 0.0
    %617 = vmatpush1.msra.mxu0 0.0
    %618 = vmatprep.subr.mxu0 0.0
    %619 = vmatpush1.msra.mxu0 0.0
    %620 = vmatprep.subr.mxu0 0.0
    %621 = vmatpush1.msra.mxu0 0.0
    %622 = vmatprep.subr.mxu0 0.0
    %623 = vmatpush1.msra.mxu0 0.0
    %624 = vmatprep.subr.mxu0 0.0
    %625 = vmatpush1.msra.mxu0 0.0
    %626 = vmatprep.subr.mxu0 0.0
    %627 = vmatpush1.msra.mxu0 0.0
    %628 = vmatprep.subr.mxu0 0.0
    %629 = vmatpush1.msra.mxu0 0.0
    %630 = vmatprep.subr.mxu0 0.0
    %631 = vmatpush1.msra.mxu0 0.0
    %632 = vmatprep.subr.mxu0 0.0
    %633 = vmatpush1.msra.mxu0 0.0
    %634 = vmatprep.subr.mxu0 0.0
    %635 = vmatpush1.msra.mxu0 0.0
    %636 = vmatprep.subr.mxu0 0.0
    %637 = vmatpush1.msra.mxu0 0.0
    %638 = vmatprep.subr.mxu0 0.0
    %639 = vmatpush1.msra.mxu0 0.0
    %640 = vmatprep.subr.mxu0 0.0
    %641 = vmatpush1.msra.mxu0 0.0
    %642 = vmatprep.subr.mxu0 0.0
    %643 = vmatpush1.msra.mxu0 0.0
    %644 = vmatprep.subr.mxu0 0.0
    %645 = vmatpush1.msra.mxu0 0.0
    %646 = vmatprep.subr.mxu0 0.0
    %647 = vmatpush1.msra.mxu0 0.0
    %648 = vmatprep.subr.mxu0 0.0
    %649 = vmatpush1.msra.mxu0 0.0
    %650 = vmatprep.subr.mxu0 0.0
    %651 = vmatpush1.msra.mxu0 0.0
    %652 = vmatprep.subr.mxu0 0.0
    %653 = vmatpush1.msra.mxu0 0.0
    %654 = vmatprep.subr.mxu0 0.0
    %655 = vmatpush1.msra.mxu0 0.0
    %656 = vmatprep.subr.mxu0 0.0
    %657 = vmatpush1.msra.mxu0 0.0
    %658 = vmatprep.subr.mxu0 0.0
    %659 = vmatpush1.msra.mxu0 0.0
    %660 = vmatprep.subr.mxu0 0.0
    %661 = vmatpush1.msra.mxu0 0.0
    %662 = vmatprep.subr.mxu0 0.0
    %663 = vmatpush1.msra.mxu0 0.0
    %664 = vmatprep.subr.mxu0 0.0
    %665 = vmatpush1.msra.mxu0 0.0
    %666 = vmatprep.subr.mxu0 0.0
    %667 = vmatpush1.msra.mxu0 0.0
    %668 = vmatprep.mubr.f32.mxu0 0.0
    %669 = vmatmul.mubr.f32.gmra.mrb[0].mxu0 %v602
    %v670 = vpop.f32.mrb[0].mxu0
    %v671 = vadd.f32 %v490, %v670
    %v672 = vpop.f32.mrb[0].mxu0
    %673 = vdwg.mxu0
    %v675 = vrot.slane %v671, 4
    %v677 = vadd.f32 %v483, %v675
    %v678 = vxor.u32 %v677, 2147483648
    %v679 = vmul.f32 %v678, 1.442695
    %v680 = vpow.pop %v679
    %v681 = vadd.f32 %v680, 1.0
    %v682 = vrcp.pop %v681
    %v683 = vmul.f32 1.0, %v682
    %684 = vrot.lane.b32.xlu0 %v675, 64
    %v685 = vpop.permute.xlu0 %684
    %v687 = vmul.f32 %v683, %v685
    %689 = vrot.lane.b32.xlu0 %v687, 64
    %v690 = vpop.permute.xlu0 %689
    %v692 = vadd.f32 %v483, %v690
    %v693 = vtanh.pop %v692
    %v694 = vsub.f32 1.0, %v683
    %696 = vrot.lane.b32.xlu0 %v693, 96
    %v697 = vpop.permute.xlu0 %696
    %v699 = vmul.f32 %v694, %v697
    %v700 = vrot.slane %v592, 2
    %v702 = vmul.f32 %v683, %v700
    %v703 = vadd.f32 %v699, %v702
    %705 = vrot.lane.b32.xlu0 %v703, 96
    %v706 = vpop.permute.xlu0 %705
    %vm708 = vcmask 259076
    %709 = vst.msk [vmem:[#allocation2 + $0x8] sm:$0x30] %vm708, %v706
    %v710 = vrot.slane %v703, 4
    %711 = vrot.lane.b32.xlu0 %v710, 96
    %v712 = vpop.permute.xlu0 %711
    %v713 = vsel %vm384, %v712, 0
    %715 = vmatprep.subr.mxu0 0.0
    %716 = vmatpush1.msra.mxu0 %v391
    %717 = vmatprep.subr.mxu0 0.0
    %718 = vmatpush1.msra.mxu0 %v392
    %719 = vmatprep.subr.mxu0 0.0
    %720 = vmatpush1.msra.mxu0 %v393
    %721 = vmatprep.subr.mxu0 0.0
    %722 = vmatpush1.msra.mxu0 %v394
    %723 = vmatprep.subr.mxu0 0.0
    %724 = vmatpush1.msra.mxu0 0.0
    %725 = vmatprep.subr.mxu0 0.0
    %726 = vmatpush1.msra.mxu0 0.0
    %727 = vmatprep.subr.mxu0 0.0
    %728 = vmatpush1.msra.mxu0 0.0
    %729 = vmatprep.subr.mxu0 0.0
    %730 = vmatpush1.msra.mxu0 0.0
    %731 = vmatprep.subr.mxu0 0.0
    %732 = vmatpush1.msra.mxu0 0.0
    %733 = vmatprep.subr.mxu0 0.0
    %734 = vmatpush1.msra.mxu0 0.0
    %735 = vmatprep.subr.mxu0 0.0
    %736 = vmatpush1.msra.mxu0 0.0
    %737 = vmatprep.subr.mxu0 0.0
    %738 = vmatpush1.msra.mxu0 0.0
    %739 = vmatprep.subr.mxu0 0.0
    %740 = vmatpush1.msra.mxu0 0.0
    %741 = vmatprep.subr.mxu0 0.0
    %742 = vmatpush1.msra.mxu0 0.0
    %743 = vmatprep.subr.mxu0 0.0
    %744 = vmatpush1.msra.mxu0 0.0
    %745 = vmatprep.subr.mxu0 0.0
    %746 = vmatpush1.msra.mxu0 0.0
    %747 = vmatprep.subr.mxu0 0.0
    %748 = vmatpush1.msra.mxu0 0.0
    %749 = vmatprep.subr.mxu0 0.0
    %750 = vmatpush1.msra.mxu0 0.0
    %751 = vmatprep.subr.mxu0 0.0
    %752 = vmatpush1.msra.mxu0 0.0
    %753 = vmatprep.subr.mxu0 0.0
    %754 = vmatpush1.msra.mxu0 0.0
    %755 = vmatprep.subr.mxu0 0.0
    %756 = vmatpush1.msra.mxu0 0.0
    %757 = vmatprep.subr.mxu0 0.0
    %758 = vmatpush1.msra.mxu0 0.0
    %759 = vmatprep.subr.mxu0 0.0
    %760 = vmatpush1.msra.mxu0 0.0
    %761 = vmatprep.subr.mxu0 0.0
    %762 = vmatpush1.msra.mxu0 0.0
    %763 = vmatprep.subr.mxu0 0.0
    %764 = vmatpush1.msra.mxu0 0.0
    %765 = vmatprep.subr.mxu0 0.0
    %766 = vmatpush1.msra.mxu0 0.0
    %767 = vmatprep.subr.mxu0 0.0
    %768 = vmatpush1.msra.mxu0 0.0
    %769 = vmatprep.subr.mxu0 0.0
    %770 = vmatpush1.msra.mxu0 0.0
    %771 = vmatprep.subr.mxu0 0.0
    %772 = vmatpush1.msra.mxu0 0.0
    %773 = vmatprep.subr.mxu0 0.0
    %774 = vmatpush1.msra.mxu0 0.0
    %775 = vmatprep.subr.mxu0 0.0
    %776 = vmatpush1.msra.mxu0 0.0
    %777 = vmatprep.subr.mxu0 0.0
    %778 = vmatpush1.msra.mxu0 0.0
    %779 = vmatprep.mubr.f32.mxu0 0.0
    %780 = vmatmul.mubr.f32.gmra.mrb[0].mxu0 %v713
    %v781 = vpop.f32.mrb[0].mxu0
    %v782 = vadd.f32 %v490, %v781
    %v783 = vpop.f32.mrb[0].mxu0
    %784 = vdwg.mxu0
    %v786 = vrot.slane %v782, 6
    %v788 = vadd.f32 %v483, %v786
    %v789 = vxor.u32 %v788, 2147483648
    %v790 = vmul.f32 %v789, 1.442695
    %v791 = vpow.pop %v790
    %v792 = vadd.f32 %v791, 1.0
    %v793 = vrcp.pop %v792
    %v794 = vmul.f32 1.0, %v793
    %795 = vrot.lane.b32.xlu0 %v786, 64
    %v796 = vpop.permute.xlu0 %795
    %v798 = vmul.f32 %v794, %v796
    %800 = vrot.lane.b32.xlu0 %v798, 64
    %v801 = vpop.permute.xlu0 %800
    %v803 = vadd.f32 %v483, %v801
    %v804 = vtanh.pop %v803
    %v805 = vsub.f32 1.0, %v794
    %807 = vrot.lane.b32.xlu0 %v804, 96
    %v808 = vpop.permute.xlu0 %807
    %v810 = vmul.f32 %v805, %v808
    %v811 = vrot.slane %v703, 2
    %v813 = vmul.f32 %v794, %v811
    %v814 = vadd.f32 %v810, %v813
    %816 = vrot.lane.b32.xlu0 %v814, 96
    %v817 = vpop.permute.xlu0 %816
    %vm819 = vcmask 257026
    %820 = vst.msk [vmem:[#allocation2 + $0x8] sm:$0xc] %vm819, %v817
    %v821 = vrot.slane %v814, 2
    %822 = vrot.lane.b32.xlu0 %v821, 96
    %v823 = vpop.permute.xlu0 %822
    %v824 = vsel %vm384, %v823, 0
    %826 = vmatprep.subr.mxu0 0.0
    %827 = vmatpush1.msra.mxu0 %v391
    %828 = vmatprep.subr.mxu0 0.0
    %829 = vmatpush1.msra.mxu0 %v392
    %830 = vmatprep.subr.mxu0 0.0
    %831 = vmatpush1.msra.mxu0 %v393
    %832 = vmatprep.subr.mxu0 0.0
    %833 = vmatpush1.msra.mxu0 %v394
    %834 = vmatprep.subr.mxu0 0.0
    %835 = vmatpush1.msra.mxu0 0.0
    %836 = vmatprep.subr.mxu0 0.0
    %837 = vmatpush1.msra.mxu0 0.0
    %838 = vmatprep.subr.mxu0 0.0
    %839 = vmatpush1.msra.mxu0 0.0
    %840 = vmatprep.subr.mxu0 0.0
    %841 = vmatpush1.msra.mxu0 0.0
    %842 = vmatprep.subr.mxu0 0.0
    %843 = vmatpush1.msra.mxu0 0.0
    %844 = vmatprep.subr.mxu0 0.0
    %845 = vmatpush1.msra.mxu0 0.0
    %846 = vmatprep.subr.mxu0 0.0
    %847 = vmatpush1.msra.mxu0 0.0
    %848 = vmatprep.subr.mxu0 0.0
    %849 = vmatpush1.msra.mxu0 0.0
    %850 = vmatprep.subr.mxu0 0.0
    %851 = vmatpush1.msra.mxu0 0.0
    %852 = vmatprep.subr.mxu0 0.0
    %853 = vmatpush1.msra.mxu0 0.0
    %854 = vmatprep.subr.mxu0 0.0
    %855 = vmatpush1.msra.mxu0 0.0
    %856 = vmatprep.subr.mxu0 0.0
    %857 = vmatpush1.msra.mxu0 0.0
    %858 = vmatprep.subr.mxu0 0.0
    %859 = vmatpush1.msra.mxu0 0.0
    %860 = vmatprep.subr.mxu0 0.0
    %861 = vmatpush1.msra.mxu0 0.0
    %862 = vmatprep.subr.mxu0 0.0
    %863 = vmatpush1.msra.mxu0 0.0
    %864 = vmatprep.subr.mxu0 0.0
    %865 = vmatpush1.msra.mxu0 0.0
    %866 = vmatprep.subr.mxu0 0.0
    %867 = vmatpush1.msra.mxu0 0.0
    %868 = vmatprep.subr.mxu0 0.0
    %869 = vmatpush1.msra.mxu0 0.0
    %870 = vmatprep.subr.mxu0 0.0
    %871 = vmatpush1.msra.mxu0 0.0
    %872 = vmatprep.subr.mxu0 0.0
    %873 = vmatpush1.msra.mxu0 0.0
    %874 = vmatprep.subr.mxu0 0.0
    %875 = vmatpush1.msra.mxu0 0.0
    %876 = vmatprep.subr.mxu0 0.0
    %877 = vmatpush1.msra.mxu0 0.0
    %878 = vmatprep.subr.mxu0 0.0
    %879 = vmatpush1.msra.mxu0 0.0
    %880 = vmatprep.subr.mxu0 0.0
    %881 = vmatpush1.msra.mxu0 0.0
    %882 = vmatprep.subr.mxu0 0.0
    %883 = vmatpush1.msra.mxu0 0.0
    %884 = vmatprep.subr.mxu0 0.0
    %885 = vmatpush1.msra.mxu0 0.0
    %886 = vmatprep.subr.mxu0 0.0
    %887 = vmatpush1.msra.mxu0 0.0
    %888 = vmatprep.subr.mxu0 0.0
    %889 = vmatpush1.msra.mxu0 0.0
    %890 = vmatprep.mubr.f32.mxu0 0.0
    %891 = vmatmul.mubr.f32.gmra.mrb[0].mxu0 %v824
    %v892 = vpop.f32.mrb[0].mxu0
    %v893 = vadd.f32 %v490, %v892
    %v894 = vpop.f32.mrb[0].mxu0
    %895 = vdwg.mxu0
    %v896 = vadd.f32 %v483, %v893
    %v897 = vxor.u32 %v896, 2147483648
    %v898 = vmul.f32 %v897, 1.442695
    %v899 = vpow.pop %v898
    %v900 = vadd.f32 %v899, 1.0
    %v901 = vrcp.pop %v900
    %v902 = vmul.f32 1.0, %v901
    %904 = vrot.lane.b32.xlu0 %v893, 64
    %v905 = vpop.permute.xlu0 %904
    %v907 = vmul.f32 %v902, %v905
    %909 = vrot.lane.b32.xlu0 %v907, 64
    %v910 = vpop.permute.xlu0 %909
    %v912 = vadd.f32 %v483, %v910
    %v913 = vtanh.pop %v912
    %v914 = vsub.f32 1.0, %v902
    %916 = vrot.lane.b32.xlu0 %v913, 96
    %v917 = vpop.permute.xlu0 %916
    %v919 = vmul.f32 %v914, %v917
    %v921 = vmul.f32 %v902, %v821
    %v922 = vadd.f32 %v919, %v921
    %924 = vrot.lane.b32.xlu0 %v922, 96
    %v925 = vpop.permute.xlu0 %924
    %vm927 = vcmask 254976
    %928 = vst.msk [vmem:[#allocation2 + $0x8] sm:$0x3] %vm927, %v925
    %v929 = vsel %vm384, %v925, 0
    %931 = vmatprep.subr.mxu0 0.0
    %932 = vmatpush1.msra.mxu0 %v391
    %933 = vmatprep.subr.mxu0 0.0
    %934 = vmatpush1.msra.mxu0 %v392
    %935 = vmatprep.subr.mxu0 0.0
    %936 = vmatpush1.msra.mxu0 %v393
    %937 = vmatprep.subr.mxu0 0.0
    %938 = vmatpush1.msra.mxu0 %v394
    %939 = vmatprep.subr.mxu0 0.0
    %940 = vmatpush1.msra.mxu0 0.0
    %941 = vmatprep.subr.mxu0 0.0
    %942 = vmatpush1.msra.mxu0 0.0
    %943 = vmatprep.subr.mxu0 0.0
    %944 = vmatpush1.msra.mxu0 0.0
    %945 = vmatprep.subr.mxu0 0.0
    %946 = vmatpush1.msra.mxu0 0.0
    %947 = vmatprep.subr.mxu0 0.0
    %948 = vmatpush1.msra.mxu0 0.0
    %949 = vmatprep.subr.mxu0 0.0
    %950 = vmatpush1.msra.mxu0 0.0
    %951 = vmatprep.subr.mxu0 0.0
    %952 = vmatpush1.msra.mxu0 0.0
    %953 = vmatprep.subr.mxu0 0.0
    %954 = vmatpush1.msra.mxu0 0.0
    %955 = vmatprep.subr.mxu0 0.0
    %956 = vmatpush1.msra.mxu0 0.0
    %957 = vmatprep.subr.mxu0 0.0
    %958 = vmatpush1.msra.mxu0 0.0
    %959 = vmatprep.subr.mxu0 0.0
    %960 = vmatpush1.msra.mxu0 0.0
    %961 = vmatprep.subr.mxu0 0.0
    %962 = vmatpush1.msra.mxu0 0.0
    %963 = vmatprep.subr.mxu0 0.0
    %964 = vmatpush1.msra.mxu0 0.0
    %965 = vmatprep.subr.mxu0 0.0
    %966 = vmatpush1.msra.mxu0 0.0
    %967 = vmatprep.subr.mxu0 0.0
    %968 = vmatpush1.msra.mxu0 0.0
    %969 = vmatprep.subr.mxu0 0.0
    %970 = vmatpush1.msra.mxu0 0.0
    %971 = vmatprep.subr.mxu0 0.0
    %972 = vmatpush1.msra.mxu0 0.0
    %973 = vmatprep.subr.mxu0 0.0
    %974 = vmatpush1.msra.mxu0 0.0
    %975 = vmatprep.subr.mxu0 0.0
    %976 = vmatpush1.msra.mxu0 0.0
    %977 = vmatprep.subr.mxu0 0.0
    %978 = vmatpush1.msra.mxu0 0.0
    %979 = vmatprep.subr.mxu0 0.0
    %980 = vmatpush1.msra.mxu0 0.0
    %981 = vmatprep.subr.mxu0 0.0
    %982 = vmatpush1.msra.mxu0 0.0
    %983 = vmatprep.subr.mxu0 0.0
    %984 = vmatpush1.msra.mxu0 0.0
    %985 = vmatprep.subr.mxu0 0.0
    %986 = vmatpush1.msra.mxu0 0.0
    %987 = vmatprep.subr.mxu0 0.0
    %988 = vmatpush1.msra.mxu0 0.0
    %989 = vmatprep.subr.mxu0 0.0
    %990 = vmatpush1.msra.mxu0 0.0
    %991 = vmatprep.subr.mxu0 0.0
    %992 = vmatpush1.msra.mxu0 0.0
    %993 = vmatprep.subr.mxu0 0.0
    %994 = vmatpush1.msra.mxu0 0.0
    %995 = vmatprep.mubr.f32.mxu0 0.0
    %996 = vmatmul.mubr.f32.gmra.mrb[0].mxu0 %v929
    %v997 = vpop.f32.mrb[0].mxu0
    %v998 = vadd.f32 %v490, %v997
    %v999 = vpop.f32.mrb[0].mxu0
    %1000 = vdwg.mxu0
    %v1002 = vrot.slane %v998, 2
    %v1004 = vadd.f32 %v478, %v1002
    %v1005 = vxor.u32 %v1004, 2147483648
    %v1006 = vmul.f32 %v1005, 1.442695
    %v1007 = vpow.pop %v1006
    %v1008 = vadd.f32 %v1007, 1.0
    %v1009 = vrcp.pop %v1008
    %v1010 = vmul.f32 1.0, %v1009
    %1011 = vrot.lane.b32.xlu0 %v1002, 64
    %v1012 = vpop.permute.xlu0 %1011
    %v1014 = vmul.f32 %v1010, %v1012
    %1016 = vrot.lane.b32.xlu0 %v1014, 64
    %v1017 = vpop.permute.xlu0 %1016
    %v1019 = vadd.f32 %v478, %v1017
    %v1020 = vtanh.pop %v1019
    %v1021 = vsub.f32 1.0, %v1010
    %1023 = vrot.lane.b32.xlu0 %v1020, 96
    %v1024 = vpop.permute.xlu0 %1023
    %v1026 = vmul.f32 %v1021, %v1024
    %v1027 = vrot.slane %v922, 2
    %v1029 = vmul.f32 %v1010, %v1027
    %v1030 = vadd.f32 %v1026, %v1029
    %1032 = vrot.lane.b32.xlu0 %v1030, 96
    %v1033 = vpop.permute.xlu0 %1032
    %1035 = vst.msk [vmem:[#allocation2] sm:$0xc0] %vm597, %v1033
    %v1036 = vrot.slane %v1030, 6
    %1037 = vrot.lane.b32.xlu0 %v1036, 96
    %v1038 = vpop.permute.xlu0 %1037
    %v1039 = vsel %vm384, %v1038, 0
    %1041 = vmatprep.subr.mxu0 0.0
    %1042 = vmatpush1.msra.mxu0 %v391
    %1043 = vmatprep.subr.mxu0 0.0
    %1044 = vmatpush1.msra.mxu0 %v392
    %1045 = vmatprep.subr.mxu0 0.0
    %1046 = vmatpush1.msra.mxu0 %v393
    %1047 = vmatprep.subr.mxu0 0.0
    %1048 = vmatpush1.msra.mxu0 %v394
    %1049 = vmatprep.subr.mxu0 0.0
    %1050 = vmatpush1.msra.mxu0 0.0
    %1051 = vmatprep.subr.mxu0 0.0
    %1052 = vmatpush1.msra.mxu0 0.0
    %1053 = vmatprep.subr.mxu0 0.0
    %1054 = vmatpush1.msra.mxu0 0.0
    %1055 = vmatprep.subr.mxu0 0.0
    %1056 = vmatpush1.msra.mxu0 0.0
    %1057 = vmatprep.subr.mxu0 0.0
    %1058 = vmatpush1.msra.mxu0 0.0
    %1059 = vmatprep.subr.mxu0 0.0
    %1060 = vmatpush1.msra.mxu0 0.0
    %1061 = vmatprep.subr.mxu0 0.0
    %1062 = vmatpush1.msra.mxu0 0.0
    %1063 = vmatprep.subr.mxu0 0.0
    %1064 = vmatpush1.msra.mxu0 0.0
    %1065 = vmatprep.subr.mxu0 0.0
    %1066 = vmatpush1.msra.mxu0 0.0
    %1067 = vmatprep.subr.mxu0 0.0
    %1068 = vmatpush1.msra.mxu0 0.0
    %1069 = vmatprep.subr.mxu0 0.0
    %1070 = vmatpush1.msra.mxu0 0.0
    %1071 = vmatprep.subr.mxu0 0.0
    %1072 = vmatpush1.msra.mxu0 0.0
    %1073 = vmatprep.subr.mxu0 0.0
    %1074 = vmatpush1.msra.mxu0 0.0
    %1075 = vmatprep.subr.mxu0 0.0
    %1076 = vmatpush1.msra.mxu0 0.0
    %1077 = vmatprep.subr.mxu0 0.0
    %1078 = vmatpush1.msra.mxu0 0.0
    %1079 = vmatprep.subr.mxu0 0.0
    %1080 = vmatpush1.msra.mxu0 0.0
    %1081 = vmatprep.subr.mxu0 0.0
    %1082 = vmatpush1.msra.mxu0 0.0
    %1083 = vmatprep.subr.mxu0 0.0
    %1084 = vmatpush1.msra.mxu0 0.0
    %1085 = vmatprep.subr.mxu0 0.0
    %1086 = vmatpush1.msra.mxu0 0.0
    %1087 = vmatprep.subr.mxu0 0.0
    %1088 = vmatpush1.msra.mxu0 0.0
    %1089 = vmatprep.subr.mxu0 0.0
    %1090 = vmatpush1.msra.mxu0 0.0
    %1091 = vmatprep.subr.mxu0 0.0
    %1092 = vmatpush1.msra.mxu0 0.0
    %1093 = vmatprep.subr.mxu0 0.0
    %1094 = vmatpush1.msra.mxu0 0.0
    %1095 = vmatprep.subr.mxu0 0.0
    %1096 = vmatpush1.msra.mxu0 0.0
    %1097 = vmatprep.subr.mxu0 0.0
    %1098 = vmatpush1.msra.mxu0 0.0
    %1099 = vmatprep.subr.mxu0 0.0
    %1100 = vmatpush1.msra.mxu0 0.0
    %1101 = vmatprep.subr.mxu0 0.0
    %1102 = vmatpush1.msra.mxu0 0.0
    %1103 = vmatprep.subr.mxu0 0.0
    %1104 = vmatpush1.msra.mxu0 0.0
    %1105 = vmatprep.mubr.f32.mxu0 0.0
    %1106 = vmatmul.mubr.f32.gmra.mrb[0].mxu0 %v1039
    %v1107 = vpop.f32.mrb[0].mxu0
    %v1108 = vadd.f32 %v490, %v1107
    %v1109 = vpop.f32.mrb[0].mxu0
    %1110 = vdwg.mxu0
    %v1112 = vrot.slane %v1108, 4
    %v1114 = vadd.f32 %v478, %v1112
    %v1115 = vxor.u32 %v1114, 2147483648
    %v1116 = vmul.f32 %v1115, 1.442695
    %v1117 = vpow.pop %v1116
    %v1118 = vadd.f32 %v1117, 1.0
    %v1119 = vrcp.pop %v1118
    %v1120 = vmul.f32 1.0, %v1119
    %1121 = vrot.lane.b32.xlu0 %v1112, 64
    %v1122 = vpop.permute.xlu0 %1121
    %v1124 = vmul.f32 %v1120, %v1122
    %1126 = vrot.lane.b32.xlu0 %v1124, 64
    %v1127 = vpop.permute.xlu0 %1126
    %v1129 = vadd.f32 %v478, %v1127
    %v1130 = vtanh.pop %v1129
    %v1131 = vsub.f32 1.0, %v1120
    %1133 = vrot.lane.b32.xlu0 %v1130, 96
    %v1134 = vpop.permute.xlu0 %1133
    %v1136 = vmul.f32 %v1131, %v1134
    %v1137 = vrot.slane %v1030, 2
    %v1139 = vmul.f32 %v1120, %v1137
    %v1140 = vadd.f32 %v1136, %v1139
    %1142 = vrot.lane.b32.xlu0 %v1140, 96
    %v1143 = vpop.permute.xlu0 %1142
    %1145 = vst.msk [vmem:[#allocation2] sm:$0x30] %vm708, %v1143
    %v1146 = vrot.slane %v1140, 4
    %1147 = vrot.lane.b32.xlu0 %v1146, 96
    %v1148 = vpop.permute.xlu0 %1147
    %v1149 = vsel %vm384, %v1148, 0
    %1151 = vmatprep.subr.mxu0 0.0
    %1152 = vmatpush1.msra.mxu0 %v391
    %1153 = vmatprep.subr.mxu0 0.0
    %1154 = vmatpush1.msra.mxu0 %v392
    %1155 = vmatprep.subr.mxu0 0.0
    %1156 = vmatpush1.msra.mxu0 %v393
    %1157 = vmatprep.subr.mxu0 0.0
    %1158 = vmatpush1.msra.mxu0 %v394
    %1159 = vmatprep.subr.mxu0 0.0
    %1160 = vmatpush1.msra.mxu0 0.0
    %1161 = vmatprep.subr.mxu0 0.0
    %1162 = vmatpush1.msra.mxu0 0.0
    %1163 = vmatprep.subr.mxu0 0.0
    %1164 = vmatpush1.msra.mxu0 0.0
    %1165 = vmatprep.subr.mxu0 0.0
    %1166 = vmatpush1.msra.mxu0 0.0
    %1167 = vmatprep.subr.mxu0 0.0
    %1168 = vmatpush1.msra.mxu0 0.0
    %1169 = vmatprep.subr.mxu0 0.0
    %1170 = vmatpush1.msra.mxu0 0.0
    %1171 = vmatprep.subr.mxu0 0.0
    %1172 = vmatpush1.msra.mxu0 0.0
    %1173 = vmatprep.subr.mxu0 0.0
    %1174 = vmatpush1.msra.mxu0 0.0
    %1175 = vmatprep.subr.mxu0 0.0
    %1176 = vmatpush1.msra.mxu0 0.0
    %1177 = vmatprep.subr.mxu0 0.0
    %1178 = vmatpush1.msra.mxu0 0.0
    %1179 = vmatprep.subr.mxu0 0.0
    %1180 = vmatpush1.msra.mxu0 0.0
    %1181 = vmatprep.subr.mxu0 0.0
    %1182 = vmatpush1.msra.mxu0 0.0
    %1183 = vmatprep.subr.mxu0 0.0
    %1184 = vmatpush1.msra.mxu0 0.0
    %1185 = vmatprep.subr.mxu0 0.0
    %1186 = vmatpush1.msra.mxu0 0.0
    %1187 = vmatprep.subr.mxu0 0.0
    %1188 = vmatpush1.msra.mxu0 0.0
    %1189 = vmatprep.subr.mxu0 0.0
    %1190 = vmatpush1.msra.mxu0 0.0
    %1191 = vmatprep.subr.mxu0 0.0
    %1192 = vmatpush1.msra.mxu0 0.0
    %1193 = vmatprep.subr.mxu0 0.0
    %1194 = vmatpush1.msra.mxu0 0.0
    %1195 = vmatprep.subr.mxu0 0.0
    %1196 = vmatpush1.msra.mxu0 0.0
    %1197 = vmatprep.subr.mxu0 0.0
    %1198 = vmatpush1.msra.mxu0 0.0
    %1199 = vmatprep.subr.mxu0 0.0
    %1200 = vmatpush1.msra.mxu0 0.0
    %1201 = vmatprep.subr.mxu0 0.0
    %1202 = vmatpush1.msra.mxu0 0.0
    %1203 = vmatprep.subr.mxu0 0.0
    %1204 = vmatpush1.msra.mxu0 0.0
    %1205 = vmatprep.subr.mxu0 0.0
    %1206 = vmatpush1.msra.mxu0 0.0
    %1207 = vmatprep.subr.mxu0 0.0
    %1208 = vmatpush1.msra.mxu0 0.0
    %1209 = vmatprep.subr.mxu0 0.0
    %1210 = vmatpush1.msra.mxu0 0.0
    %1211 = vmatprep.subr.mxu0 0.0
    %1212 = vmatpush1.msra.mxu0 0.0
    %1213 = vmatprep.subr.mxu0 0.0
    %1214 = vmatpush1.msra.mxu0 0.0
    %1215 = vmatprep.mubr.f32.mxu0 0.0
    %1216 = vmatmul.mubr.f32.gmra.mrb[0].mxu0 %v1149
    %v1217 = vpop.f32.mrb[0].mxu0
    %v1218 = vadd.f32 %v490, %v1217
    %v1219 = vpop.f32.mrb[0].mxu0
    %1220 = vdwg.mxu0
    %v1222 = vrot.slane %v1218, 6
    %v1224 = vadd.f32 %v478, %v1222
    %v1225 = vxor.u32 %v1224, 2147483648
    %v1226 = vmul.f32 %v1225, 1.442695
    %v1227 = vpow.pop %v1226
    %v1228 = vadd.f32 %v1227, 1.0
    %v1229 = vrcp.pop %v1228
    %v1230 = vmul.f32 1.0, %v1229
    %1231 = vrot.lane.b32.xlu0 %v1222, 64
    %v1232 = vpop.permute.xlu0 %1231
    %v1234 = vmul.f32 %v1230, %v1232
    %1236 = vrot.lane.b32.xlu0 %v1234, 64
    %v1237 = vpop.permute.xlu0 %1236
    %v1239 = vadd.f32 %v478, %v1237
    %v1240 = vtanh.pop %v1239
    %v1241 = vsub.f32 1.0, %v1230
    %1243 = vrot.lane.b32.xlu0 %v1240, 96
    %v1244 = vpop.permute.xlu0 %1243
    %v1246 = vmul.f32 %v1241, %v1244
    %v1247 = vrot.slane %v1140, 2
    %v1249 = vmul.f32 %v1230, %v1247
    %v1250 = vadd.f32 %v1246, %v1249
    %1252 = vrot.lane.b32.xlu0 %v1250, 96
    %v1253 = vpop.permute.xlu0 %1252
    %1255 = vst.msk [vmem:[#allocation2] sm:$0xc] %vm819, %v1253
    %v1256 = vrot.slane %v1250, 2
    %1257 = vrot.lane.b32.xlu0 %v1256, 96
    %v1258 = vpop.permute.xlu0 %1257
    %v1259 = vsel %vm384, %v1258, 0
    %1261 = vmatprep.subr.mxu0 0.0
    %1262 = vmatpush1.msra.mxu0 %v391
    %1263 = vmatprep.subr.mxu0 0.0
    %1264 = vmatpush1.msra.mxu0 %v392
    %1265 = vmatprep.subr.mxu0 0.0
    %1266 = vmatpush1.msra.mxu0 %v393
    %1267 = vmatprep.subr.mxu0 0.0
    %1268 = vmatpush1.msra.mxu0 %v394
    %1269 = vmatprep.subr.mxu0 0.0
    %1270 = vmatpush1.msra.mxu0 0.0
    %1271 = vmatprep.subr.mxu0 0.0
    %1272 = vmatpush1.msra.mxu0 0.0
    %1273 = vmatprep.subr.mxu0 0.0
    %1274 = vmatpush1.msra.mxu0 0.0
    %1275 = vmatprep.subr.mxu0 0.0
    %1276 = vmatpush1.msra.mxu0 0.0
    %1277 = vmatprep.subr.mxu0 0.0
    %1278 = vmatpush1.msra.mxu0 0.0
    %1279 = vmatprep.subr.mxu0 0.0
    %1280 = vmatpush1.msra.mxu0 0.0
    %1281 = vmatprep.subr.mxu0 0.0
    %1282 = vmatpush1.msra.mxu0 0.0
    %1283 = vmatprep.subr.mxu0 0.0
    %1284 = vmatpush1.msra.mxu0 0.0
    %1285 = vmatprep.subr.mxu0 0.0
    %1286 = vmatpush1.msra.mxu0 0.0
    %1287 = vmatprep.subr.mxu0 0.0
    %1288 = vmatpush1.msra.mxu0 0.0
    %1289 = vmatprep.subr.mxu0 0.0
    %1290 = vmatpush1.msra.mxu0 0.0
    %1291 = vmatprep.subr.mxu0 0.0
    %1292 = vmatpush1.msra.mxu0 0.0
    %1293 = vmatprep.subr.mxu0 0.0
    %1294 = vmatpush1.msra.mxu0 0.0
    %1295 = vmatprep.subr.mxu0 0.0
    %1296 = vmatpush1.msra.mxu0 0.0
    %1297 = vmatprep.subr.mxu0 0.0
    %1298 = vmatpush1.msra.mxu0 0.0
    %1299 = vmatprep.subr.mxu0 0.0
    %1300 = vmatpush1.msra.mxu0 0.0
    %1301 = vmatprep.subr.mxu0 0.0
    %1302 = vmatpush1.msra.mxu0 0.0
    %1303 = vmatprep.subr.mxu0 0.0
    %1304 = vmatpush1.msra.mxu0 0.0
    %1305 = vmatprep.subr.mxu0 0.0
    %1306 = vmatpush1.msra.mxu0 0.0
    %1307 = vmatprep.subr.mxu0 0.0
    %1308 = vmatpush1.msra.mxu0 0.0
    %1309 = vmatprep.subr.mxu0 0.0
    %1310 = vmatpush1.msra.mxu0 0.0
    %1311 = vmatprep.subr.mxu0 0.0
    %1312 = vmatpush1.msra.mxu0 0.0
    %1313 = vmatprep.subr.mxu0 0.0
    %1314 = vmatpush1.msra.mxu0 0.0
    %1315 = vmatprep.subr.mxu0 0.0
    %1316 = vmatpush1.msra.mxu0 0.0
    %1317 = vmatprep.subr.mxu0 0.0
    %1318 = vmatpush1.msra.mxu0 0.0
    %1319 = vmatprep.subr.mxu0 0.0
    %1320 = vmatpush1.msra.mxu0 0.0
    %1321 = vmatprep.subr.mxu0 0.0
    %1322 = vmatpush1.msra.mxu0 0.0
    %1323 = vmatprep.subr.mxu0 0.0
    %1324 = vmatpush1.msra.mxu0 0.0
    %1325 = vmatprep.mubr.f32.mxu0 0.0
    %1326 = vmatmul.mubr.f32.gmra.mrb[0].mxu0 %v1259
    %v1327 = vpop.f32.mrb[0].mxu0
    %v1328 = vadd.f32 %v490, %v1327
    %v1329 = vpop.f32.mrb[0].mxu0
    %1330 = vdwg.mxu0
    %v1331 = vadd.f32 %v478, %v1328
    %v1332 = vxor.u32 %v1331, 2147483648
    %v1333 = vmul.f32 %v1332, 1.442695
    %v1334 = vpow.pop %v1333
    %v1335 = vadd.f32 %v1334, 1.0
    %v1336 = vrcp.pop %v1335
    %v1337 = vmul.f32 1.0, %v1336
    %1339 = vrot.lane.b32.xlu0 %v1328, 64
    %v1340 = vpop.permute.xlu0 %1339
    %v1342 = vmul.f32 %v1337, %v1340
    %1344 = vrot.lane.b32.xlu0 %v1342, 64
    %v1345 = vpop.permute.xlu0 %1344
    %v1347 = vadd.f32 %v478, %v1345
    %v1348 = vtanh.pop %v1347
    %v1349 = vsub.f32 1.0, %v1337
    %1351 = vrot.lane.b32.xlu0 %v1348, 96
    %v1352 = vpop.permute.xlu0 %1351
    %v1354 = vmul.f32 %v1349, %v1352
    %v1356 = vmul.f32 %v1337, %v1256
    %v1357 = vadd.f32 %v1354, %v1356
    %1359 = vrot.lane.b32.xlu0 %v1357, 96
    %v1360 = vpop.permute.xlu0 %1359
    %1362 = vst.msk [vmem:[#allocation2] sm:$0x3] %vm927, %v1360
    %s1363 = scalar_lea.vmem %s7, 32
    %v1364 = vld [vmem:[%s1363] sm:$0xff]
    %v1365 = vld [vmem:[%s1363 + $0x8] sm:$0xff]
    %v1366 = vld [vmem:[%s1363 + $0x10] sm:$0xff]
    %v1367 = vld [vmem:[%s1363 + $0x18] sm:$0xff]
    %s1368 = scalar_lea.vmem %s8, 32
    %v1369 = vld [vmem:[%s1368] sm:$0xff]
    %v1370 = vld [vmem:[%s1368 + $0x8] sm:$0xff]
    %v1371 = vld [vmem:[%s1368 + $0x10] sm:$0xff]
    %v1372 = vld [vmem:[%s1368 + $0x18] sm:$0xff]
    %s1373 = scalar_lea.vmem %s9, 1
    %v1374 = vld [vmem:[%s1373] sm:$0x1]
    %s1375 = scalar_lea.vmem [#allocation10], 1
    %v1376 = vld [vmem:[%s1375] sm:$0x1]
    %v1377 = vld [vmem:[#allocation2] sm:$0xff]
    %v1378 = vld [vmem:[#allocation2 + $0x8] sm:$0xff]
    %v1380 = vlaneseq
    %v1381 = vshrl.u32 %v1380, 7
    %v1382 = vsub.s32 0, %v1381
    %v1383 = vrot.slane %v1374, %v1382
    %v1386 = vsel %vm384, %v1377, 0
    %v1389 = vsel %vm384, %v1378, 0
    %1391 = vmatprep.subr.mxu0 0.0
    %1392 = vmatpush1.msra.mxu0 %v1364
    %1393 = vmatprep.subr.mxu0 0.0
    %1394 = vmatpush1.msra.mxu0 %v1365
    %1395 = vmatprep.subr.mxu0 0.0
    %1396 = vmatpush1.msra.mxu0 %v1366
    %1397 = vmatprep.subr.mxu0 0.0
    %1398 = vmatpush1.msra.mxu0 %v1367
    %1399 = vmatprep.subr.mxu0 0.0
    %1400 = vmatpush1.msra.mxu0 0.0
    %1401 = vmatprep.subr.mxu0 0.0
    %1402 = vmatpush1.msra.mxu0 0.0
    %1403 = vmatprep.subr.mxu0 0.0
    %1404 = vmatpush1.msra.mxu0 0.0
    %1405 = vmatprep.subr.mxu0 0.0
    %1406 = vmatpush1.msra.mxu0 0.0
    %1407 = vmatprep.subr.mxu0 0.0
    %1408 = vmatpush1.msra.mxu0 0.0
    %1409 = vmatprep.subr.mxu0 0.0
    %1410 = vmatpush1.msra.mxu0 0.0
    %1411 = vmatprep.subr.mxu0 0.0
    %1412 = vmatpush1.msra.mxu0 0.0
    %1413 = vmatprep.subr.mxu0 0.0
    %1414 = vmatpush1.msra.mxu0 0.0
    %1415 = vmatprep.subr.mxu0 0.0
    %1416 = vmatpush1.msra.mxu0 0.0
    %1417 = vmatprep.subr.mxu0 0.0
    %1418 = vmatpush1.msra.mxu0 0.0
    %1419 = vmatprep.subr.mxu0 0.0
    %1420 = vmatpush1.msra.mxu0 0.0
    %1421 = vmatprep.subr.mxu0 0.0
    %1422 = vmatpush1.msra.mxu0 0.0
    %1423 = vmatprep.subr.mxu0 0.0
    %1424 = vmatpush1.msra.mxu0 0.0
    %1425 = vmatprep.subr.mxu0 0.0
    %1426 = vmatpush1.msra.mxu0 0.0
    %1427 = vmatprep.subr.mxu0 0.0
    %1428 = vmatpush1.msra.mxu0 0.0
    %1429 = vmatprep.subr.mxu0 0.0
    %1430 = vmatpush1.msra.mxu0 0.0
    %1431 = vmatprep.subr.mxu0 0.0
    %1432 = vmatpush1.msra.mxu0 0.0
    %1433 = vmatprep.subr.mxu0 0.0
    %1434 = vmatpush1.msra.mxu0 0.0
    %1435 = vmatprep.subr.mxu0 0.0
    %1436 = vmatpush1.msra.mxu0 0.0
    %1437 = vmatprep.subr.mxu0 0.0
    %1438 = vmatpush1.msra.mxu0 0.0
    %1439 = vmatprep.subr.mxu0 0.0
    %1440 = vmatpush1.msra.mxu0 0.0
    %1441 = vmatprep.subr.mxu0 0.0
    %1442 = vmatpush1.msra.mxu0 0.0
    %1443 = vmatprep.subr.mxu0 0.0
    %1444 = vmatpush1.msra.mxu0 0.0
    %1445 = vmatprep.subr.mxu0 0.0
    %1446 = vmatpush1.msra.mxu0 0.0
    %1447 = vmatprep.subr.mxu0 0.0
    %1448 = vmatpush1.msra.mxu0 0.0
    %1449 = vmatprep.subr.mxu0 0.0
    %1450 = vmatpush1.msra.mxu0 0.0
    %1451 = vmatprep.subr.mxu0 0.0
    %1452 = vmatpush1.msra.mxu0 0.0
    %1453 = vmatprep.subr.mxu0 0.0
    %1454 = vmatpush1.msra.mxu0 0.0
    %1455 = vmatprep.mubr.f32.mxu0 0.0
    %1456 = vmatmul.mubr.f32.gmra.mrb[0].mxu0 %v1386
    %v1457 = vpop.f32.mrb[0].mxu0
    %v1458 = vadd.f32 %v1383, %v1457
    %v1459 = vpop.f32.mrb[0].mxu0
    %1460 = vmatprep.mubr.f32.mxu0 0.0
    %1461 = vmatmul.mubr.f32.gmra.mrb[0].mxu0 %v1389
    %v1462 = vpop.f32.mrb[0].mxu0
    %v1463 = vadd.f32 %v1383, %v1462
    %v1464 = vpop.f32.mrb[0].mxu0
    %1465 = vdwg.mxu0
    %v1467 = vlaneseq
    %v1468 = vshrl.u32 %v1467, 7
    %v1469 = vsub.s32 0, %v1468
    %v1470 = vrot.slane %v1376, %v1469
    %1472 = vmatprep.subr.mxu0 0.0
    %1473 = vmatpush1.msra.mxu0 %v1369
    %1474 = vmatprep.subr.mxu0 0.0
    %1475 = vmatpush1.msra.mxu0 %v1370
    %1476 = vmatprep.subr.mxu0 0.0
    %1477 = vmatpush1.msra.mxu0 %v1371
    %1478 = vmatprep.subr.mxu0 0.0
    %1479 = vmatpush1.msra.mxu0 %v1372
    %1480 = vmatprep.subr.mxu0 0.0
    %1481 = vmatpush1.msra.mxu0 0.0
    %1482 = vmatprep.subr.mxu0 0.0
    %1483 = vmatpush1.msra.mxu0 0.0
    %1484 = vmatprep.subr.mxu0 0.0
    %1485 = vmatpush1.msra.mxu0 0.0
    %1486 = vmatprep.subr.mxu0 0.0
    %1487 = vmatpush1.msra.mxu0 0.0
    %1488 = vmatprep.subr.mxu0 0.0
    %1489 = vmatpush1.msra.mxu0 0.0
    %1490 = vmatprep.subr.mxu0 0.0
    %1491 = vmatpush1.msra.mxu0 0.0
    %1492 = vmatprep.subr.mxu0 0.0
    %1493 = vmatpush1.msra.mxu0 0.0
    %1494 = vmatprep.subr.mxu0 0.0
    %1495 = vmatpush1.msra.mxu0 0.0
    %1496 = vmatprep.subr.mxu0 0.0
    %1497 = vmatpush1.msra.mxu0 0.0
    %1498 = vmatprep.subr.mxu0 0.0
    %1499 = vmatpush1.msra.mxu0 0.0
    %1500 = vmatprep.subr.mxu0 0.0
    %1501 = vmatpush1.msra.mxu0 0.0
    %1502 = vmatprep.subr.mxu0 0.0
    %1503 = vmatpush1.msra.mxu0 0.0
    %1504 = vmatprep.subr.mxu0 0.0
    %1505 = vmatpush1.msra.mxu0 0.0
    %1506 = vmatprep.subr.mxu0 0.0
    %1507 = vmatpush1.msra.mxu0 0.0
    %1508 = vmatprep.subr.mxu0 0.0
    %1509 = vmatpush1.msra.mxu0 0.0
    %1510 = vmatprep.subr.mxu0 0.0
    %1511 = vmatpush1.msra.mxu0 0.0
    %1512 = vmatprep.subr.mxu0 0.0
    %1513 = vmatpush1.msra.mxu0 0.0
    %1514 = vmatprep.subr.mxu0 0.0
    %1515 = vmatpush1.msra.mxu0 0.0
    %1516 = vmatprep.subr.mxu0 0.0
    %1517 = vmatpush1.msra.mxu0 0.0
    %1518 = vmatprep.subr.mxu0 0.0
    %1519 = vmatpush1.msra.mxu0 0.0
    %1520 = vmatprep.subr.mxu0 0.0
    %1521 = vmatpush1.msra.mxu0 0.0
    %1522 = vmatprep.subr.mxu0 0.0
    %1523 = vmatpush1.msra.mxu0 0.0
    %1524 = vmatprep.subr.mxu0 0.0
    %1525 = vmatpush1.msra.mxu0 0.0
    %1526 = vmatprep.subr.mxu0 0.0
    %1527 = vmatpush1.msra.mxu0 0.0
    %1528 = vmatprep.subr.mxu0 0.0
    %1529 = vmatpush1.msra.mxu0 0.0
    %1530 = vmatprep.subr.mxu0 0.0
    %1531 = vmatpush1.msra.mxu0 0.0
    %1532 = vmatprep.subr.mxu0 0.0
    %1533 = vmatpush1.msra.mxu0 0.0
    %1534 = vmatprep.subr.mxu0 0.0
    %1535 = vmatpush1.msra.mxu0 0.0
    %1536 = vmatprep.mubr.f32.mxu0 0.0
    %1537 = vmatmul.mubr.f32.gmra.mrb[0].mxu0 %v493
    %v1538 = vpop.f32.mrb[0].mxu0
    %v1539 = vadd.f32 %v1470, %v1538
    %v1540 = vpop.f32.mrb[0].mxu0
    %1541 = vdwg.mxu0
    %v1543 = vrot.slane %v1539, 2
    %v1545 = vadd.f32 %v1463, %v1543
    %v1546 = vxor.u32 %v1545, 2147483648
    %v1547 = vmul.f32 %v1546, 1.442695
    %v1548 = vpow.pop %v1547
    %v1549 = vadd.f32 %v1548, 1.0
    %v1550 = vrcp.pop %v1549
    %v1551 = vmul.f32 1.0, %v1550
    %1552 = vrot.lane.b32.xlu0 %v1543, 64
    %v1553 = vpop.permute.xlu0 %1552
    %v1555 = vmul.f32 %v1551, %v1553
    %1557 = vrot.lane.b32.xlu0 %v1555, 64
    %v1558 = vpop.permute.xlu0 %1557
    %v1560 = vadd.f32 %v1463, %v1558
    %v1561 = vtanh.pop %v1560
    %v1562 = vsub.f32 1.0, %v1551
    %1564 = vrot.lane.b32.xlu0 %v1561, 96
    %v1565 = vpop.permute.xlu0 %1564
    %v1567 = vmul.f32 %v1562, %v1565
    %v1568 = vmul.f32 %v1551, 0.0
    %v1569 = vadd.f32 %v1567, %v1568
    %1571 = vrot.lane.b32.xlu0 %v1569, 96
    %v1572 = vpop.permute.xlu0 %1571
    %1574 = vst.msk [vmem:[#allocation2 + $0x8] sm:$0xc0] %vm597, %v1572
    %v1575 = vrot.slane %v1569, 6
    %1576 = vrot.lane.b32.xlu0 %v1575, 96
    %v1577 = vpop.permute.xlu0 %1576
    %v1578 = vsel %vm384, %v1577, 0
    %1580 = vmatprep.subr.mxu0 0.0
    %1581 = vmatpush1.msra.mxu0 %v1369
    %1582 = vmatprep.subr.mxu0 0.0
    %1583 = vmatpush1.msra.mxu0 %v1370
    %1584 = vmatprep.subr.mxu0 0.0
    %1585 = vmatpush1.msra.mxu0 %v1371
    %1586 = vmatprep.subr.mxu0 0.0
    %1587 = vmatpush1.msra.mxu0 %v1372
    %1588 = vmatprep.subr.mxu0 0.0
    %1589 = vmatpush1.msra.mxu0 0.0
    %1590 = vmatprep.subr.mxu0 0.0
    %1591 = vmatpush1.msra.mxu0 0.0
    %1592 = vmatprep.subr.mxu0 0.0
    %1593 = vmatpush1.msra.mxu0 0.0
    %1594 = vmatprep.subr.mxu0 0.0
    %1595 = vmatpush1.msra.mxu0 0.0
    %1596 = vmatprep.subr.mxu0 0.0
    %1597 = vmatpush1.msra.mxu0 0.0
    %1598 = vmatprep.subr.mxu0 0.0
    %1599 = vmatpush1.msra.mxu0 0.0
    %1600 = vmatprep.subr.mxu0 0.0
    %1601 = vmatpush1.msra.mxu0 0.0
    %1602 = vmatprep.subr.mxu0 0.0
    %1603 = vmatpush1.msra.mxu0 0.0
    %1604 = vmatprep.subr.mxu0 0.0
    %1605 = vmatpush1.msra.mxu0 0.0
    %1606 = vmatprep.subr.mxu0 0.0
    %1607 = vmatpush1.msra.mxu0 0.0
    %1608 = vmatprep.subr.mxu0 0.0
    %1609 = vmatpush1.msra.mxu0 0.0
    %1610 = vmatprep.subr.mxu0 0.0
    %1611 = vmatpush1.msra.mxu0 0.0
    %1612 = vmatprep.subr.mxu0 0.0
    %1613 = vmatpush1.msra.mxu0 0.0
    %1614 = vmatprep.subr.mxu0 0.0
    %1615 = vmatpush1.msra.mxu0 0.0
    %1616 = vmatprep.subr.mxu0 0.0
    %1617 = vmatpush1.msra.mxu0 0.0
    %1618 = vmatprep.subr.mxu0 0.0
    %1619 = vmatpush1.msra.mxu0 0.0
    %1620 = vmatprep.subr.mxu0 0.0
    %1621 = vmatpush1.msra.mxu0 0.0
    %1622 = vmatprep.subr.mxu0 0.0
    %1623 = vmatpush1.msra.mxu0 0.0
    %1624 = vmatprep.subr.mxu0 0.0
    %1625 = vmatpush1.msra.mxu0 0.0
    %1626 = vmatprep.subr.mxu0 0.0
    %1627 = vmatpush1.msra.mxu0 0.0
    %1628 = vmatprep.subr.mxu0 0.0
    %1629 = vmatpush1.msra.mxu0 0.0
    %1630 = vmatprep.subr.mxu0 0.0
    %1631 = vmatpush1.msra.mxu0 0.0
    %1632 = vmatprep.subr.mxu0 0.0
    %1633 = vmatpush1.msra.mxu0 0.0
    %1634 = vmatprep.subr.mxu0 0.0
    %1635 = vmatpush1.msra.mxu0 0.0
    %1636 = vmatprep.subr.mxu0 0.0
    %1637 = vmatpush1.msra.mxu0 0.0
    %1638 = vmatprep.subr.mxu0 0.0
    %1639 = vmatpush1.msra.mxu0 0.0
    %1640 = vmatprep.subr.mxu0 0.0
    %1641 = vmatpush1.msra.mxu0 0.0
    %1642 = vmatprep.subr.mxu0 0.0
    %1643 = vmatpush1.msra.mxu0 0.0
    %1644 = vmatprep.mubr.f32.mxu0 0.0
    %1645 = vmatmul.mubr.f32.gmra.mrb[0].mxu0 %v1578
    %v1646 = vpop.f32.mrb[0].mxu0
    %v1647 = vadd.f32 %v1470, %v1646
    %v1648 = vpop.f32.mrb[0].mxu0
    %1649 = vdwg.mxu0
    %v1651 = vrot.slane %v1647, 4
    %v1653 = vadd.f32 %v1463, %v1651
    %v1654 = vxor.u32 %v1653, 2147483648
    %v1655 = vmul.f32 %v1654, 1.442695
    %v1656 = vpow.pop %v1655
    %v1657 = vadd.f32 %v1656, 1.0
    %v1658 = vrcp.pop %v1657
    %v1659 = vmul.f32 1.0, %v1658
    %1660 = vrot.lane.b32.xlu0 %v1651, 64
    %v1661 = vpop.permute.xlu0 %1660
    %v1663 = vmul.f32 %v1659, %v1661
    %1665 = vrot.lane.b32.xlu0 %v1663, 64
    %v1666 = vpop.permute.xlu0 %1665
    %v1668 = vadd.f32 %v1463, %v1666
    %v1669 = vtanh.pop %v1668
    %v1670 = vsub.f32 1.0, %v1659
    %1672 = vrot.lane.b32.xlu0 %v1669, 96
    %v1673 = vpop.permute.xlu0 %1672
    %v1675 = vmul.f32 %v1670, %v1673
    %v1676 = vrot.slane %v1569, 2
    %v1678 = vmul.f32 %v1659, %v1676
    %v1679 = vadd.f32 %v1675, %v1678
    %1681 = vrot.lane.b32.xlu0 %v1679, 96
    %v1682 = vpop.permute.xlu0 %1681
    %1684 = vst.msk [vmem:[#allocation2 + $0x8] sm:$0x30] %vm708, %v1682
    %v1685 = vrot.slane %v1679, 4
    %1686 = vrot.lane.b32.xlu0 %v1685, 96
    %v1687 = vpop.permute.xlu0 %1686
    %v1688 = vsel %vm384, %v1687, 0
    %1690 = vmatprep.subr.mxu0 0.0
    %1691 = vmatpush1.msra.mxu0 %v1369
    %1692 = vmatprep.subr.mxu0 0.0
    %1693 = vmatpush1.msra.mxu0 %v1370
    %1694 = vmatprep.subr.mxu0 0.0
    %1695 = vmatpush1.msra.mxu0 %v1371
    %1696 = vmatprep.subr.mxu0 0.0
    %1697 = vmatpush1.msra.mxu0 %v1372
    %1698 = vmatprep.subr.mxu0 0.0
    %1699 = vmatpush1.msra.mxu0 0.0
    %1700 = vmatprep.subr.mxu0 0.0
    %1701 = vmatpush1.msra.mxu0 0.0
    %1702 = vmatprep.subr.mxu0 0.0
    %1703 = vmatpush1.msra.mxu0 0.0
    %1704 = vmatprep.subr.mxu0 0.0
    %1705 = vmatpush1.msra.mxu0 0.0
    %1706 = vmatprep.subr.mxu0 0.0
    %1707 = vmatpush1.msra.mxu0 0.0
    %1708 = vmatprep.subr.mxu0 0.0
    %1709 = vmatpush1.msra.mxu0 0.0
    %1710 = vmatprep.subr.mxu0 0.0
    %1711 = vmatpush1.msra.mxu0 0.0
    %1712 = vmatprep.subr.mxu0 0.0
    %1713 = vmatpush1.msra.mxu0 0.0
    %1714 = vmatprep.subr.mxu0 0.0
    %1715 = vmatpush1.msra.mxu0 0.0
    %1716 = vmatprep.subr.mxu0 0.0
    %1717 = vmatpush1.msra.mxu0 0.0
    %1718 = vmatprep.subr.mxu0 0.0
    %1719 = vmatpush1.msra.mxu0 0.0
    %1720 = vmatprep.subr.mxu0 0.0
    %1721 = vmatpush1.msra.mxu0 0.0
    %1722 = vmatprep.subr.mxu0 0.0
    %1723 = vmatpush1.msra.mxu0 0.0
    %1724 = vmatprep.subr.mxu0 0.0
    %1725 = vmatpush1.msra.mxu0 0.0
    %1726 = vmatprep.subr.mxu0 0.0
    %1727 = vmatpush1.msra.mxu0 0.0
    %1728 = vmatprep.subr.mxu0 0.0
    %1729 = vmatpush1.msra.mxu0 0.0
    %1730 = vmatprep.subr.mxu0 0.0
    %1731 = vmatpush1.msra.mxu0 0.0
    %1732 = vmatprep.subr.mxu0 0.0
    %1733 = vmatpush1.msra.mxu0 0.0
    %1734 = vmatprep.subr.mxu0 0.0
    %1735 = vmatpush1.msra.mxu0 0.0
    %1736 = vmatprep.subr.mxu0 0.0
    %1737 = vmatpush1.msra.mxu0 0.0
    %1738 = vmatprep.subr.mxu0 0.0
    %1739 = vmatpush1.msra.mxu0 0.0
    %1740 = vmatprep.subr.mxu0 0.0
    %1741 = vmatpush1.msra.mxu0 0.0
    %1742 = vmatprep.subr.mxu0 0.0
    %1743 = vmatpush1.msra.mxu0 0.0
    %1744 = vmatprep.subr.mxu0 0.0
    %1745 = vmatpush1.msra.mxu0 0.0
    %1746 = vmatprep.subr.mxu0 0.0
    %1747 = vmatpush1.msra.mxu0 0.0
    %1748 = vmatprep.subr.mxu0 0.0
    %1749 = vmatpush1.msra.mxu0 0.0
    %1750 = vmatprep.subr.mxu0 0.0
    %1751 = vmatpush1.msra.mxu0 0.0
    %1752 = vmatprep.subr.mxu0 0.0
    %1753 = vmatpush1.msra.mxu0 0.0
    %1754 = vmatprep.mubr.f32.mxu0 0.0
    %1755 = vmatmul.mubr.f32.gmra.mrb[0].mxu0 %v1688
    %v1756 = vpop.f32.mrb[0].mxu0
    %v1757 = vadd.f32 %v1470, %v1756
    %v1758 = vpop.f32.mrb[0].mxu0
    %1759 = vdwg.mxu0
    %v1761 = vrot.slane %v1757, 6
    %v1763 = vadd.f32 %v1463, %v1761
    %v1764 = vxor.u32 %v1763, 2147483648
    %v1765 = vmul.f32 %v1764, 1.442695
    %v1766 = vpow.pop %v1765
    %v1767 = vadd.f32 %v1766, 1.0
    %v1768 = vrcp.pop %v1767
    %v1769 = vmul.f32 1.0, %v1768
    %1770 = vrot.lane.b32.xlu0 %v1761, 64
    %v1771 = vpop.permute.xlu0 %1770
    %v1773 = vmul.f32 %v1769, %v1771
    %1775 = vrot.lane.b32.xlu0 %v1773, 64
    %v1776 = vpop.permute.xlu0 %1775
    %v1778 = vadd.f32 %v1463, %v1776
    %v1779 = vtanh.pop %v1778
    %v1780 = vsub.f32 1.0, %v1769
    %1782 = vrot.lane.b32.xlu0 %v1779, 96
    %v1783 = vpop.permute.xlu0 %1782
    %v1785 = vmul.f32 %v1780, %v1783
    %v1786 = vrot.slane %v1679, 2
    %v1788 = vmul.f32 %v1769, %v1786
    %v1789 = vadd.f32 %v1785, %v1788
    %1791 = vrot.lane.b32.xlu0 %v1789, 96
    %v1792 = vpop.permute.xlu0 %1791
    %1794 = vst.msk [vmem:[#allocation2 + $0x8] sm:$0xc] %vm819, %v1792
    %v1795 = vrot.slane %v1789, 2
    %1796 = vrot.lane.b32.xlu0 %v1795, 96
    %v1797 = vpop.permute.xlu0 %1796
    %v1798 = vsel %vm384, %v1797, 0
    %1800 = vmatprep.subr.mxu0 0.0
    %1801 = vmatpush1.msra.mxu0 %v1369
    %1802 = vmatprep.subr.mxu0 0.0
    %1803 = vmatpush1.msra.mxu0 %v1370
    %1804 = vmatprep.subr.mxu0 0.0
    %1805 = vmatpush1.msra.mxu0 %v1371
    %1806 = vmatprep.subr.mxu0 0.0
    %1807 = vmatpush1.msra.mxu0 %v1372
    %1808 = vmatprep.subr.mxu0 0.0
    %1809 = vmatpush1.msra.mxu0 0.0
    %1810 = vmatprep.subr.mxu0 0.0
    %1811 = vmatpush1.msra.mxu0 0.0
    %1812 = vmatprep.subr.mxu0 0.0
    %1813 = vmatpush1.msra.mxu0 0.0
    %1814 = vmatprep.subr.mxu0 0.0
    %1815 = vmatpush1.msra.mxu0 0.0
    %1816 = vmatprep.subr.mxu0 0.0
    %1817 = vmatpush1.msra.mxu0 0.0
    %1818 = vmatprep.subr.mxu0 0.0
    %1819 = vmatpush1.msra.mxu0 0.0
    %1820 = vmatprep.subr.mxu0 0.0
    %1821 = vmatpush1.msra.mxu0 0.0
    %1822 = vmatprep.subr.mxu0 0.0
    %1823 = vmatpush1.msra.mxu0 0.0
    %1824 = vmatprep.subr.mxu0 0.0
    %1825 = vmatpush1.msra.mxu0 0.0
    %1826 = vmatprep.subr.mxu0 0.0
    %1827 = vmatpush1.msra.mxu0 0.0
    %1828 = vmatprep.subr.mxu0 0.0
    %1829 = vmatpush1.msra.mxu0 0.0
    %1830 = vmatprep.subr.mxu0 0.0
    %1831 = vmatpush1.msra.mxu0 0.0
    %1832 = vmatprep.subr.mxu0 0.0
    %1833 = vmatpush1.msra.mxu0 0.0
    %1834 = vmatprep.subr.mxu0 0.0
    %1835 = vmatpush1.msra.mxu0 0.0
    %1836 = vmatprep.subr.mxu0 0.0
    %1837 = vmatpush1.msra.mxu0 0.0
    %1838 = vmatprep.subr.mxu0 0.0
    %1839 = vmatpush1.msra.mxu0 0.0
    %1840 = vmatprep.subr.mxu0 0.0
    %1841 = vmatpush1.msra.mxu0 0.0
    %1842 = vmatprep.subr.mxu0 0.0
    %1843 = vmatpush1.msra.mxu0 0.0
    %1844 = vmatprep.subr.mxu0 0.0
    %1845 = vmatpush1.msra.mxu0 0.0
    %1846 = vmatprep.subr.mxu0 0.0
    %1847 = vmatpush1.msra.mxu0 0.0
    %1848 = vmatprep.subr.mxu0 0.0
    %1849 = vmatpush1.msra.mxu0 0.0
    %1850 = vmatprep.subr.mxu0 0.0
    %1851 = vmatpush1.msra.mxu0 0.0
    %1852 = vmatprep.subr.mxu0 0.0
    %1853 = vmatpush1.msra.mxu0 0.0
    %1854 = vmatprep.subr.mxu0 0.0
    %1855 = vmatpush1.msra.mxu0 0.0
    %1856 = vmatprep.subr.mxu0 0.0
    %1857 = vmatpush1.msra.mxu0 0.0
    %1858 = vmatprep.subr.mxu0 0.0
    %1859 = vmatpush1.msra.mxu0 0.0
    %1860 = vmatprep.subr.mxu0 0.0
    %1861 = vmatpush1.msra.mxu0 0.0
    %1862 = vmatprep.subr.mxu0 0.0
    %1863 = vmatpush1.msra.mxu0 0.0
    %1864 = vmatprep.mubr.f32.mxu0 0.0
    %1865 = vmatmul.mubr.f32.gmra.mrb[0].mxu0 %v1798
    %v1866 = vpop.f32.mrb[0].mxu0
    %v1867 = vadd.f32 %v1470, %v1866
    %v1868 = vpop.f32.mrb[0].mxu0
    %1869 = vdwg.mxu0
    %v1870 = vadd.f32 %v1463, %v1867
    %v1871 = vxor.u32 %v1870, 2147483648
    %v1872 = vmul.f32 %v1871, 1.442695
    %v1873 = vpow.pop %v1872
    %v1874 = vadd.f32 %v1873, 1.0
    %v1875 = vrcp.pop %v1874
    %v1876 = vmul.f32 1.0, %v1875
    %1878 = vrot.lane.b32.xlu0 %v1867, 64
    %v1879 = vpop.permute.xlu0 %1878
    %v1881 = vmul.f32 %v1876, %v1879
    %1883 = vrot.lane.b32.xlu0 %v1881, 64
    %v1884 = vpop.permute.xlu0 %1883
    %v1886 = vadd.f32 %v1463, %v1884
    %v1887 = vtanh.pop %v1886
    %v1888 = vsub.f32 1.0, %v1876
    %1890 = vrot.lane.b32.xlu0 %v1887, 96
    %v1891 = vpop.permute.xlu0 %1890
    %v1893 = vmul.f32 %v1888, %v1891
    %v1895 = vmul.f32 %v1876, %v1795
    %v1896 = vadd.f32 %v1893, %v1895
    %1898 = vrot.lane.b32.xlu0 %v1896, 96
    %v1899 = vpop.permute.xlu0 %1898
    %1901 = vst.msk [vmem:[#allocation2 + $0x8] sm:$0x3] %vm927, %v1899
    %v1902 = vsel %vm384, %v1899, 0
    %1904 = vmatprep.subr.mxu0 0.0
    %1905 = vmatpush1.msra.mxu0 %v1369
    %1906 = vmatprep.subr.mxu0 0.0
    %1907 = vmatpush1.msra.mxu0 %v1370
    %1908 = vmatprep.subr.mxu0 0.0
    %1909 = vmatpush1.msra.mxu0 %v1371
    %1910 = vmatprep.subr.mxu0 0.0
    %1911 = vmatpush1.msra.mxu0 %v1372
    %1912 = vmatprep.subr.mxu0 0.0
    %1913 = vmatpush1.msra.mxu0 0.0
    %1914 = vmatprep.subr.mxu0 0.0
    %1915 = vmatpush1.msra.mxu0 0.0
    %1916 = vmatprep.subr.mxu0 0.0
    %1917 = vmatpush1.msra.mxu0 0.0
    %1918 = vmatprep.subr.mxu0 0.0
    %1919 = vmatpush1.msra.mxu0 0.0
    %1920 = vmatprep.subr.mxu0 0.0
    %1921 = vmatpush1.msra.mxu0 0.0
    %1922 = vmatprep.subr.mxu0 0.0
    %1923 = vmatpush1.msra.mxu0 0.0
    %1924 = vmatprep.subr.mxu0 0.0
    %1925 = vmatpush1.msra.mxu0 0.0
    %1926 = vmatprep.subr.mxu0 0.0
    %1927 = vmatpush1.msra.mxu0 0.0
    %1928 = vmatprep.subr.mxu0 0.0
    %1929 = vmatpush1.msra.mxu0 0.0
    %1930 = vmatprep.subr.mxu0 0.0
    %1931 = vmatpush1.msra.mxu0 0.0
    %1932 = vmatprep.subr.mxu0 0.0
    %1933 = vmatpush1.msra.mxu0 0.0
    %1934 = vmatprep.subr.mxu0 0.0
    %1935 = vmatpush1.msra.mxu0 0.0
    %1936 = vmatprep.subr.mxu0 0.0
    %1937 = vmatpush1.msra.mxu0 0.0
    %1938 = vmatprep.subr.mxu0 0.0
    %1939 = vmatpush1.msra.mxu0 0.0
    %1940 = vmatprep.subr.mxu0 0.0
    %1941 = vmatpush1.msra.mxu0 0.0
    %1942 = vmatprep.subr.mxu0 0.0
    %1943 = vmatpush1.msra.mxu0 0.0
    %1944 = vmatprep.subr.mxu0 0.0
    %1945 = vmatpush1.msra.mxu0 0.0
    %1946 = vmatprep.subr.mxu0 0.0
    %1947 = vmatpush1.msra.mxu0 0.0
    %1948 = vmatprep.subr.mxu0 0.0
    %1949 = vmatpush1.msra.mxu0 0.0
    %1950 = vmatprep.subr.mxu0 0.0
    %1951 = vmatpush1.msra.mxu0 0.0
    %1952 = vmatprep.subr.mxu0 0.0
    %1953 = vmatpush1.msra.mxu0 0.0
    %1954 = vmatprep.subr.mxu0 0.0
    %1955 = vmatpush1.msra.mxu0 0.0
    %1956 = vmatprep.subr.mxu0 0.0
    %1957 = vmatpush1.msra.mxu0 0.0
    %1958 = vmatprep.subr.mxu0 0.0
    %1959 = vmatpush1.msra.mxu0 0.0
    %1960 = vmatprep.subr.mxu0 0.0
    %1961 = vmatpush1.msra.mxu0 0.0
    %1962 = vmatprep.subr.mxu0 0.0
    %1963 = vmatpush1.msra.mxu0 0.0
    %1964 = vmatprep.subr.mxu0 0.0
    %1965 = vmatpush1.msra.mxu0 0.0
    %1966 = vmatprep.subr.mxu0 0.0
    %1967 = vmatpush1.msra.mxu0 0.0
    %1968 = vmatprep.mubr.f32.mxu0 0.0
    %1969 = vmatmul.mubr.f32.gmra.mrb[0].mxu0 %v1902
    %v1970 = vpop.f32.mrb[0].mxu0
    %v1971 = vadd.f32 %v1470, %v1970
    %v1972 = vpop.f32.mrb[0].mxu0
    %1973 = vdwg.mxu0
    %v1975 = vrot.slane %v1971, 2
    %v1977 = vadd.f32 %v1458, %v1975
    %v1978 = vxor.u32 %v1977, 2147483648
    %v1979 = vmul.f32 %v1978, 1.442695
    %v1980 = vpow.pop %v1979
    %v1981 = vadd.f32 %v1980, 1.0
    %v1982 = vrcp.pop %v1981
    %v1983 = vmul.f32 1.0, %v1982
    %1984 = vrot.lane.b32.xlu0 %v1975, 64
    %v1985 = vpop.permute.xlu0 %1984
    %v1987 = vmul.f32 %v1983, %v1985
    %1989 = vrot.lane.b32.xlu0 %v1987, 64
    %v1990 = vpop.permute.xlu0 %1989
    %v1992 = vadd.f32 %v1458, %v1990
    %v1993 = vtanh.pop %v1992
    %v1994 = vsub.f32 1.0, %v1983
    %1996 = vrot.lane.b32.xlu0 %v1993, 96
    %v1997 = vpop.permute.xlu0 %1996
    %v1999 = vmul.f32 %v1994, %v1997
    %v2000 = vrot.slane %v1896, 2
    %v2002 = vmul.f32 %v1983, %v2000
    %v2003 = vadd.f32 %v1999, %v2002
    %2005 = vrot.lane.b32.xlu0 %v2003, 96
    %v2006 = vpop.permute.xlu0 %2005
    %2008 = vst.msk [vmem:[#allocation2] sm:$0xc0] %vm597, %v2006
    %v2009 = vrot.slane %v2003, 6
    %2010 = vrot.lane.b32.xlu0 %v2009, 96
    %v2011 = vpop.permute.xlu0 %2010
    %v2012 = vsel %vm384, %v2011, 0
    %2014 = vmatprep.subr.mxu0 0.0
    %2015 = vmatpush1.msra.mxu0 %v1369
    %2016 = vmatprep.subr.mxu0 0.0
    %2017 = vmatpush1.msra.mxu0 %v1370
    %2018 = vmatprep.subr.mxu0 0.0
    %2019 = vmatpush1.msra.mxu0 %v1371
    %2020 = vmatprep.subr.mxu0 0.0
    %2021 = vmatpush1.msra.mxu0 %v1372
    %2022 = vmatprep.subr.mxu0 0.0
    %2023 = vmatpush1.msra.mxu0 0.0
    %2024 = vmatprep.subr.mxu0 0.0
    %2025 = vmatpush1.msra.mxu0 0.0
    %2026 = vmatprep.subr.mxu0 0.0
    %2027 = vmatpush1.msra.mxu0 0.0
    %2028 = vmatprep.subr.mxu0 0.0
    %2029 = vmatpush1.msra.mxu0 0.0
    %2030 = vmatprep.subr.mxu0 0.0
    %2031 = vmatpush1.msra.mxu0 0.0
    %2032 = vmatprep.subr.mxu0 0.0
    %2033 = vmatpush1.msra.mxu0 0.0
    %2034 = vmatprep.subr.mxu0 0.0
    %2035 = vmatpush1.msra.mxu0 0.0
    %2036 = vmatprep.subr.mxu0 0.0
    %2037 = vmatpush1.msra.mxu0 0.0
    %2038 = vmatprep.subr.mxu0 0.0
    %2039 = vmatpush1.msra.mxu0 0.0
    %2040 = vmatprep.subr.mxu0 0.0
    %2041 = vmatpush1.msra.mxu0 0.0
    %2042 = vmatprep.subr.mxu0 0.0
    %2043 = vmatpush1.msra.mxu0 0.0
    %2044 = vmatprep.subr.mxu0 0.0
    %2045 = vmatpush1.msra.mxu0 0.0
    %2046 = vmatprep.subr.mxu0 0.0
    %2047 = vmatpush1.msra.mxu0 0.0
    %2048 = vmatprep.subr.mxu0 0.0
    %2049 = vmatpush1.msra.mxu0 0.0
    %2050 = vmatprep.subr.mxu0 0.0
    %2051 = vmatpush1.msra.mxu0 0.0
    %2052 = vmatprep.subr.mxu0 0.0
    %2053 = vmatpush1.msra.mxu0 0.0
    %2054 = vmatprep.subr.mxu0 0.0
    %2055 = vmatpush1.msra.mxu0 0.0
    %2056 = vmatprep.subr.mxu0 0.0
    %2057 = vmatpush1.msra.mxu0 0.0
    %2058 = vmatprep.subr.mxu0 0.0
    %2059 = vmatpush1.msra.mxu0 0.0
    %2060 = vmatprep.subr.mxu0 0.0
    %2061 = vmatpush1.msra.mxu0 0.0
    %2062 = vmatprep.subr.mxu0 0.0
    %2063 = vmatpush1.msra.mxu0 0.0
    %2064 = vmatprep.subr.mxu0 0.0
    %2065 = vmatpush1.msra.mxu0 0.0
    %2066 = vmatprep.subr.mxu0 0.0
    %2067 = vmatpush1.msra.mxu0 0.0
    %2068 = vmatprep.subr.mxu0 0.0
    %2069 = vmatpush1.msra.mxu0 0.0
    %2070 = vmatprep.subr.mxu0 0.0
    %2071 = vmatpush1.msra.mxu0 0.0
    %2072 = vmatprep.subr.mxu0 0.0
    %2073 = vmatpush1.msra.mxu0 0.0
    %2074 = vmatprep.subr.mxu0 0.0
    %2075 = vmatpush1.msra.mxu0 0.0
    %2076 = vmatprep.subr.mxu0 0.0
    %2077 = vmatpush1.msra.mxu0 0.0
    %2078 = vmatprep.mubr.f32.mxu0 0.0
    %2079 = vmatmul.mubr.f32.gmra.mrb[0].mxu0 %v2012
    %v2080 = vpop.f32.mrb[0].mxu0
    %v2081 = vadd.f32 %v1470, %v2080
    %v2082 = vpop.f32.mrb[0].mxu0
    %2083 = vdwg.mxu0
    %v2085 = vrot.slane %v2081, 4
    %v2087 = vadd.f32 %v1458, %v2085
    %v2088 = vxor.u32 %v2087, 2147483648
    %v2089 = vmul.f32 %v2088, 1.442695
    %v2090 = vpow.pop %v2089
    %v2091 = vadd.f32 %v2090, 1.0
    %v2092 = vrcp.pop %v2091
    %v2093 = vmul.f32 1.0, %v2092
    %2094 = vrot.lane.b32.xlu0 %v2085, 64
    %v2095 = vpop.permute.xlu0 %2094
    %v2097 = vmul.f32 %v2093, %v2095
    %2099 = vrot.lane.b32.xlu0 %v2097, 64
    %v2100 = vpop.permute.xlu0 %2099
    %v2102 = vadd.f32 %v1458, %v2100
    %v2103 = vtanh.pop %v2102
    %v2104 = vsub.f32 1.0, %v2093
    %2106 = vrot.lane.b32.xlu0 %v2103, 96
    %v2107 = vpop.permute.xlu0 %2106
    %v2109 = vmul.f32 %v2104, %v2107
    %v2110 = vrot.slane %v2003, 2
    %v2112 = vmul.f32 %v2093, %v2110
    %v2113 = vadd.f32 %v2109, %v2112
    %2115 = vrot.lane.b32.xlu0 %v2113, 96
    %v2116 = vpop.permute.xlu0 %2115
    %2118 = vst.msk [vmem:[#allocation2] sm:$0x30] %vm708, %v2116
    %v2119 = vrot.slane %v2113, 4
    %2120 = vrot.lane.b32.xlu0 %v2119, 96
    %v2121 = vpop.permute.xlu0 %2120
    %v2122 = vsel %vm384, %v2121, 0
    %2124 = vmatprep.subr.mxu0 0.0
    %2125 = vmatpush1.msra.mxu0 %v1369
    %2126 = vmatprep.subr.mxu0 0.0
    %2127 = vmatpush1.msra.mxu0 %v1370
    %2128 = vmatprep.subr.mxu0 0.0
    %2129 = vmatpush1.msra.mxu0 %v1371
    %2130 = vmatprep.subr.mxu0 0.0
    %2131 = vmatpush1.msra.mxu0 %v1372
    %2132 = vmatprep.subr.mxu0 0.0
    %2133 = vmatpush1.msra.mxu0 0.0
    %2134 = vmatprep.subr.mxu0 0.0
    %2135 = vmatpush1.msra.mxu0 0.0
    %2136 = vmatprep.subr.mxu0 0.0
    %2137 = vmatpush1.msra.mxu0 0.0
    %2138 = vmatprep.subr.mxu0 0.0
    %2139 = vmatpush1.msra.mxu0 0.0
    %2140 = vmatprep.subr.mxu0 0.0
    %2141 = vmatpush1.msra.mxu0 0.0
    %2142 = vmatprep.subr.mxu0 0.0
    %2143 = vmatpush1.msra.mxu0 0.0
    %2144 = vmatprep.subr.mxu0 0.0
    %2145 = vmatpush1.msra.mxu0 0.0
    %2146 = vmatprep.subr.mxu0 0.0
    %2147 = vmatpush1.msra.mxu0 0.0
    %2148 = vmatprep.subr.mxu0 0.0
    %2149 = vmatpush1.msra.mxu0 0.0
    %2150 = vmatprep.subr.mxu0 0.0
    %2151 = vmatpush1.msra.mxu0 0.0
    %2152 = vmatprep.subr.mxu0 0.0
    %2153 = vmatpush1.msra.mxu0 0.0
    %2154 = vmatprep.subr.mxu0 0.0
    %2155 = vmatpush1.msra.mxu0 0.0
    %2156 = vmatprep.subr.mxu0 0.0
    %2157 = vmatpush1.msra.mxu0 0.0
    %2158 = vmatprep.subr.mxu0 0.0
    %2159 = vmatpush1.msra.mxu0 0.0
    %2160 = vmatprep.subr.mxu0 0.0
    %2161 = vmatpush1.msra.mxu0 0.0
    %2162 = vmatprep.subr.mxu0 0.0
    %2163 = vmatpush1.msra.mxu0 0.0
    %2164 = vmatprep.subr.mxu0 0.0
    %2165 = vmatpush1.msra.mxu0 0.0
    %2166 = vmatprep.subr.mxu0 0.0
    %2167 = vmatpush1.msra.mxu0 0.0
    %2168 = vmatprep.subr.mxu0 0.0
    %2169 = vmatpush1.msra.mxu0 0.0
    %2170 = vmatprep.subr.mxu0 0.0
    %2171 = vmatpush1.msra.mxu0 0.0
    %2172 = vmatprep.subr.mxu0 0.0
    %2173 = vmatpush1.msra.mxu0 0.0
    %2174 = vmatprep.subr.mxu0 0.0
    %2175 = vmatpush1.msra.mxu0 0.0
    %2176 = vmatprep.subr.mxu0 0.0
    %2177 = vmatpush1.msra.mxu0 0.0
    %2178 = vmatprep.subr.mxu0 0.0
    %2179 = vmatpush1.msra.mxu0 0.0
    %2180 = vmatprep.subr.mxu0 0.0
    %2181 = vmatpush1.msra.mxu0 0.0
    %2182 = vmatprep.subr.mxu0 0.0
    %2183 = vmatpush1.msra.mxu0 0.0
    %2184 = vmatprep.subr.mxu0 0.0
    %2185 = vmatpush1.msra.mxu0 0.0
    %2186 = vmatprep.subr.mxu0 0.0
    %2187 = vmatpush1.msra.mxu0 0.0
    %2188 = vmatprep.mubr.f32.mxu0 0.0
    %2189 = vmatmul.mubr.f32.gmra.mrb[0].mxu0 %v2122
    %v2190 = vpop.f32.mrb[0].mxu0
    %v2191 = vadd.f32 %v1470, %v2190
    %v2192 = vpop.f32.mrb[0].mxu0
    %2193 = vdwg.mxu0
    %v2195 = vrot.slane %v2191, 6
    %v2197 = vadd.f32 %v1458, %v2195
    %v2198 = vxor.u32 %v2197, 2147483648
    %v2199 = vmul.f32 %v2198, 1.442695
    %v2200 = vpow.pop %v2199
    %v2201 = vadd.f32 %v2200, 1.0
    %v2202 = vrcp.pop %v2201
    %v2203 = vmul.f32 1.0, %v2202
    %2204 = vrot.lane.b32.xlu0 %v2195, 64
    %v2205 = vpop.permute.xlu0 %2204
    %v2207 = vmul.f32 %v2203, %v2205
    %2209 = vrot.lane.b32.xlu0 %v2207, 64
    %v2210 = vpop.permute.xlu0 %2209
    %v2212 = vadd.f32 %v1458, %v2210
    %v2213 = vtanh.pop %v2212
    %v2214 = vsub.f32 1.0, %v2203
    %2216 = vrot.lane.b32.xlu0 %v2213, 96
    %v2217 = vpop.permute.xlu0 %2216
    %v2219 = vmul.f32 %v2214, %v2217
    %v2220 = vrot.slane %v2113, 2
    %v2222 = vmul.f32 %v2203, %v2220
    %v2223 = vadd.f32 %v2219, %v2222
    %2225 = vrot.lane.b32.xlu0 %v2223, 96
    %v2226 = vpop.permute.xlu0 %2225
    %2228 = vst.msk [vmem:[#allocation2] sm:$0xc] %vm819, %v2226
    %v2229 = vrot.slane %v2223, 2
    %2230 = vrot.lane.b32.xlu0 %v2229, 96
    %v2231 = vpop.permute.xlu0 %2230
    %v2232 = vsel %vm384, %v2231, 0
    %2234 = vmatprep.subr.mxu0 0.0
    %2235 = vmatpush1.msra.mxu0 %v1369
    %2236 = vmatprep.subr.mxu0 0.0
    %2237 = vmatpush1.msra.mxu0 %v1370
    %2238 = vmatprep.subr.mxu0 0.0
    %2239 = vmatpush1.msra.mxu0 %v1371
    %2240 = vmatprep.subr.mxu0 0.0
    %2241 = vmatpush1.msra.mxu0 %v1372
    %2242 = vmatprep.subr.mxu0 0.0
    %2243 = vmatpush1.msra.mxu0 0.0
    %2244 = vmatprep.subr.mxu0 0.0
    %2245 = vmatpush1.msra.mxu0 0.0
    %2246 = vmatprep.subr.mxu0 0.0
    %2247 = vmatpush1.msra.mxu0 0.0
    %2248 = vmatprep.subr.mxu0 0.0
    %2249 = vmatpush1.msra.mxu0 0.0
    %2250 = vmatprep.subr.mxu0 0.0
    %2251 = vmatpush1.msra.mxu0 0.0
    %2252 = vmatprep.subr.mxu0 0.0
    %2253 = vmatpush1.msra.mxu0 0.0
    %2254 = vmatprep.subr.mxu0 0.0
    %2255 = vmatpush1.msra.mxu0 0.0
    %2256 = vmatprep.subr.mxu0 0.0
    %2257 = vmatpush1.msra.mxu0 0.0
    %2258 = vmatprep.subr.mxu0 0.0
    %2259 = vmatpush1.msra.mxu0 0.0
    %2260 = vmatprep.subr.mxu0 0.0
    %2261 = vmatpush1.msra.mxu0 0.0
    %2262 = vmatprep.subr.mxu0 0.0
    %2263 = vmatpush1.msra.mxu0 0.0
    %2264 = vmatprep.subr.mxu0 0.0
    %2265 = vmatpush1.msra.mxu0 0.0
    %2266 = vmatprep.subr.mxu0 0.0
    %2267 = vmatpush1.msra.mxu0 0.0
    %2268 = vmatprep.subr.mxu0 0.0
    %2269 = vmatpush1.msra.mxu0 0.0
    %2270 = vmatprep.subr.mxu0 0.0
    %2271 = vmatpush1.msra.mxu0 0.0
    %2272 = vmatprep.subr.mxu0 0.0
    %2273 = vmatpush1.msra.mxu0 0.0
    %2274 = vmatprep.subr.mxu0 0.0
    %2275 = vmatpush1.msra.mxu0 0.0
    %2276 = vmatprep.subr.mxu0 0.0
    %2277 = vmatpush1.msra.mxu0 0.0
    %2278 = vmatprep.subr.mxu0 0.0
    %2279 = vmatpush1.msra.mxu0 0.0
    %2280 = vmatprep.subr.mxu0 0.0
    %2281 = vmatpush1.msra.mxu0 0.0
    %2282 = vmatprep.subr.mxu0 0.0
    %2283 = vmatpush1.msra.mxu0 0.0
    %2284 = vmatprep.subr.mxu0 0.0
    %2285 = vmatpush1.msra.mxu0 0.0
    %2286 = vmatprep.subr.mxu0 0.0
    %2287 = vmatpush1.msra.mxu0 0.0
    %2288 = vmatprep.subr.mxu0 0.0
    %2289 = vmatpush1.msra.mxu0 0.0
    %2290 = vmatprep.subr.mxu0 0.0
    %2291 = vmatpush1.msra.mxu0 0.0
    %2292 = vmatprep.subr.mxu0 0.0
    %2293 = vmatpush1.msra.mxu0 0.0
    %2294 = vmatprep.subr.mxu0 0.0
    %2295 = vmatpush1.msra.mxu0 0.0
    %2296 = vmatprep.subr.mxu0 0.0
    %2297 = vmatpush1.msra.mxu0 0.0
    %2298 = vmatprep.mubr.f32.mxu0 0.0
    %2299 = vmatmul.mubr.f32.gmra.mrb[0].mxu0 %v2232
    %v2300 = vpop.f32.mrb[0].mxu0
    %v2301 = vadd.f32 %v1470, %v2300
    %v2302 = vpop.f32.mrb[0].mxu0
    %2303 = vdwg.mxu0
    %v2304 = vadd.f32 %v1458, %v2301
    %v2305 = vxor.u32 %v2304, 2147483648
    %v2306 = vmul.f32 %v2305, 1.442695
    %v2307 = vpow.pop %v2306
    %v2308 = vadd.f32 %v2307, 1.0
    %v2309 = vrcp.pop %v2308
    %v2310 = vmul.f32 1.0, %v2309
    %2312 = vrot.lane.b32.xlu0 %v2301, 64
    %v2313 = vpop.permute.xlu0 %2312
    %v2315 = vmul.f32 %v2310, %v2313
    %2317 = vrot.lane.b32.xlu0 %v2315, 64
    %v2318 = vpop.permute.xlu0 %2317
    %v2320 = vadd.f32 %v1458, %v2318
    %v2321 = vtanh.pop %v2320
    %v2322 = vsub.f32 1.0, %v2310
    %2324 = vrot.lane.b32.xlu0 %v2321, 96
    %v2325 = vpop.permute.xlu0 %2324
    %v2327 = vmul.f32 %v2322, %v2325
    %v2329 = vmul.f32 %v2310, %v2229
    %v2330 = vadd.f32 %v2327, %v2329
    %2332 = vrot.lane.b32.xlu0 %v2330, 96
    %v2333 = vpop.permute.xlu0 %2332
    %2335 = vst.msk [vmem:[#allocation2] sm:$0x3] %vm927, %v2333
    %v2336 = vld [vmem:[#allocation2] sm:$0xff]
    %v2337 = vld [vmem:[#allocation2 + $0x8] sm:$0xff]
    %v2338 = vmax.f32 %v2336, 0.0
    %v2339 = vmax.f32 %v2337, 0.0
    %v2340 = vld [vmem:[%s11] sm:$0xff]
    %v2341 = vld [vmem:[%s11 + $0x8] sm:$0xff]
    %v2342 = vld [vmem:[%s11 + $0x10] sm:$0xff]
    %v2343 = vld [vmem:[%s11 + $0x18] sm:$0xff]
    %v2344 = vld [vmem:[%s12] sm:$0x1]
    %v2346 = vlaneseq
    %v2347 = vshrl.u32 %v2346, 7
    %v2348 = vsub.s32 0, %v2347
    %v2349 = vrot.slane %v2344, %v2348
    %v2352 = vsel %vm384, %v2338, 0
    %v2355 = vsel %vm384, %v2339, 0
    %2357 = vmatprep.subr.mxu0 0.0
    %2358 = vmatpush1.msra.mxu0 %v2340
    %2359 = vmatprep.subr.mxu0 0.0
    %2360 = vmatpush1.msra.mxu0 %v2341
    %2361 = vmatprep.subr.mxu0 0.0
    %2362 = vmatpush1.msra.mxu0 %v2342
    %2363 = vmatprep.subr.mxu0 0.0
    %2364 = vmatpush1.msra.mxu0 %v2343
    %2365 = vmatprep.subr.mxu0 0.0
    %2366 = vmatpush1.msra.mxu0 0.0
    %2367 = vmatprep.subr.mxu0 0.0
    %2368 = vmatpush1.msra.mxu0 0.0
    %2369 = vmatprep.subr.mxu0 0.0
    %2370 = vmatpush1.msra.mxu0 0.0
    %2371 = vmatprep.subr.mxu0 0.0
    %2372 = vmatpush1.msra.mxu0 0.0
    %2373 = vmatprep.subr.mxu0 0.0
    %2374 = vmatpush1.msra.mxu0 0.0
    %2375 = vmatprep.subr.mxu0 0.0
    %2376 = vmatpush1.msra.mxu0 0.0
    %2377 = vmatprep.subr.mxu0 0.0
    %2378 = vmatpush1.msra.mxu0 0.0
    %2379 = vmatprep.subr.mxu0 0.0
    %2380 = vmatpush1.msra.mxu0 0.0
    %2381 = vmatprep.subr.mxu0 0.0
    %2382 = vmatpush1.msra.mxu0 0.0
    %2383 = vmatprep.subr.mxu0 0.0
    %2384 = vmatpush1.msra.mxu0 0.0
    %2385 = vmatprep.subr.mxu0 0.0
    %2386 = vmatpush1.msra.mxu0 0.0
    %2387 = vmatprep.subr.mxu0 0.0
    %2388 = vmatpush1.msra.mxu0 0.0
    %2389 = vmatprep.subr.mxu0 0.0
    %2390 = vmatpush1.msra.mxu0 0.0
    %2391 = vmatprep.subr.mxu0 0.0
    %2392 = vmatpush1.msra.mxu0 0.0
    %2393 = vmatprep.subr.mxu0 0.0
    %2394 = vmatpush1.msra.mxu0 0.0
    %2395 = vmatprep.subr.mxu0 0.0
    %2396 = vmatpush1.msra.mxu0 0.0
    %2397 = vmatprep.subr.mxu0 0.0
    %2398 = vmatpush1.msra.mxu0 0.0
    %2399 = vmatprep.subr.mxu0 0.0
    %2400 = vmatpush1.msra.mxu0 0.0
    %2401 = vmatprep.subr.mxu0 0.0
    %2402 = vmatpush1.msra.mxu0 0.0
    %2403 = vmatprep.subr.mxu0 0.0
    %2404 = vmatpush1.msra.mxu0 0.0
    %2405 = vmatprep.subr.mxu0 0.0
    %2406 = vmatpush1.msra.mxu0 0.0
    %2407 = vmatprep.subr.mxu0 0.0
    %2408 = vmatpush1.msra.mxu0 0.0
    %2409 = vmatprep.subr.mxu0 0.0
    %2410 = vmatpush1.msra.mxu0 0.0
    %2411 = vmatprep.subr.mxu0 0.0
    %2412 = vmatpush1.msra.mxu0 0.0
    %2413 = vmatprep.subr.mxu0 0.0
    %2414 = vmatpush1.msra.mxu0 0.0
    %2415 = vmatprep.subr.mxu0 0.0
    %2416 = vmatpush1.msra.mxu0 0.0
    %2417 = vmatprep.subr.mxu0 0.0
    %2418 = vmatpush1.msra.mxu0 0.0
    %2419 = vmatprep.subr.mxu0 0.0
    %2420 = vmatpush1.msra.mxu0 0.0
    %2421 = vmatprep.mubr.f32.mxu0 0.0
    %2422 = vmatmul.mubr.f32.gmra.mrb[0].mxu0 %v2352
    %v2423 = vpop.f32.mrb[0].mxu0
    %v2424 = vadd.f32 %v2349, %v2423
    %v2425 = vpop.f32.mrb[0].mxu0
    %2426 = vmatprep.mubr.f32.mxu0 0.0
    %2427 = vmatmul.mubr.f32.gmra.mrb[0].mxu0 %v2355
    %v2428 = vpop.f32.mrb[0].mxu0
    %v2429 = vadd.f32 %v2349, %v2428
    %v2430 = vpop.f32.mrb[0].mxu0
    %2431 = vdwg.mxu0
    %2432 = vst.msk [vmem:[%s13] sm:$0xff] %vm200, %v2424
    %2433 = vst.msk [vmem:[%s13 + $0x8] sm:$0xff] %vm200, %v2429
    // Predicated region
    $region74: #{tpu_custom_call.1} parent=1 // pred_check
      _
    $region75: #{tpu_custom_call.1} parent=1 // pred_check_branch
      %2435 = sbr.rel (0) target = $region77
    $region76: #{tpu_custom_call.1} parent=1 // pred_region
      _
    $region77: #{tpu_custom_call.1} parent=1 // pred_fallthru
      _
    // Predicated region
    $region78: #{tpu_custom_call.1} parent=1 // pred_check
      _
    $region79: #{tpu_custom_call.1} parent=1 // pred_check_branch
      %2437 = sbr.rel (0) target = $region81
    $region80: #{tpu_custom_call.1} parent=1 // pred_region
      _
    $region81: #{tpu_custom_call.1} parent=1 // pred_fallthru
      _
    %2438 = vsyncpa [#allocation4], 1
    %2439 = vsyncpa [#allocation6], 1
    %2440 = vsyncpa [#allocation9], 1

</llo_original>
